<compile_context>
chip_gen: v7x
topology: tpu7x:2x2x1
jax: 0.10.0
libtpu: 0.0.40
codegen_flags: <defaults>
</compile_context>

<pallas_src>
import functools

import jax
import jax.numpy as jnp
from jax.experimental import pallas as pl
from jax.experimental.pallas import tpu as pltpu


BN_EPS = 1e-5
LANE = 128          # lane width used for all padded minor dims
MAX_BB = 64         # max batch rows per grid step


def _round_up(x, m):
    return ((x + m - 1) // m) * m


# ---------------------------------------------------------------------------
# The single fused kernel: embedding+conv+ReLU+maxpool + both MLP heads.
# Emits one lane-dense (BB, 128) logits slab; log-softmax is done in XLA.
# ---------------------------------------------------------------------------
def _fused_cnn_kernel(ids_ref, convw_ref, convb_ref,
                      w1_ref, b1_ref, w2_ref, b2_ref, w3_ref, b3_ref,
                      out_ref, *, batch_block, seq_pad, true_seq,
                      vocab_pad, nfp, filter_sizes, compute_dtype):
    n_br = len(filter_sizes)
    max_fs = max(filter_sizes)
    nrows = batch_block * seq_pad

    ids = ids_ref[...]                                    # (nrows, max_fs) int32

    # Per-tap one-hot token matrices concatenated along lanes.
    # Column j of `ids` already holds the token at flat position p + j
    # (pre-shifted in the wrapper), so no in-kernel row shifts are needed.
    tok_iota = jax.lax.broadcasted_iota(jnp.int32, (nrows, vocab_pad), 1)
    onehot = jnp.concatenate(
        [(tok_iota == ids[:, j:j + 1]).astype(compute_dtype)
         for j in range(max_fs)], axis=1)                 # (nrows, max_fs*vpad)

    # Embedding table + all conv branches + all taps in ONE MXU matmul
    # (M=nrows, K=max_fs*vocab_pad, N=n_br*nfp); zero weight blocks cover
    # taps j >= fs for the shorter branches.
    conv = jnp.dot(onehot, convw_ref[...],
                   preferred_element_type=jnp.float32)    # (nrows, n_br*nfp)
    conv = jnp.maximum(conv + convb_ref[...], 0.0)        # bias + ReLU, f32
    conv = conv.reshape(batch_block, seq_pad, n_br * nfp)

    # Windows with t >= true_seq - fs + 1 are invalid (they run across the
    # padding / next-row boundary). ReLU output is >= 0, so zeroing them
    # leaves the max-pool result unchanged.
    t_idx = jax.lax.broadcasted_iota(
        jnp.int32, (batch_block, seq_pad, nfp), 1)
    pooled = []
    for br, fs in enumerate(filter_sizes):
        sl = conv[:, :, br * nfp:(br + 1) * nfp]          # lane-aligned slice
        sl = jnp.where(t_idx < (true_seq - fs + 1), sl, 0.0)
        pooled.append(jnp.max(sl, axis=1))                # (bb, nfp) max-pool
    feat = jnp.concatenate(pooled, axis=1)                # (bb, n_br*nfp) f32

    # Both classifier heads fused; eval-mode BatchNorm folded into the linears.
    h = jnp.dot(feat.astype(compute_dtype), w1_ref[...],
                preferred_element_type=jnp.float32) + b1_ref[...]
    h = jnp.maximum(h, 0.0)
    h = jnp.dot(h.astype(compute_dtype), w2_ref[...],
                preferred_element_type=jnp.float32) + b2_ref[...]
    h = jnp.maximum(h, 0.0)
    # Lane-dense (bb, 128) logits slab; cols [0:2] = class head, [2:4] = domain.
    out_ref[...] = jnp.dot(h.astype(compute_dtype), w3_ref[...],
                           preferred_element_type=jnp.float32) + b3_ref[...]


# ---------------------------------------------------------------------------
# Raw (PyTorch-like) parameters.
# ---------------------------------------------------------------------------
def make_params(key, vocab_size, embedding_dim, n_filters, filter_sizes,
                n_classes=2):
    keys = iter(jax.random.split(key, 4 + 2 * len(filter_sizes)))
    params = {
        'embedding': 0.1 * jax.random.normal(
            next(keys), (vocab_size, embedding_dim), jnp.float32)
    }
    params['convs'] = [
        (0.1 * jax.random.normal(next(keys),
                                 (n_filters, fs, embedding_dim), jnp.float32),
         0.1 * jax.random.normal(next(keys), (n_filters,), jnp.float32))
        for fs in filter_sizes
    ]

    def bn_stats(n):
        # Matches a freshly-initialized nn.BatchNorm1d; a trained checkpoint's
        # running_mean / running_var can be dropped in and will fold correctly.
        return {'gamma': jnp.ones((n,), jnp.float32),
                'beta': jnp.zeros((n,), jnp.float32),
                'mean': jnp.zeros((n,), jnp.float32),
                'var': jnp.ones((n,), jnp.float32)}

    def head(k):
        ks = jax.random.split(k, 6)
        feat_dim = n_filters * len(filter_sizes)          # 300
        return {
            'w1': 0.1 * jax.random.normal(ks[0], (feat_dim, 100), jnp.float32),
            'b1': 0.1 * jax.random.normal(ks[1], (100,), jnp.float32),
            'bn1': bn_stats(100),
            'w2': 0.1 * jax.random.normal(ks[2], (100, 100), jnp.float32),
            'b2': 0.1 * jax.random.normal(ks[3], (100,), jnp.float32),
            'bn2': bn_stats(100),
            'w3': 0.1 * jax.random.normal(ks[4], (100, n_classes), jnp.float32),
            'b3': 0.1 * jax.random.normal(ks[5], (n_classes,), jnp.float32),
        }

    params['class_head'] = head(next(keys))
    params['domain_head'] = head(next(keys))
    return params


# ---------------------------------------------------------------------------
# Parameter preparation: fold embedding into conv weights, stack all branches
# and taps into one block matrix, fold BN, pad to lane-dense layouts, stack
# both heads, pad w3/b3 to a lane-dense logits slab. All done once.
# ---------------------------------------------------------------------------
def _fold_bn(w, b, bn):
    scale = bn['gamma'] * jax.lax.rsqrt(bn['var'] + BN_EPS)
    return w * scale[None, :], (b - bn['mean']) * scale + bn['beta']


def prepare_fused_params(params, filter_sizes, compute_dtype=jnp.bfloat16):
    table = params['embedding']                    # (V, E)
    vocab, _ = table.shape
    # TODO(synk): the one-hot/folded-embedding trick only makes sense for tiny
    # vocabularies; a real-sized vocab would use an in-kernel DMA gather.
    vpad = _round_up(vocab, LANE)
    n_br = len(filter_sizes)
    max_fs = max(filter_sizes)
    n_filters = params['convs'][0][0].shape[0]
    nfp = _round_up(n_filters, LANE)

    # Single stacked conv weight (max_fs*vpad, n_br*nfp):
    #   rows [j*vpad:(j+1)*vpad]  = tap j,   cols [br*nfp:(br+1)*nfp] = branch br
    #   conv[p, br, f] = sum_j onehot(ids[p+j]) @ (table @ W_br[f, j, :])
    # Zero blocks where tap j >= fs_br.
    conv_w = jnp.zeros((max_fs * vpad, n_br * nfp), jnp.float32)
    conv_b = jnp.zeros((1, n_br * nfp), jnp.float32)
    for br, ((w, b), fs) in enumerate(zip(params['convs'], filter_sizes)):
        for j in range(fs):
            cw = table @ w[:, j, :].T              # fold table in f32, cast last
            conv_w = conv_w.at[j * vpad:j * vpad + vocab,
                               br * nfp:br * nfp + n_filters].set(cw)
        conv_b = conv_b.at[0, br * nfp:br * nfp + n_filters].set(b)

    heads = [params['class_head'], params['domain_head']]
    n_heads = len(heads)
    hid = heads[0]['w2'].shape[0]                   # 100
    ncls = heads[0]['w3'].shape[1]                  # 2
    hpad = _round_up(hid, LANE)                     # 128
    out_w = _round_up(n_heads * ncls, LANE)         # 128 lane-dense logits slab

    w1_cols, b1_cols, b2_cols = [], [], []
    w2_both = jnp.zeros((n_heads * hpad, n_heads * hpad), jnp.float32)
    w3_both = jnp.zeros((n_heads * hpad, out_w), jnp.float32)
    b3_both = jnp.zeros((1, out_w), jnp.float32)
    for h, hp in enumerate(heads):
        w1f, b1f = _fold_bn(hp['w1'], hp['b1'], hp['bn1'])
        w2f, b2f = _fold_bn(hp['w2'], hp['b2'], hp['bn2'])
        # scatter the (n_br * n_filters) feature rows into the lane-padded slab
        w1p = jnp.zeros((n_br * nfp, hpad), jnp.float32)
        for br in range(n_br):
            w1p = w1p.at[br * nfp:br * nfp + n_filters, :hid].set(
                w1f[br * n_filters:(br + 1) * n_filters, :])
        w1_cols.append(w1p)
        b1_cols.append(jnp.pad(b1f, (0, hpad - hid)))
        w2_both = w2_both.at[h * hpad:h * hpad + hid,
                             h * hpad:h * hpad + hid].set(w2f)
        b2_cols.append(jnp.pad(b2f, (0, hpad - hid)))
        w3_both = w3_both.at[h * hpad:h * hpad + hid,
                             h * ncls:(h + 1) * ncls].set(hp['w3'])
        b3_both = b3_both.at[0, h * ncls:(h + 1) * ncls].set(hp['b3'])

    return {
        'conv_w': conv_w.astype(compute_dtype),
        'conv_b': conv_b,                                        # f32
        'w1_both': jnp.concatenate(w1_cols, axis=1).astype(compute_dtype),
        'b1_both': jnp.concatenate(b1_cols)[None, :],            # f32
        'w2_both': w2_both.astype(compute_dtype),
        'b2_both': jnp.concatenate(b2_cols)[None, :],            # f32
        'w3_both': w3_both.astype(compute_dtype),
        'b3_both': b3_both,                                      # f32
    }


# ---------------------------------------------------------------------------
# Forward pass (one pallas_call).
# ---------------------------------------------------------------------------
@functools.partial(jax.jit,
                   static_argnames=('filter_sizes', 'mode', 'n_classes'))
def cnn_model_forward(fused, input_data, alpha, filter_sizes, mode='DANN',
                      n_classes=2):
    del alpha  # ReverseLayerF is the identity in the forward pass.
    # TODO(synk): DANN gradient reversal (alpha) needs a jax.custom_vjp if
    # anyone trains through this forward.
    seq_len, batch = input_data.shape
    max_fs = max(filter_sizes)
    # The PyTorch model would error if no conv window fits; the masked max-pool
    # here would silently return 0 instead, so assert explicitly.
    assert seq_len >= max_fs, "seq_len must be >= max(filter_sizes)"

    x = jnp.transpose(input_data, (1, 0)).astype(jnp.int32)       # (B, S)

    # --- batch-block (BB) selection ------------------------------------------
    # Big BB amortizes the ~0.35us per-step overhead and gives the head matmuls
    # a real M; keep >= 2 grid steps when the batch allows so v7x's two
    # TensorCores both get work via the "parallel" batch axis.
    batch_pad = _round_up(max(batch, 8), 8)
    bb = min(MAX_BB, batch_pad)
    if batch_pad // bb < 2 and batch_pad >= 16:
        bb = _round_up(batch_pad // 2, 8)
    batch_pad = _round_up(batch_pad, bb)

    seq_pad = _round_up(seq_len, 8)
    x = jnp.pad(x, ((0, batch_pad - batch), (0, seq_pad - seq_len)))
    flat = x.reshape(-1)                                          # (B_pad*S_pad,)

    # Column j holds the token at flat position p + j (pre-shifted, so the
    # kernel never shifts rows across sublanes). Wrapped / padded positions are
    # masked inside the kernel before the max-pool — the roll here and the
    # `t_idx < true_seq - fs + 1` mask in the kernel are tightly coupled.
    ids_tap = jnp.stack([jnp.roll(flat, -j) for j in range(max_fs)], axis=1)

    n_br = len(filter_sizes)
    conv_w = fused['conv_w']
    vocab_pad = conv_w.shape[0] // max_fs
    nfp = conv_w.shape[1] // n_br
    out_w = fused['b3_both'].shape[1]
    compute_dtype = conv_w.dtype

    grid = (batch_pad // bb,)
    nrows_blk = bb * seq_pad

    def blk_map(i):
        return (i, 0)

    def const_map(i):
        return (0, 0)

    inputs = [ids_tap]
    in_specs = [pl.BlockSpec((nrows_blk, max_fs), blk_map)]
    # Constant resident weights/biases (<1 MB total even double-buffered, so no
    # pipeline_mode tweak needed at these sizes).
    for name in ('conv_w', 'conv_b', 'w1_both', 'b1_both',
                 'w2_both', 'b2_both', 'w3_both', 'b3_both'):
        a = fused[name]
        inputs.append(a)
        in_specs.append(pl.BlockSpec(a.shape, const_map))

    kernel = functools.partial(
        _fused_cnn_kernel,
        batch_block=bb, seq_pad=seq_pad, true_seq=seq_len,
        vocab_pad=vocab_pad, nfp=nfp, filter_sizes=filter_sizes,
        compute_dtype=compute_dtype)

    logits_pad = pl.pallas_call(
        kernel,
        grid=grid,
        in_specs=in_specs,
        out_specs=pl.BlockSpec((bb, out_w), blk_map),
        out_shape=jax.ShapeDtypeStruct((batch_pad, out_w), jnp.float32),
        compiler_params=pltpu.CompilerParams(
            dimension_semantics=("parallel",)),
    )(*inputs)

    # Tiny (batch, 2) log-softmax + slicing stays in XLA (free), keeping the
    # kernel's output store lane-dense.
    logits = logits_pad[:batch]
    class_out = jax.nn.log_softmax(logits[:, :n_classes], axis=-1)
    if mode != 'TLnoDA':
        domain_out = jax.nn.log_softmax(
            logits[:, n_classes:2 * n_classes], axis=-1)
        return class_out, domain_out
    return class_out, None


# ---------------------------------------------------------------------------
# Pure-JAX reference (f32, unfolded) for a correctness check.
# ---------------------------------------------------------------------------
def reference_forward(params, input_data, filter_sizes):
    x = jnp.transpose(input_data, (1, 0))
    emb = jnp.take(params['embedding'], x, axis=0)                 # (B, S, E)
    pooled = []
    for (w, b), fs in zip(params['convs'], filter_sizes):
        lout = emb.shape[1] - fs + 1
        acc = jnp.zeros((emb.shape[0], lout, w.shape[0]), jnp.float32)
        for j in range(fs):
            acc = acc + jnp.einsum('ble,fe->blf', emb[:, j:j + lout, :],
                                   w[:, j, :])
        acc = jax.nn.relu(acc + b[None, None, :])
        pooled.append(jnp.max(acc, axis=1))
    feat = jnp.concatenate(pooled, axis=1)

    def run_head(hp):
        def bn(h, p):
            return ((h - p['mean'])
                    * (p['gamma'] / jnp.sqrt(p['var'] + BN_EPS)) + p['beta'])
        h = jax.nn.relu(bn(feat @ hp['w1'] + hp['b1'], hp['bn1']))
        h = jax.nn.relu(bn(h @ hp['w2'] + hp['b2'], hp['bn2']))
        return jax.nn.log_softmax(h @ hp['w3'] + hp['b3'], axis=-1)

    return run_head(params['class_head']), run_head(params['domain_head'])


if __name__ == "__main__":
    vocab_size = 50
    embedding_dim = 32
    n_filters = 100
    filter_sizes = (3, 4, 5)        # 3 * 100 = 300 feature dim, as required
    seq_len = 16

    key = jax.random.PRNGKey(0)
    pkey, dkey, dkey2 = jax.random.split(key, 3)
    params = make_params(pkey, vocab_size, embedding_dim, n_filters,
                         filter_sizes)
    fused = prepare_fused_params(params, filter_sizes,
                                 compute_dtype=jnp.bfloat16)
    alpha = jnp.float32(0.5)

    # --- small batch (grid = 1 step) -----------------------------------------
    batch = 4
    input_data = jax.random.randint(dkey, (seq_len, batch), 0, vocab_size,
                                    dtype=jnp.int32)
    class_out, domain_out = cnn_model_forward(
        fused, input_data, alpha, filter_sizes=filter_sizes, mode='DANN')
    jax.block_until_ready((class_out, domain_out))

    assert class_out.shape == (batch, 2)
    assert domain_out.shape == (batch, 2)
    # log-softmax rows should sum (in prob space) to ~1
    assert jnp.allclose(jnp.sum(jnp.exp(class_out), axis=-1), 1.0, atol=1e-4)
    assert jnp.allclose(jnp.sum(jnp.exp(domain_out), axis=-1), 1.0, atol=1e-4)

    # Check against the unfused f32 reference (tolerance covers bf16 MXU inputs).
    ref_c, ref_d = reference_forward(params, input_data, filter_sizes)
    assert jnp.allclose(class_out, ref_c, atol=5e-2)
    assert jnp.allclose(domain_out, ref_d, atol=5e-2)

    # --- larger batch (multi-step grid, BB > 8 path) --------------------------
    batch2 = 40
    input_data2 = jax.random.randint(dkey2, (seq_len, batch2), 0, vocab_size,
                                     dtype=jnp.int32)
    c2, d2 = cnn_model_forward(
        fused, input_data2, alpha, filter_sizes=filter_sizes, mode='DANN')
    jax.block_until_ready((c2, d2))
    ref_c2, ref_d2 = reference_forward(params, input_data2, filter_sizes)
    assert c2.shape == (batch2, 2) and d2.shape == (batch2, 2)
    assert jnp.allclose(c2, ref_c2, atol=5e-2)
    assert jnp.allclose(d2, ref_d2, atol=5e-2)

    print("KERNEL_OK")
</pallas_src>

<mosaic_0001>
module attributes {stable_mosaic.version = 11 : i64} {
  func.func @_fused_cnn_kernel(%arg0: i32, %arg1: memref<128x5xi32, #tpu.memory_space<vmem>>, %arg2: memref<640x384xbf16, #tpu.memory_space<vmem>>, %arg3: memref<1x384xf32, #tpu.memory_space<vmem>>, %arg4: memref<384x256xbf16, #tpu.memory_space<vmem>>, %arg5: memref<1x256xf32, #tpu.memory_space<vmem>>, %arg6: memref<256x256xbf16, #tpu.memory_space<vmem>>, %arg7: memref<1x256xf32, #tpu.memory_space<vmem>>, %arg8: memref<256x128xbf16, #tpu.memory_space<vmem>>, %arg9: memref<1x128xf32, #tpu.memory_space<vmem>>, %arg10: memref<8x128xf32, #tpu.memory_space<vmem>>) attributes {dimension_semantics = [#tpu.dimension_semantics<parallel>], iteration_bounds = array<i64: 1>, scalar_prefetch = 0 : i64, scratch_operands = 0 : i64, tpu.core_type = #tpu.core_type<tc>, window_params = [{transform_indices = @transform_0, window_bounds = array<i64: 128, 5>}, {pipeline_mode = #tpu.pipeline_mode<synchronous>, transform_indices = @transform_1, window_bounds = array<i64: 640, 384>}, {pipeline_mode = #tpu.pipeline_mode<synchronous>, transform_indices = @transform_2, window_bounds = array<i64: 1, 384>}, {pipeline_mode = #tpu.pipeline_mode<synchronous>, transform_indices = @transform_3, window_bounds = array<i64: 384, 256>}, {pipeline_mode = #tpu.pipeline_mode<synchronous>, transform_indices = @transform_4, window_bounds = array<i64: 1, 256>}, {pipeline_mode = #tpu.pipeline_mode<synchronous>, transform_indices = @transform_5, window_bounds = array<i64: 256, 256>}, {pipeline_mode = #tpu.pipeline_mode<synchronous>, transform_indices = @transform_6, window_bounds = array<i64: 1, 256>}, {pipeline_mode = #tpu.pipeline_mode<synchronous>, transform_indices = @transform_7, window_bounds = array<i64: 256, 128>}, {pipeline_mode = #tpu.pipeline_mode<synchronous>, transform_indices = @transform_8, window_bounds = array<i64: 1, 128>}, {transform_indices = @transform_9, window_bounds = array<i64: 8, 128>}]} {
    %c0 = arith.constant 0 : index
    %c0_0 = arith.constant 0 : index
    %0 = vector.load %arg1[%c0, %c0_0] : memref<128x5xi32, #tpu.memory_space<vmem>>, vector<128x5xi32>
    %1 = tpu.iota {dimensions = array<i32: 1>} : vector<128x128xi32>
    %2 = vector.extract_strided_slice %0 {offsets = [0, 0], sizes = [128, 1], strides = [1, 1]} : vector<128x5xi32> to vector<128x1xi32>
    %3 = vector.broadcast %2 : vector<128x1xi32> to vector<128x128xi32>
    %4 = arith.cmpi eq, %1, %3 : vector<128x128xi32>
    %5 = arith.extui %4 : vector<128x128xi1> to vector<128x128xi32>
    %6 = arith.sitofp %5 : vector<128x128xi32> to vector<128x128xf32>
    %7 = arith.truncf %6 : vector<128x128xf32> to vector<128x128xbf16>
    %8 = vector.extract_strided_slice %0 {offsets = [0, 1], sizes = [128, 1], strides = [1, 1]} : vector<128x5xi32> to vector<128x1xi32>
    %9 = vector.broadcast %8 : vector<128x1xi32> to vector<128x128xi32>
    %10 = arith.cmpi eq, %1, %9 : vector<128x128xi32>
    %11 = arith.extui %10 : vector<128x128xi1> to vector<128x128xi32>
    %12 = arith.sitofp %11 : vector<128x128xi32> to vector<128x128xf32>
    %13 = arith.truncf %12 : vector<128x128xf32> to vector<128x128xbf16>
    %14 = vector.extract_strided_slice %0 {offsets = [0, 2], sizes = [128, 1], strides = [1, 1]} : vector<128x5xi32> to vector<128x1xi32>
    %15 = vector.broadcast %14 : vector<128x1xi32> to vector<128x128xi32>
    %16 = arith.cmpi eq, %1, %15 : vector<128x128xi32>
    %17 = arith.extui %16 : vector<128x128xi1> to vector<128x128xi32>
    %18 = arith.sitofp %17 : vector<128x128xi32> to vector<128x128xf32>
    %19 = arith.truncf %18 : vector<128x128xf32> to vector<128x128xbf16>
    %20 = vector.extract_strided_slice %0 {offsets = [0, 3], sizes = [128, 1], strides = [1, 1]} : vector<128x5xi32> to vector<128x1xi32>
    %21 = vector.broadcast %20 : vector<128x1xi32> to vector<128x128xi32>
    %22 = arith.cmpi eq, %1, %21 : vector<128x128xi32>
    %23 = arith.extui %22 : vector<128x128xi1> to vector<128x128xi32>
    %24 = arith.sitofp %23 : vector<128x128xi32> to vector<128x128xf32>
    %25 = arith.truncf %24 : vector<128x128xf32> to vector<128x128xbf16>
    %26 = vector.extract_strided_slice %0 {offsets = [0, 4], sizes = [128, 1], strides = [1, 1]} : vector<128x5xi32> to vector<128x1xi32>
    %27 = vector.broadcast %26 : vector<128x1xi32> to vector<128x128xi32>
    %28 = arith.cmpi eq, %1, %27 : vector<128x128xi32>
    %29 = arith.extui %28 : vector<128x128xi1> to vector<128x128xi32>
    %30 = arith.sitofp %29 : vector<128x128xi32> to vector<128x128xf32>
    %31 = arith.truncf %30 : vector<128x128xf32> to vector<128x128xbf16>
    %32 = tpu.concatenate %7, %13, %19, %25, %31 in 1 : vector<128x128xbf16>, vector<128x128xbf16>, vector<128x128xbf16>, vector<128x128xbf16>, vector<128x128xbf16> -> vector<128x640xbf16>
    %c0_1 = arith.constant 0 : index
    %c0_2 = arith.constant 0 : index
    %33 = vector.load %arg2[%c0_1, %c0_2] : memref<640x384xbf16, #tpu.memory_space<vmem>>, vector<640x384xbf16>
    %cst = arith.constant dense<0.000000e+00> : vector<128x384xf32>
    %34 = tpu.matmul %32, %33, %cst {dimension_numbers = #tpu.dot_dimension_numbers<[1], [0], [0], [1], [0, 0, 1, 1], [], []>} : vector<128x640xbf16>, vector<640x384xbf16>, vector<128x384xf32> -> vector<128x384xf32>
    %c0_3 = arith.constant 0 : index
    %c0_4 = arith.constant 0 : index
    %35 = vector.load %arg3[%c0_3, %c0_4] : memref<1x384xf32, #tpu.memory_space<vmem>>, vector<1x384xf32>
    %36 = vector.broadcast %35 : vector<1x384xf32> to vector<128x384xf32>
    %37 = arith.addf %34, %36 : vector<128x384xf32>
    %cst_5 = arith.constant 0.000000e+00 : f32
    %38 = vector.broadcast %cst_5 : f32 to vector<128x384xf32>
    %39 = arith.maximumf %37, %38 : vector<128x384xf32>
    %40 = vector.shape_cast %39 : vector<128x384xf32> to vector<8x16x384xf32>
    %41 = tpu.iota {dimensions = array<i32: 1>} : vector<8x16x128xi32>
    %42 = vector.extract_strided_slice %40 {offsets = [0, 0, 0], sizes = [8, 16, 128], strides = [1, 1, 1]} : vector<8x16x384xf32> to vector<8x16x128xf32>
    %c14_i32 = arith.constant 14 : i32
    %43 = vector.broadcast %c14_i32 : i32 to vector<8x16x128xi32>
    %44 = arith.cmpi slt, %41, %43 : vector<8x16x128xi32>
    %cst_6 = arith.constant 0.000000e+00 : f32
    %45 = vector.broadcast %cst_6 : f32 to vector<8x16x128xf32>
    %46 = arith.select %44, %42, %45 : vector<8x16x128xi1>, vector<8x16x128xf32>
    %cst_7 = arith.constant dense<0xFF800000> : vector<8x128xf32>
    %47 = vector.multi_reduction <maximumf>, %46, %cst_7 [1] : vector<8x16x128xf32> to vector<8x128xf32>
    %48 = vector.extract_strided_slice %40 {offsets = [0, 0, 128], sizes = [8, 16, 128], strides = [1, 1, 1]} : vector<8x16x384xf32> to vector<8x16x128xf32>
    %c13_i32 = arith.constant 13 : i32
    %49 = vector.broadcast %c13_i32 : i32 to vector<8x16x128xi32>
    %50 = arith.cmpi slt, %41, %49 : vector<8x16x128xi32>
    %cst_8 = arith.constant 0.000000e+00 : f32
    %51 = vector.broadcast %cst_8 : f32 to vector<8x16x128xf32>
    %52 = arith.select %50, %48, %51 : vector<8x16x128xi1>, vector<8x16x128xf32>
    %cst_9 = arith.constant dense<0xFF800000> : vector<8x128xf32>
    %53 = vector.multi_reduction <maximumf>, %52, %cst_9 [1] : vector<8x16x128xf32> to vector<8x128xf32>
    %54 = vector.extract_strided_slice %40 {offsets = [0, 0, 256], sizes = [8, 16, 128], strides = [1, 1, 1]} : vector<8x16x384xf32> to vector<8x16x128xf32>
    %c12_i32 = arith.constant 12 : i32
    %55 = vector.broadcast %c12_i32 : i32 to vector<8x16x128xi32>
    %56 = arith.cmpi slt, %41, %55 : vector<8x16x128xi32>
    %cst_10 = arith.constant 0.000000e+00 : f32
    %57 = vector.broadcast %cst_10 : f32 to vector<8x16x128xf32>
    %58 = arith.select %56, %54, %57 : vector<8x16x128xi1>, vector<8x16x128xf32>
    %cst_11 = arith.constant dense<0xFF800000> : vector<8x128xf32>
    %59 = vector.multi_reduction <maximumf>, %58, %cst_11 [1] : vector<8x16x128xf32> to vector<8x128xf32>
    %60 = tpu.concatenate %47, %53, %59 in 1 : vector<8x128xf32>, vector<8x128xf32>, vector<8x128xf32> -> vector<8x384xf32>
    %61 = arith.truncf %60 : vector<8x384xf32> to vector<8x384xbf16>
    %c0_12 = arith.constant 0 : index
    %c0_13 = arith.constant 0 : index
    %62 = vector.load %arg4[%c0_12, %c0_13] : memref<384x256xbf16, #tpu.memory_space<vmem>>, vector<384x256xbf16>
    %cst_14 = arith.constant dense<0.000000e+00> : vector<8x256xf32>
    %63 = tpu.matmul %61, %62, %cst_14 {dimension_numbers = #tpu.dot_dimension_numbers<[1], [0], [0], [1], [0, 0, 1, 1], [], []>} : vector<8x384xbf16>, vector<384x256xbf16>, vector<8x256xf32> -> vector<8x256xf32>
    %c0_15 = arith.constant 0 : index
    %c0_16 = arith.constant 0 : index
    %64 = vector.load %arg5[%c0_15, %c0_16] : memref<1x256xf32, #tpu.memory_space<vmem>>, vector<1x256xf32>
    %65 = vector.broadcast %64 : vector<1x256xf32> to vector<8x256xf32>
    %66 = arith.addf %63, %65 : vector<8x256xf32>
    %cst_17 = arith.constant 0.000000e+00 : f32
    %67 = vector.broadcast %cst_17 : f32 to vector<8x256xf32>
    %68 = arith.maximumf %66, %67 : vector<8x256xf32>
    %69 = arith.truncf %68 : vector<8x256xf32> to vector<8x256xbf16>
    %c0_18 = arith.constant 0 : index
    %c0_19 = arith.constant 0 : index
    %70 = vector.load %arg6[%c0_18, %c0_19] : memref<256x256xbf16, #tpu.memory_space<vmem>>, vector<256x256xbf16>
    %cst_20 = arith.constant dense<0.000000e+00> : vector<8x256xf32>
    %71 = tpu.matmul %69, %70, %cst_20 {dimension_numbers = #tpu.dot_dimension_numbers<[1], [0], [0], [1], [0, 0, 1, 1], [], []>} : vector<8x256xbf16>, vector<256x256xbf16>, vector<8x256xf32> -> vector<8x256xf32>
    %c0_21 = arith.constant 0 : index
    %c0_22 = arith.constant 0 : index
    %72 = vector.load %arg7[%c0_21, %c0_22] : memref<1x256xf32, #tpu.memory_space<vmem>>, vector<1x256xf32>
    %73 = vector.broadcast %72 : vector<1x256xf32> to vector<8x256xf32>
    %74 = arith.addf %71, %73 : vector<8x256xf32>
    %cst_23 = arith.constant 0.000000e+00 : f32
    %75 = vector.broadcast %cst_23 : f32 to vector<8x256xf32>
    %76 = arith.maximumf %74, %75 : vector<8x256xf32>
    %77 = arith.truncf %76 : vector<8x256xf32> to vector<8x256xbf16>
    %c0_24 = arith.constant 0 : index
    %c0_25 = arith.constant 0 : index
    %78 = vector.load %arg8[%c0_24, %c0_25] : memref<256x128xbf16, #tpu.memory_space<vmem>>, vector<256x128xbf16>
    %cst_26 = arith.constant dense<0.000000e+00> : vector<8x128xf32>
    %79 = tpu.matmul %77, %78, %cst_26 {dimension_numbers = #tpu.dot_dimension_numbers<[1], [0], [0], [1], [0, 0, 1, 1], [], []>} : vector<8x256xbf16>, vector<256x128xbf16>, vector<8x128xf32> -> vector<8x128xf32>
    %c0_27 = arith.constant 0 : index
    %c0_28 = arith.constant 0 : index
    %80 = vector.load %arg9[%c0_27, %c0_28] : memref<1x128xf32, #tpu.memory_space<vmem>>, vector<1x128xf32>
    %81 = vector.broadcast %80 : vector<1x128xf32> to vector<8x128xf32>
    %82 = arith.addf %79, %81 : vector<8x128xf32>
    %c0_29 = arith.constant 0 : index
    %c0_30 = arith.constant 0 : index
    %83 = vector.load %arg10[%c0_29, %c0_30] : memref<8x128xf32, #tpu.memory_space<vmem>>, vector<8x128xf32>
    tpu.vector_store %arg10[%c0_29, %c0_30], %82 {strides = array<i32>} : memref<8x128xf32, #tpu.memory_space<vmem>>, vector<8x128xf32>,
    return
  }
  func.func @transform_0(%arg0: i32) -> (i32, i32) {
    %c0_i32 = arith.constant 0 : i32
    %c0_i32_0 = arith.constant 0 : i32
    return %arg0, %c0_i32 : i32, i32
  }
  func.func @transform_1(%arg0: i32) -> (i32, i32) {
    %c0_i32 = arith.constant 0 : i32
    %c0_i32_0 = arith.constant 0 : i32
    %c0_i32_1 = arith.constant 0 : i32
    return %c0_i32, %c0_i32_0 : i32, i32
  }
  func.func @transform_2(%arg0: i32) -> (i32, i32) {
    %c0_i32 = arith.constant 0 : i32
    %c0_i32_0 = arith.constant 0 : i32
    %c0_i32_1 = arith.constant 0 : i32
    return %c0_i32, %c0_i32_0 : i32, i32
  }
  func.func @transform_3(%arg0: i32) -> (i32, i32) {
    %c0_i32 = arith.constant 0 : i32
    %c0_i32_0 = arith.constant 0 : i32
    %c0_i32_1 = arith.constant 0 : i32
    return %c0_i32, %c0_i32_0 : i32, i32
  }
  func.func @transform_4(%arg0: i32) -> (i32, i32) {
    %c0_i32 = arith.constant 0 : i32
    %c0_i32_0 = arith.constant 0 : i32
    %c0_i32_1 = arith.constant 0 : i32
    return %c0_i32, %c0_i32_0 : i32, i32
  }
  func.func @transform_5(%arg0: i32) -> (i32, i32) {
    %c0_i32 = arith.constant 0 : i32
    %c0_i32_0 = arith.constant 0 : i32
    %c0_i32_1 = arith.constant 0 : i32
    return %c0_i32, %c0_i32_0 : i32, i32
  }
  func.func @transform_6(%arg0: i32) -> (i32, i32) {
    %c0_i32 = arith.constant 0 : i32
    %c0_i32_0 = arith.constant 0 : i32
    %c0_i32_1 = arith.constant 0 : i32
    return %c0_i32, %c0_i32_0 : i32, i32
  }
  func.func @transform_7(%arg0: i32) -> (i32, i32) {
    %c0_i32 = arith.constant 0 : i32
    %c0_i32_0 = arith.constant 0 : i32
    %c0_i32_1 = arith.constant 0 : i32
    return %c0_i32, %c0_i32_0 : i32, i32
  }
  func.func @transform_8(%arg0: i32) -> (i32, i32) {
    %c0_i32 = arith.constant 0 : i32
    %c0_i32_0 = arith.constant 0 : i32
    %c0_i32_1 = arith.constant 0 : i32
    return %c0_i32, %c0_i32_0 : i32, i32
  }
  func.func @transform_9(%arg0: i32) -> (i32, i32) {
    %c0_i32 = arith.constant 0 : i32
    %c0_i32_0 = arith.constant 0 : i32
    return %arg0, %c0_i32 : i32, i32
  }
}

</mosaic_0001>

<llo_original>
// kernel: cnn_model_forward.1
$region0: #{cnn_model_forward.1}
  #allocation0 [shape = 'u32[]', space=smem, size = 0x4, offset = 0x4, fixed_abs, tag = 'smem constant byte address 0x4 - core index']
  #allocation1 [shape = 'u32[144,128]{1,0:T(1,128)}', space=vmem, size = 0x12000, scoped, tag = 'internal scratch']
  %s0 = inlined_call_operand.vmem [shape: s32[128,5], index: 0, kind: input, shape index: {}]
  %s1 = inlined_call_operand.hbm [shape: bf16[640,384], index: 1, kind: input, shape index: {}]
  %s2 = inlined_call_operand.vmem [shape: f32[1,384], index: 2, kind: input, shape index: {}]
  %s3 = inlined_call_operand.hbm [shape: bf16[384,256], index: 3, kind: input, shape index: {}]
  %s4 = inlined_call_operand.vmem [shape: f32[1,256], index: 4, kind: input, shape index: {}]
  %s5 = inlined_call_operand.vmem [shape: bf16[256,256], index: 5, kind: input, shape index: {}]
  %s6 = inlined_call_operand.vmem [shape: f32[1,256], index: 6, kind: input, shape index: {}]
  %s7 = inlined_call_operand.hbm [shape: bf16[256,128], index: 7, kind: input, shape index: {}]
  %s8 = inlined_call_operand.vmem [shape: f32[1,128], index: 8, kind: input, shape index: {}]
  %s9 = inlined_call_operand.vmem [shape: f32[8,128], index: 9, kind: output, shape index: {}]
  %s10 = sld [smem:[#allocation0]]
  $region58: #{cnn_model_forward.1} parent=0
    _
  %s12 = ssub.s32 1, %s10
  %s13 = scalar_select 0, %s12, %s10
  $region1: #{cnn_model_forward.1} parent=0
    #allocation2 [shape = 'u8[491520]{0}', space=vmem, size = 0x78000, scoped, tag = 'input window, operand 1, single buffered']
    #allocation3 [shape = 's32[1]{0}', space=sflag, size = 0x4, scoped, tag = 'scoped memory for cnn_model_forward.1']
    #allocation4 [shape = 'u8[196608]{0}', space=vmem, size = 0x30000, scoped, tag = 'input window, operand 3, single buffered']
    #allocation5 [shape = 's32[1]{0}', space=sflag, size = 0x4, scoped, tag = 'scoped memory for cnn_model_forward.1']
    #allocation6 [shape = 'u8[65536]{0}', space=vmem, size = 0x10000, scoped, tag = 'input window, operand 7, single buffered']
    %14 = vsyncpa [#allocation3], 0
    %15 = vsyncpa [#allocation5], 0
    // Predicated region
    $region2: #{cnn_model_forward.1} parent=1 // pred_check
      _
    $region3: #{cnn_model_forward.1} parent=1 // pred_check_branch
      %17 = sbr.rel (0) target = $region5
    $region4: #{cnn_model_forward.1} parent=1 // pred_region
      _
    $region5: #{cnn_model_forward.1} parent=1 // pred_fallthru
      _
    // Predicated region
    $region6: #{cnn_model_forward.1} parent=1 // pred_check
      _
    $region7: #{cnn_model_forward.1} parent=1 // pred_check_branch
      %19 = sbr.rel (0) target = $region9
    $region8: #{cnn_model_forward.1} parent=1 // pred_region
      %s21 = ssub.s32 15360, 15360
      %22 = vsyncadd [#allocation3], %s21
      %s23 = sshll.u32 [#allocation2], 4
      %s24 = int_to_ptr.vmem [resolvable:$true] %s23
      %29 = dma.hbm_to_vmem [thread:$0]  %s1, 15360, %s24, [#allocation3], 192, 192, 12
    $region9: #{cnn_model_forward.1} parent=1 // pred_fallthru
      _
    // Predicated region
    $region10: #{cnn_model_forward.1} parent=1 // pred_check
      _
    $region11: #{cnn_model_forward.1} parent=1 // pred_check_branch
      %31 = sbr.rel (0) target = $region13
    $region12: #{cnn_model_forward.1} parent=1 // pred_region
      _
    $region13: #{cnn_model_forward.1} parent=1 // pred_fallthru
      _
    // Predicated region
    $region14: #{cnn_model_forward.1} parent=1 // pred_check
      _
    $region15: #{cnn_model_forward.1} parent=1 // pred_check_branch
      %33 = sbr.rel (0) target = $region17
    $region16: #{cnn_model_forward.1} parent=1 // pred_region
      %s35 = ssub.s32 6144, 6144
      %36 = vsyncadd [#allocation5], %s35
      %s37 = sshll.u32 [#allocation4], 4
      %s38 = int_to_ptr.vmem [resolvable:$true] %s37
      %43 = dma.hbm_to_vmem [thread:$0]  %s3, 6144, %s38, [#allocation5], 128, 128, 8
    $region17: #{cnn_model_forward.1} parent=1 // pred_fallthru
      _
    // Predicated region
    $region18: #{cnn_model_forward.1} parent=1 // pred_check
      _
    $region19: #{cnn_model_forward.1} parent=1 // pred_check_branch
      %45 = sbr.rel (0) target = $region21
    $region20: #{cnn_model_forward.1} parent=1 // pred_region
      _
    $region21: #{cnn_model_forward.1} parent=1 // pred_fallthru
      _
    // Predicated region
    $region22: #{cnn_model_forward.1} parent=1 // pred_check
      _
    $region23: #{cnn_model_forward.1} parent=1 // pred_check_branch
      %47 = sbr.rel (0) target = $region25
    $region24: #{cnn_model_forward.1} parent=1 // pred_region
      _
    $region25: #{cnn_model_forward.1} parent=1 // pred_fallthru
      _
    // Predicated region
    $region26: #{cnn_model_forward.1} parent=1 // pred_check
      _
    $region27: #{cnn_model_forward.1} parent=1 // pred_check_branch
      %49 = sbr.rel (0) target = $region29
    $region28: #{cnn_model_forward.1} parent=1 // pred_region
      _
    $region29: #{cnn_model_forward.1} parent=1 // pred_fallthru
      _
    // Predicated region
    $region30: #{cnn_model_forward.1} parent=1 // pred_check
      _
    $region31: #{cnn_model_forward.1} parent=1 // pred_check_branch
      %51 = sbr.rel (0) target = $region33
    $region32: #{cnn_model_forward.1} parent=1 // pred_region
      %s53 = ssub.s32 2048, 2048
      %54 = vsyncadd [#allocation5], %s53
      %s55 = sshll.u32 [#allocation6], 4
      %s56 = int_to_ptr.vmem [resolvable:$true] %s55
      %61 = dma.hbm_to_vmem [thread:$0]  %s7, 2048, %s56, [#allocation5], 64, 64, 4
    $region33: #{cnn_model_forward.1} parent=1 // pred_fallthru
      _
    // Predicated region
    $region34: #{cnn_model_forward.1} parent=1 // pred_check
      _
    $region35: #{cnn_model_forward.1} parent=1 // pred_check_branch
      %63 = sbr.rel (0) target = $region37
    $region36: #{cnn_model_forward.1} parent=1 // pred_region
      _
    $region37: #{cnn_model_forward.1} parent=1 // pred_fallthru
      _
    // Predicated region
    $region38: #{cnn_model_forward.1} parent=1 // pred_check
      _
    $region39: #{cnn_model_forward.1} parent=1 // pred_check_branch
      %65 = sbr.rel (0) target = $region41
    $region40: #{cnn_model_forward.1} parent=1 // pred_region
      %66 = dma.done [#allocation3], 15360
    $region41: #{cnn_model_forward.1} parent=1 // pred_fallthru
      _
    // Predicated region
    $region42: #{cnn_model_forward.1} parent=1 // pred_check
      _
    $region43: #{cnn_model_forward.1} parent=1 // pred_check_branch
      %68 = sbr.rel (0) target = $region45
    $region44: #{cnn_model_forward.1} parent=1 // pred_region
      %69 = dma.done [#allocation5], 6144
    $region45: #{cnn_model_forward.1} parent=1 // pred_fallthru
      _
    // Predicated region
    $region46: #{cnn_model_forward.1} parent=1 // pred_check
      _
    $region47: #{cnn_model_forward.1} parent=1 // pred_check_branch
      %71 = sbr.rel (0) target = $region49
    $region48: #{cnn_model_forward.1} parent=1 // pred_region
      %72 = dma.done [#allocation5], 2048
    $region49: #{cnn_model_forward.1} parent=1 // pred_fallthru
      _
    %v74 = vld [vmem:[%s0] sm:$0xff]
    %v75 = vld [vmem:[%s0 + $0x8] sm:$0xff]
    %v76 = vld [vmem:[%s0 + $0x10] sm:$0xff]
    %v77 = vld [vmem:[%s0 + $0x18] sm:$0xff]
    %v78 = vld [vmem:[%s0 + $0x20] sm:$0xff]
    %v79 = vld [vmem:[%s0 + $0x28] sm:$0xff]
    %v80 = vld [vmem:[%s0 + $0x30] sm:$0xff]
    %v81 = vld [vmem:[%s0 + $0x38] sm:$0xff]
    %v82 = vld [vmem:[%s0 + $0x40] sm:$0xff]
    %v83 = vld [vmem:[%s0 + $0x48] sm:$0xff]
    %v84 = vld [vmem:[%s0 + $0x50] sm:$0xff]
    %v85 = vld [vmem:[%s0 + $0x58] sm:$0xff]
    %v86 = vld [vmem:[%s0 + $0x60] sm:$0xff]
    %v87 = vld [vmem:[%s0 + $0x68] sm:$0xff]
    %v88 = vld [vmem:[%s0 + $0x70] sm:$0xff]
    %v89 = vld [vmem:[%s0 + $0x78] sm:$0xff]
    %v90 = vlaneseq
    %v91 = vand.u32 %v90, 127
    %92 = vset.pattern.permute.xlu0 0
    %93 = vperm.xlu0 %92, %v74
    %v94 = vpop.permute.xlu0 %93
    %95 = vset.pattern.permute.xlu0 0
    %96 = vperm.xlu0 %95, %v75
    %v97 = vpop.permute.xlu0 %96
    %98 = vset.pattern.permute.xlu0 0
    %99 = vperm.xlu0 %98, %v76
    %v100 = vpop.permute.xlu0 %99
    %101 = vset.pattern.permute.xlu0 0
    %102 = vperm.xlu0 %101, %v77
    %v103 = vpop.permute.xlu0 %102
    %104 = vset.pattern.permute.xlu0 0
    %105 = vperm.xlu0 %104, %v78
    %v106 = vpop.permute.xlu0 %105
    %107 = vset.pattern.permute.xlu0 0
    %108 = vperm.xlu0 %107, %v79
    %v109 = vpop.permute.xlu0 %108
    %110 = vset.pattern.permute.xlu0 0
    %111 = vperm.xlu0 %110, %v80
    %v112 = vpop.permute.xlu0 %111
    %113 = vset.pattern.permute.xlu0 0
    %114 = vperm.xlu0 %113, %v81
    %v115 = vpop.permute.xlu0 %114
    %116 = vset.pattern.permute.xlu0 0
    %117 = vperm.xlu0 %116, %v82
    %v118 = vpop.permute.xlu0 %117
    %119 = vset.pattern.permute.xlu0 0
    %120 = vperm.xlu0 %119, %v83
    %v121 = vpop.permute.xlu0 %120
    %122 = vset.pattern.permute.xlu0 0
    %123 = vperm.xlu0 %122, %v84
    %v124 = vpop.permute.xlu0 %123
    %125 = vset.pattern.permute.xlu0 0
    %126 = vperm.xlu0 %125, %v85
    %v127 = vpop.permute.xlu0 %126
    %128 = vset.pattern.permute.xlu0 0
    %129 = vperm.xlu0 %128, %v86
    %v130 = vpop.permute.xlu0 %129
    %131 = vset.pattern.permute.xlu0 0
    %132 = vperm.xlu0 %131, %v87
    %v133 = vpop.permute.xlu0 %132
    %134 = vset.pattern.permute.xlu0 0
    %135 = vperm.xlu0 %134, %v88
    %v136 = vpop.permute.xlu0 %135
    %137 = vset.pattern.permute.xlu0 0
    %138 = vperm.xlu0 %137, %v89
    %v139 = vpop.permute.xlu0 %138
    %vm140 = vcmp.eq.s32.totalorder %v91, %v94
    %vm141 = vcmp.eq.s32.totalorder %v91, %v97
    %vm142 = vcmp.eq.s32.totalorder %v91, %v100
    %vm143 = vcmp.eq.s32.totalorder %v91, %v103
    %vm144 = vcmp.eq.s32.totalorder %v91, %v106
    %vm145 = vcmp.eq.s32.totalorder %v91, %v109
    %vm146 = vcmp.eq.s32.totalorder %v91, %v112
    %vm147 = vcmp.eq.s32.totalorder %v91, %v115
    %vm148 = vcmp.eq.s32.totalorder %v91, %v118
    %vm149 = vcmp.eq.s32.totalorder %v91, %v121
    %vm150 = vcmp.eq.s32.totalorder %v91, %v124
    %vm151 = vcmp.eq.s32.totalorder %v91, %v127
    %vm152 = vcmp.eq.s32.totalorder %v91, %v130
    %vm153 = vcmp.eq.s32.totalorder %v91, %v133
    %vm154 = vcmp.eq.s32.totalorder %v91, %v136
    %vm155 = vcmp.eq.s32.totalorder %v91, %v139
    %v156 = vsel %vm140, 1, 0
    %v157 = vsel %vm141, 1, 0
    %v158 = vsel %vm142, 1, 0
    %v159 = vsel %vm143, 1, 0
    %v160 = vsel %vm144, 1, 0
    %v161 = vsel %vm145, 1, 0
    %v162 = vsel %vm146, 1, 0
    %v163 = vsel %vm147, 1, 0
    %v164 = vsel %vm148, 1, 0
    %v165 = vsel %vm149, 1, 0
    %v166 = vsel %vm150, 1, 0
    %v167 = vsel %vm151, 1, 0
    %v168 = vsel %vm152, 1, 0
    %v169 = vsel %vm153, 1, 0
    %v170 = vsel %vm154, 1, 0
    %v171 = vsel %vm155, 1, 0
    %v172 = vcvt.s32.f32 %v156
    %v173 = vcvt.s32.f32 %v157
    %v174 = vcvt.s32.f32 %v158
    %v175 = vcvt.s32.f32 %v159
    %v176 = vcvt.s32.f32 %v160
    %v177 = vcvt.s32.f32 %v161
    %v178 = vcvt.s32.f32 %v162
    %v179 = vcvt.s32.f32 %v163
    %v180 = vcvt.s32.f32 %v164
    %v181 = vcvt.s32.f32 %v165
    %v182 = vcvt.s32.f32 %v166
    %v183 = vcvt.s32.f32 %v167
    %v184 = vcvt.s32.f32 %v168
    %v185 = vcvt.s32.f32 %v169
    %v186 = vcvt.s32.f32 %v170
    %v187 = vcvt.s32.f32 %v171
    %v188 = vpack.c.bf16 %v173, %v172
    %v189 = vpack.c.bf16 %v175, %v174
    %v190 = vpack.c.bf16 %v177, %v176
    %v191 = vpack.c.bf16 %v179, %v178
    %v192 = vpack.c.bf16 %v181, %v180
    %v193 = vpack.c.bf16 %v183, %v182
    %v194 = vpack.c.bf16 %v185, %v184
    %v195 = vpack.c.bf16 %v187, %v186
    %196 = vset.pattern.permute.xlu0 1
    %197 = vperm.xlu0 %196, %v74
    %v198 = vpop.permute.xlu0 %197
    %199 = vset.pattern.permute.xlu0 1
    %200 = vperm.xlu0 %199, %v75
    %v201 = vpop.permute.xlu0 %200
    %202 = vset.pattern.permute.xlu0 1
    %203 = vperm.xlu0 %202, %v76
    %v204 = vpop.permute.xlu0 %203
    %205 = vset.pattern.permute.xlu0 1
    %206 = vperm.xlu0 %205, %v77
    %v207 = vpop.permute.xlu0 %206
    %208 = vset.pattern.permute.xlu0 1
    %209 = vperm.xlu0 %208, %v78
    %v210 = vpop.permute.xlu0 %209
    %211 = vset.pattern.permute.xlu0 1
    %212 = vperm.xlu0 %211, %v79
    %v213 = vpop.permute.xlu0 %212
    %214 = vset.pattern.permute.xlu0 1
    %215 = vperm.xlu0 %214, %v80
    %v216 = vpop.permute.xlu0 %215
    %217 = vset.pattern.permute.xlu0 1
    %218 = vperm.xlu0 %217, %v81
    %v219 = vpop.permute.xlu0 %218
    %220 = vset.pattern.permute.xlu0 1
    %221 = vperm.xlu0 %220, %v82
    %v222 = vpop.permute.xlu0 %221
    %223 = vset.pattern.permute.xlu0 1
    %224 = vperm.xlu0 %223, %v83
    %v225 = vpop.permute.xlu0 %224
    %226 = vset.pattern.permute.xlu0 1
    %227 = vperm.xlu0 %226, %v84
    %v228 = vpop.permute.xlu0 %227
    %229 = vset.pattern.permute.xlu0 1
    %230 = vperm.xlu0 %229, %v85
    %v231 = vpop.permute.xlu0 %230
    %232 = vset.pattern.permute.xlu0 1
    %233 = vperm.xlu0 %232, %v86
    %v234 = vpop.permute.xlu0 %233
    %235 = vset.pattern.permute.xlu0 1
    %236 = vperm.xlu0 %235, %v87
    %v237 = vpop.permute.xlu0 %236
    %238 = vset.pattern.permute.xlu0 1
    %239 = vperm.xlu0 %238, %v88
    %v240 = vpop.permute.xlu0 %239
    %241 = vset.pattern.permute.xlu0 1
    %242 = vperm.xlu0 %241, %v89
    %v243 = vpop.permute.xlu0 %242
    %vm244 = vcmp.eq.s32.totalorder %v91, %v198
    %vm245 = vcmp.eq.s32.totalorder %v91, %v201
    %vm246 = vcmp.eq.s32.totalorder %v91, %v204
    %vm247 = vcmp.eq.s32.totalorder %v91, %v207
    %vm248 = vcmp.eq.s32.totalorder %v91, %v210
    %vm249 = vcmp.eq.s32.totalorder %v91, %v213
    %vm250 = vcmp.eq.s32.totalorder %v91, %v216
    %vm251 = vcmp.eq.s32.totalorder %v91, %v219
    %vm252 = vcmp.eq.s32.totalorder %v91, %v222
    %vm253 = vcmp.eq.s32.totalorder %v91, %v225
    %vm254 = vcmp.eq.s32.totalorder %v91, %v228
    %vm255 = vcmp.eq.s32.totalorder %v91, %v231
    %vm256 = vcmp.eq.s32.totalorder %v91, %v234
    %vm257 = vcmp.eq.s32.totalorder %v91, %v237
    %vm258 = vcmp.eq.s32.totalorder %v91, %v240
    %vm259 = vcmp.eq.s32.totalorder %v91, %v243
    %v260 = vsel %vm244, 1, 0
    %v261 = vsel %vm245, 1, 0
    %v262 = vsel %vm246, 1, 0
    %v263 = vsel %vm247, 1, 0
    %v264 = vsel %vm248, 1, 0
    %v265 = vsel %vm249, 1, 0
    %v266 = vsel %vm250, 1, 0
    %v267 = vsel %vm251, 1, 0
    %v268 = vsel %vm252, 1, 0
    %v269 = vsel %vm253, 1, 0
    %v270 = vsel %vm254, 1, 0
    %v271 = vsel %vm255, 1, 0
    %v272 = vsel %vm256, 1, 0
    %v273 = vsel %vm257, 1, 0
    %v274 = vsel %vm258, 1, 0
    %v275 = vsel %vm259, 1, 0
    %v276 = vcvt.s32.f32 %v260
    %v277 = vcvt.s32.f32 %v261
    %v278 = vcvt.s32.f32 %v262
    %v279 = vcvt.s32.f32 %v263
    %v280 = vcvt.s32.f32 %v264
    %v281 = vcvt.s32.f32 %v265
    %v282 = vcvt.s32.f32 %v266
    %v283 = vcvt.s32.f32 %v267
    %v284 = vcvt.s32.f32 %v268
    %v285 = vcvt.s32.f32 %v269
    %v286 = vcvt.s32.f32 %v270
    %v287 = vcvt.s32.f32 %v271
    %v288 = vcvt.s32.f32 %v272
    %v289 = vcvt.s32.f32 %v273
    %v290 = vcvt.s32.f32 %v274
    %v291 = vcvt.s32.f32 %v275
    %v292 = vpack.c.bf16 %v277, %v276
    %v293 = vpack.c.bf16 %v279, %v278
    %v294 = vpack.c.bf16 %v281, %v280
    %v295 = vpack.c.bf16 %v283, %v282
    %v296 = vpack.c.bf16 %v285, %v284
    %v297 = vpack.c.bf16 %v287, %v286
    %v298 = vpack.c.bf16 %v289, %v288
    %v299 = vpack.c.bf16 %v291, %v290
    %300 = vset.pattern.permute.xlu0 2
    %301 = vperm.xlu0 %300, %v74
    %v302 = vpop.permute.xlu0 %301
    %303 = vset.pattern.permute.xlu0 2
    %304 = vperm.xlu0 %303, %v75
    %v305 = vpop.permute.xlu0 %304
    %306 = vset.pattern.permute.xlu0 2
    %307 = vperm.xlu0 %306, %v76
    %v308 = vpop.permute.xlu0 %307
    %309 = vset.pattern.permute.xlu0 2
    %310 = vperm.xlu0 %309, %v77
    %v311 = vpop.permute.xlu0 %310
    %312 = vset.pattern.permute.xlu0 2
    %313 = vperm.xlu0 %312, %v78
    %v314 = vpop.permute.xlu0 %313
    %315 = vset.pattern.permute.xlu0 2
    %316 = vperm.xlu0 %315, %v79
    %v317 = vpop.permute.xlu0 %316
    %318 = vset.pattern.permute.xlu0 2
    %319 = vperm.xlu0 %318, %v80
    %v320 = vpop.permute.xlu0 %319
    %321 = vset.pattern.permute.xlu0 2
    %322 = vperm.xlu0 %321, %v81
    %v323 = vpop.permute.xlu0 %322
    %324 = vset.pattern.permute.xlu0 2
    %325 = vperm.xlu0 %324, %v82
    %v326 = vpop.permute.xlu0 %325
    %327 = vset.pattern.permute.xlu0 2
    %328 = vperm.xlu0 %327, %v83
    %v329 = vpop.permute.xlu0 %328
    %330 = vset.pattern.permute.xlu0 2
    %331 = vperm.xlu0 %330, %v84
    %v332 = vpop.permute.xlu0 %331
    %333 = vset.pattern.permute.xlu0 2
    %334 = vperm.xlu0 %333, %v85
    %v335 = vpop.permute.xlu0 %334
    %336 = vset.pattern.permute.xlu0 2
    %337 = vperm.xlu0 %336, %v86
    %v338 = vpop.permute.xlu0 %337
    %339 = vset.pattern.permute.xlu0 2
    %340 = vperm.xlu0 %339, %v87
    %v341 = vpop.permute.xlu0 %340
    %342 = vset.pattern.permute.xlu0 2
    %343 = vperm.xlu0 %342, %v88
    %v344 = vpop.permute.xlu0 %343
    %345 = vset.pattern.permute.xlu0 2
    %346 = vperm.xlu0 %345, %v89
    %v347 = vpop.permute.xlu0 %346
    %vm348 = vcmp.eq.s32.totalorder %v91, %v302
    %vm349 = vcmp.eq.s32.totalorder %v91, %v305
    %vm350 = vcmp.eq.s32.totalorder %v91, %v308
    %vm351 = vcmp.eq.s32.totalorder %v91, %v311
    %vm352 = vcmp.eq.s32.totalorder %v91, %v314
    %vm353 = vcmp.eq.s32.totalorder %v91, %v317
    %vm354 = vcmp.eq.s32.totalorder %v91, %v320
    %vm355 = vcmp.eq.s32.totalorder %v91, %v323
    %vm356 = vcmp.eq.s32.totalorder %v91, %v326
    %vm357 = vcmp.eq.s32.totalorder %v91, %v329
    %vm358 = vcmp.eq.s32.totalorder %v91, %v332
    %vm359 = vcmp.eq.s32.totalorder %v91, %v335
    %vm360 = vcmp.eq.s32.totalorder %v91, %v338
    %vm361 = vcmp.eq.s32.totalorder %v91, %v341
    %vm362 = vcmp.eq.s32.totalorder %v91, %v344
    %vm363 = vcmp.eq.s32.totalorder %v91, %v347
    %v364 = vsel %vm348, 1, 0
    %v365 = vsel %vm349, 1, 0
    %v366 = vsel %vm350, 1, 0
    %v367 = vsel %vm351, 1, 0
    %v368 = vsel %vm352, 1, 0
    %v369 = vsel %vm353, 1, 0
    %v370 = vsel %vm354, 1, 0
    %v371 = vsel %vm355, 1, 0
    %v372 = vsel %vm356, 1, 0
    %v373 = vsel %vm357, 1, 0
    %v374 = vsel %vm358, 1, 0
    %v375 = vsel %vm359, 1, 0
    %v376 = vsel %vm360, 1, 0
    %v377 = vsel %vm361, 1, 0
    %v378 = vsel %vm362, 1, 0
    %v379 = vsel %vm363, 1, 0
    %v380 = vcvt.s32.f32 %v364
    %v381 = vcvt.s32.f32 %v365
    %v382 = vcvt.s32.f32 %v366
    %v383 = vcvt.s32.f32 %v367
    %v384 = vcvt.s32.f32 %v368
    %v385 = vcvt.s32.f32 %v369
    %v386 = vcvt.s32.f32 %v370
    %v387 = vcvt.s32.f32 %v371
    %v388 = vcvt.s32.f32 %v372
    %v389 = vcvt.s32.f32 %v373
    %v390 = vcvt.s32.f32 %v374
    %v391 = vcvt.s32.f32 %v375
    %v392 = vcvt.s32.f32 %v376
    %v393 = vcvt.s32.f32 %v377
    %v394 = vcvt.s32.f32 %v378
    %v395 = vcvt.s32.f32 %v379
    %v396 = vpack.c.bf16 %v381, %v380
    %v397 = vpack.c.bf16 %v383, %v382
    %v398 = vpack.c.bf16 %v385, %v384
    %v399 = vpack.c.bf16 %v387, %v386
    %v400 = vpack.c.bf16 %v389, %v388
    %v401 = vpack.c.bf16 %v391, %v390
    %v402 = vpack.c.bf16 %v393, %v392
    %v403 = vpack.c.bf16 %v395, %v394
    %404 = vset.pattern.permute.xlu0 3
    %405 = vperm.xlu0 %404, %v74
    %v406 = vpop.permute.xlu0 %405
    %407 = vset.pattern.permute.xlu0 3
    %408 = vperm.xlu0 %407, %v75
    %v409 = vpop.permute.xlu0 %408
    %410 = vset.pattern.permute.xlu0 3
    %411 = vperm.xlu0 %410, %v76
    %v412 = vpop.permute.xlu0 %411
    %413 = vset.pattern.permute.xlu0 3
    %414 = vperm.xlu0 %413, %v77
    %v415 = vpop.permute.xlu0 %414
    %416 = vset.pattern.permute.xlu0 3
    %417 = vperm.xlu0 %416, %v78
    %v418 = vpop.permute.xlu0 %417
    %419 = vset.pattern.permute.xlu0 3
    %420 = vperm.xlu0 %419, %v79
    %v421 = vpop.permute.xlu0 %420
    %422 = vset.pattern.permute.xlu0 3
    %423 = vperm.xlu0 %422, %v80
    %v424 = vpop.permute.xlu0 %423
    %425 = vset.pattern.permute.xlu0 3
    %426 = vperm.xlu0 %425, %v81
    %v427 = vpop.permute.xlu0 %426
    %428 = vset.pattern.permute.xlu0 3
    %429 = vperm.xlu0 %428, %v82
    %v430 = vpop.permute.xlu0 %429
    %431 = vset.pattern.permute.xlu0 3
    %432 = vperm.xlu0 %431, %v83
    %v433 = vpop.permute.xlu0 %432
    %434 = vset.pattern.permute.xlu0 3
    %435 = vperm.xlu0 %434, %v84
    %v436 = vpop.permute.xlu0 %435
    %437 = vset.pattern.permute.xlu0 3
    %438 = vperm.xlu0 %437, %v85
    %v439 = vpop.permute.xlu0 %438
    %440 = vset.pattern.permute.xlu0 3
    %441 = vperm.xlu0 %440, %v86
    %v442 = vpop.permute.xlu0 %441
    %443 = vset.pattern.permute.xlu0 3
    %444 = vperm.xlu0 %443, %v87
    %v445 = vpop.permute.xlu0 %444
    %446 = vset.pattern.permute.xlu0 3
    %447 = vperm.xlu0 %446, %v88
    %v448 = vpop.permute.xlu0 %447
    %449 = vset.pattern.permute.xlu0 3
    %450 = vperm.xlu0 %449, %v89
    %v451 = vpop.permute.xlu0 %450
    %vm452 = vcmp.eq.s32.totalorder %v91, %v406
    %vm453 = vcmp.eq.s32.totalorder %v91, %v409
    %vm454 = vcmp.eq.s32.totalorder %v91, %v412
    %vm455 = vcmp.eq.s32.totalorder %v91, %v415
    %vm456 = vcmp.eq.s32.totalorder %v91, %v418
    %vm457 = vcmp.eq.s32.totalorder %v91, %v421
    %vm458 = vcmp.eq.s32.totalorder %v91, %v424
    %vm459 = vcmp.eq.s32.totalorder %v91, %v427
    %vm460 = vcmp.eq.s32.totalorder %v91, %v430
    %vm461 = vcmp.eq.s32.totalorder %v91, %v433
    %vm462 = vcmp.eq.s32.totalorder %v91, %v436
    %vm463 = vcmp.eq.s32.totalorder %v91, %v439
    %vm464 = vcmp.eq.s32.totalorder %v91, %v442
    %vm465 = vcmp.eq.s32.totalorder %v91, %v445
    %vm466 = vcmp.eq.s32.totalorder %v91, %v448
    %vm467 = vcmp.eq.s32.totalorder %v91, %v451
    %v468 = vsel %vm452, 1, 0
    %v469 = vsel %vm453, 1, 0
    %v470 = vsel %vm454, 1, 0
    %v471 = vsel %vm455, 1, 0
    %v472 = vsel %vm456, 1, 0
    %v473 = vsel %vm457, 1, 0
    %v474 = vsel %vm458, 1, 0
    %v475 = vsel %vm459, 1, 0
    %v476 = vsel %vm460, 1, 0
    %v477 = vsel %vm461, 1, 0
    %v478 = vsel %vm462, 1, 0
    %v479 = vsel %vm463, 1, 0
    %v480 = vsel %vm464, 1, 0
    %v481 = vsel %vm465, 1, 0
    %v482 = vsel %vm466, 1, 0
    %v483 = vsel %vm467, 1, 0
    %v484 = vcvt.s32.f32 %v468
    %v485 = vcvt.s32.f32 %v469
    %v486 = vcvt.s32.f32 %v470
    %v487 = vcvt.s32.f32 %v471
    %v488 = vcvt.s32.f32 %v472
    %v489 = vcvt.s32.f32 %v473
    %v490 = vcvt.s32.f32 %v474
    %v491 = vcvt.s32.f32 %v475
    %v492 = vcvt.s32.f32 %v476
    %v493 = vcvt.s32.f32 %v477
    %v494 = vcvt.s32.f32 %v478
    %v495 = vcvt.s32.f32 %v479
    %v496 = vcvt.s32.f32 %v480
    %v497 = vcvt.s32.f32 %v481
    %v498 = vcvt.s32.f32 %v482
    %v499 = vcvt.s32.f32 %v483
    %v500 = vpack.c.bf16 %v485, %v484
    %v501 = vpack.c.bf16 %v487, %v486
    %v502 = vpack.c.bf16 %v489, %v488
    %v503 = vpack.c.bf16 %v491, %v490
    %v504 = vpack.c.bf16 %v493, %v492
    %v505 = vpack.c.bf16 %v495, %v494
    %v506 = vpack.c.bf16 %v497, %v496
    %v507 = vpack.c.bf16 %v499, %v498
    %508 = vset.pattern.permute.xlu0 4
    %509 = vperm.xlu0 %508, %v74
    %v510 = vpop.permute.xlu0 %509
    %511 = vset.pattern.permute.xlu0 4
    %512 = vperm.xlu0 %511, %v75
    %v513 = vpop.permute.xlu0 %512
    %514 = vset.pattern.permute.xlu0 4
    %515 = vperm.xlu0 %514, %v76
    %v516 = vpop.permute.xlu0 %515
    %517 = vset.pattern.permute.xlu0 4
    %518 = vperm.xlu0 %517, %v77
    %v519 = vpop.permute.xlu0 %518
    %520 = vset.pattern.permute.xlu0 4
    %521 = vperm.xlu0 %520, %v78
    %v522 = vpop.permute.xlu0 %521
    %523 = vset.pattern.permute.xlu0 4
    %524 = vperm.xlu0 %523, %v79
    %v525 = vpop.permute.xlu0 %524
    %526 = vset.pattern.permute.xlu0 4
    %527 = vperm.xlu0 %526, %v80
    %v528 = vpop.permute.xlu0 %527
    %529 = vset.pattern.permute.xlu0 4
    %530 = vperm.xlu0 %529, %v81
    %v531 = vpop.permute.xlu0 %530
    %532 = vset.pattern.permute.xlu0 4
    %533 = vperm.xlu0 %532, %v82
    %v534 = vpop.permute.xlu0 %533
    %535 = vset.pattern.permute.xlu0 4
    %536 = vperm.xlu0 %535, %v83
    %v537 = vpop.permute.xlu0 %536
    %538 = vset.pattern.permute.xlu0 4
    %539 = vperm.xlu0 %538, %v84
    %v540 = vpop.permute.xlu0 %539
    %541 = vset.pattern.permute.xlu0 4
    %542 = vperm.xlu0 %541, %v85
    %v543 = vpop.permute.xlu0 %542
    %544 = vset.pattern.permute.xlu0 4
    %545 = vperm.xlu0 %544, %v86
    %v546 = vpop.permute.xlu0 %545
    %547 = vset.pattern.permute.xlu0 4
    %548 = vperm.xlu0 %547, %v87
    %v549 = vpop.permute.xlu0 %548
    %550 = vset.pattern.permute.xlu0 4
    %551 = vperm.xlu0 %550, %v88
    %v552 = vpop.permute.xlu0 %551
    %553 = vset.pattern.permute.xlu0 4
    %554 = vperm.xlu0 %553, %v89
    %v555 = vpop.permute.xlu0 %554
    %vm556 = vcmp.eq.s32.totalorder %v91, %v510
    %vm557 = vcmp.eq.s32.totalorder %v91, %v513
    %vm558 = vcmp.eq.s32.totalorder %v91, %v516
    %vm559 = vcmp.eq.s32.totalorder %v91, %v519
    %vm560 = vcmp.eq.s32.totalorder %v91, %v522
    %vm561 = vcmp.eq.s32.totalorder %v91, %v525
    %vm562 = vcmp.eq.s32.totalorder %v91, %v528
    %vm563 = vcmp.eq.s32.totalorder %v91, %v531
    %vm564 = vcmp.eq.s32.totalorder %v91, %v534
    %vm565 = vcmp.eq.s32.totalorder %v91, %v537
    %vm566 = vcmp.eq.s32.totalorder %v91, %v540
    %vm567 = vcmp.eq.s32.totalorder %v91, %v543
    %vm568 = vcmp.eq.s32.totalorder %v91, %v546
    %vm569 = vcmp.eq.s32.totalorder %v91, %v549
    %vm570 = vcmp.eq.s32.totalorder %v91, %v552
    %vm571 = vcmp.eq.s32.totalorder %v91, %v555
    %v572 = vsel %vm556, 1, 0
    %v573 = vsel %vm557, 1, 0
    %v574 = vsel %vm558, 1, 0
    %v575 = vsel %vm559, 1, 0
    %v576 = vsel %vm560, 1, 0
    %v577 = vsel %vm561, 1, 0
    %v578 = vsel %vm562, 1, 0
    %v579 = vsel %vm563, 1, 0
    %v580 = vsel %vm564, 1, 0
    %v581 = vsel %vm565, 1, 0
    %v582 = vsel %vm566, 1, 0
    %v583 = vsel %vm567, 1, 0
    %v584 = vsel %vm568, 1, 0
    %v585 = vsel %vm569, 1, 0
    %v586 = vsel %vm570, 1, 0
    %v587 = vsel %vm571, 1, 0
    %v588 = vcvt.s32.f32 %v572
    %v589 = vcvt.s32.f32 %v573
    %v590 = vcvt.s32.f32 %v574
    %v591 = vcvt.s32.f32 %v575
    %v592 = vcvt.s32.f32 %v576
    %v593 = vcvt.s32.f32 %v577
    %v594 = vcvt.s32.f32 %v578
    %v595 = vcvt.s32.f32 %v579
    %v596 = vcvt.s32.f32 %v580
    %v597 = vcvt.s32.f32 %v581
    %v598 = vcvt.s32.f32 %v582
    %v599 = vcvt.s32.f32 %v583
    %v600 = vcvt.s32.f32 %v584
    %v601 = vcvt.s32.f32 %v585
    %v602 = vcvt.s32.f32 %v586
    %v603 = vcvt.s32.f32 %v587
    %v604 = vpack.c.bf16 %v589, %v588
    %v605 = vpack.c.bf16 %v591, %v590
    %v606 = vpack.c.bf16 %v593, %v592
    %v607 = vpack.c.bf16 %v595, %v594
    %v608 = vpack.c.bf16 %v597, %v596
    %v609 = vpack.c.bf16 %v599, %v598
    %v610 = vpack.c.bf16 %v601, %v600
    %v611 = vpack.c.bf16 %v603, %v602
    %v612 = vld [vmem:[#allocation2] sm:$0xff]
    %v613 = vld [vmem:[#allocation2 + $0x8] sm:$0xf]
    %v614 = vld [vmem:[#allocation2 + $0xc] sm:$0xff]
    %v615 = vld [vmem:[#allocation2 + $0x14] sm:$0xf]
    %v616 = vld [vmem:[#allocation2 + $0x18] sm:$0xff]
    %v617 = vld [vmem:[#allocation2 + $0x20] sm:$0xf]
    %v618 = vld [vmem:[#allocation2 + $0x24] sm:$0xff]
    %v619 = vld [vmem:[#allocation2 + $0x2c] sm:$0xf]
    %v620 = vld [vmem:[#allocation2 + $0x30] sm:$0xff]
    %v621 = vld [vmem:[#allocation2 + $0x38] sm:$0xf]
    %v622 = vld [vmem:[#allocation2 + $0x3c] sm:$0xff]
    %v623 = vld [vmem:[#allocation2 + $0x44] sm:$0xf]
    %v624 = vld [vmem:[#allocation2 + $0x48] sm:$0xff]
    %v625 = vld [vmem:[#allocation2 + $0x50] sm:$0xf]
    %v626 = vld [vmem:[#allocation2 + $0x54] sm:$0xff]
    %v627 = vld [vmem:[#allocation2 + $0x5c] sm:$0xf]
    %v628 = vld [vmem:[#allocation2 + $0x60] sm:$0xff]
    %v629 = vld [vmem:[#allocation2 + $0x68] sm:$0xf]
    %v630 = vld [vmem:[#allocation2 + $0x6c] sm:$0xff]
    %v631 = vld [vmem:[#allocation2 + $0x74] sm:$0xf]
    %v632 = vld [vmem:[#allocation2 + $0x78] sm:$0xff]
    %v633 = vld [vmem:[#allocation2 + $0x80] sm:$0xf]
    %v634 = vld [vmem:[#allocation2 + $0x84] sm:$0xff]
    %v635 = vld [vmem:[#allocation2 + $0x8c] sm:$0xf]
    %v636 = vld [vmem:[#allocation2 + $0x90] sm:$0xff]
    %v637 = vld [vmem:[#allocation2 + $0x98] sm:$0xf]
    %v638 = vld [vmem:[#allocation2 + $0x9c] sm:$0xff]
    %v639 = vld [vmem:[#allocation2 + $0xa4] sm:$0xf]
    %v640 = vld [vmem:[#allocation2 + $0xa8] sm:$0xff]
    %v641 = vld [vmem:[#allocation2 + $0xb0] sm:$0xf]
    %v642 = vld [vmem:[#allocation2 + $0xb4] sm:$0xff]
    %v643 = vld [vmem:[#allocation2 + $0xbc] sm:$0xf]
    %v644 = vld [vmem:[#allocation2 + $0xc0] sm:$0xff]
    %v645 = vld [vmem:[#allocation2 + $0xc8] sm:$0xf]
    %v646 = vld [vmem:[#allocation2 + $0xcc] sm:$0xff]
    %v647 = vld [vmem:[#allocation2 + $0xd4] sm:$0xf]
    %v648 = vld [vmem:[#allocation2 + $0xd8] sm:$0xff]
    %v649 = vld [vmem:[#allocation2 + $0xe0] sm:$0xf]
    %v650 = vld [vmem:[#allocation2 + $0xe4] sm:$0xff]
    %v651 = vld [vmem:[#allocation2 + $0xec] sm:$0xf]
    %v652 = vld [vmem:[#allocation2 + $0xf0] sm:$0xff]
    %v653 = vld [vmem:[#allocation2 + $0xf8] sm:$0xf]
    %v654 = vld [vmem:[#allocation2 + $0xfc] sm:$0xff]
    %v655 = vld [vmem:[#allocation2 + $0x104] sm:$0xf]
    %v656 = vld [vmem:[#allocation2 + $0x108] sm:$0xff]
    %v657 = vld [vmem:[#allocation2 + $0x110] sm:$0xf]
    %v658 = vld [vmem:[#allocation2 + $0x114] sm:$0xff]
    %v659 = vld [vmem:[#allocation2 + $0x11c] sm:$0xf]
    %v660 = vld [vmem:[#allocation2 + $0x120] sm:$0xff]
    %v661 = vld [vmem:[#allocation2 + $0x128] sm:$0xf]
    %v662 = vld [vmem:[#allocation2 + $0x12c] sm:$0xff]
    %v663 = vld [vmem:[#allocation2 + $0x134] sm:$0xf]
    %v664 = vld [vmem:[#allocation2 + $0x138] sm:$0xff]
    %v665 = vld [vmem:[#allocation2 + $0x140] sm:$0xf]
    %v666 = vld [vmem:[#allocation2 + $0x144] sm:$0xff]
    %v667 = vld [vmem:[#allocation2 + $0x14c] sm:$0xf]
    %v668 = vld [vmem:[#allocation2 + $0x150] sm:$0xff]
    %v669 = vld [vmem:[#allocation2 + $0x158] sm:$0xf]
    %v670 = vld [vmem:[#allocation2 + $0x15c] sm:$0xff]
    %v671 = vld [vmem:[#allocation2 + $0x164] sm:$0xf]
    %v672 = vld [vmem:[#allocation2 + $0x168] sm:$0xff]
    %v673 = vld [vmem:[#allocation2 + $0x170] sm:$0xf]
    %v674 = vld [vmem:[#allocation2 + $0x174] sm:$0xff]
    %v675 = vld [vmem:[#allocation2 + $0x17c] sm:$0xf]
    %v676 = vld [vmem:[#allocation2 + $0x180] sm:$0xff]
    %v677 = vld [vmem:[#allocation2 + $0x188] sm:$0xf]
    %v678 = vld [vmem:[#allocation2 + $0x18c] sm:$0xff]
    %v679 = vld [vmem:[#allocation2 + $0x194] sm:$0xf]
    %v680 = vld [vmem:[#allocation2 + $0x198] sm:$0xff]
    %v681 = vld [vmem:[#allocation2 + $0x1a0] sm:$0xf]
    %v682 = vld [vmem:[#allocation2 + $0x1a4] sm:$0xff]
    %v683 = vld [vmem:[#allocation2 + $0x1ac] sm:$0xf]
    %v684 = vld [vmem:[#allocation2 + $0x1b0] sm:$0xff]
    %v685 = vld [vmem:[#allocation2 + $0x1b8] sm:$0xf]
    %v686 = vld [vmem:[#allocation2 + $0x1bc] sm:$0xff]
    %v687 = vld [vmem:[#allocation2 + $0x1c4] sm:$0xf]
    %v688 = vld [vmem:[#allocation2 + $0x1c8] sm:$0xff]
    %v689 = vld [vmem:[#allocation2 + $0x1d0] sm:$0xf]
    %v690 = vld [vmem:[#allocation2 + $0x1d4] sm:$0xff]
    %v691 = vld [vmem:[#allocation2 + $0x1dc] sm:$0xf]
    %v692 = vld [vmem:[#allocation2 + $0x1e0] sm:$0xff]
    %v693 = vld [vmem:[#allocation2 + $0x1e8] sm:$0xf]
    %v694 = vld [vmem:[#allocation2 + $0x1ec] sm:$0xff]
    %v695 = vld [vmem:[#allocation2 + $0x1f4] sm:$0xf]
    %v696 = vld [vmem:[#allocation2 + $0x1f8] sm:$0xff]
    %v697 = vld [vmem:[#allocation2 + $0x200] sm:$0xf]
    %v698 = vld [vmem:[#allocation2 + $0x204] sm:$0xff]
    %v699 = vld [vmem:[#allocation2 + $0x20c] sm:$0xf]
    %v700 = vld [vmem:[#allocation2 + $0x210] sm:$0xff]
    %v701 = vld [vmem:[#allocation2 + $0x218] sm:$0xf]
    %v702 = vld [vmem:[#allocation2 + $0x21c] sm:$0xff]
    %v703 = vld [vmem:[#allocation2 + $0x224] sm:$0xf]
    %v704 = vld [vmem:[#allocation2 + $0x228] sm:$0xff]
    %v705 = vld [vmem:[#allocation2 + $0x230] sm:$0xf]
    %v706 = vld [vmem:[#allocation2 + $0x234] sm:$0xff]
    %v707 = vld [vmem:[#allocation2 + $0x23c] sm:$0xf]
    %v708 = vld [vmem:[#allocation2 + $0x240] sm:$0xff]
    %v709 = vld [vmem:[#allocation2 + $0x248] sm:$0xf]
    %v710 = vld [vmem:[#allocation2 + $0x24c] sm:$0xff]
    %v711 = vld [vmem:[#allocation2 + $0x254] sm:$0xf]
    %v712 = vld [vmem:[#allocation2 + $0x258] sm:$0xff]
    %v713 = vld [vmem:[#allocation2 + $0x260] sm:$0xf]
    %v714 = vld [vmem:[#allocation2 + $0x264] sm:$0xff]
    %v715 = vld [vmem:[#allocation2 + $0x26c] sm:$0xf]
    %v716 = vld [vmem:[#allocation2 + $0x270] sm:$0xff]
    %v717 = vld [vmem:[#allocation2 + $0x278] sm:$0xf]
    %v718 = vld [vmem:[#allocation2 + $0x27c] sm:$0xff]
    %v719 = vld [vmem:[#allocation2 + $0x284] sm:$0xf]
    %v720 = vld [vmem:[#allocation2 + $0x288] sm:$0xff]
    %v721 = vld [vmem:[#allocation2 + $0x290] sm:$0xf]
    %v722 = vld [vmem:[#allocation2 + $0x294] sm:$0xff]
    %v723 = vld [vmem:[#allocation2 + $0x29c] sm:$0xf]
    %v724 = vld [vmem:[#allocation2 + $0x2a0] sm:$0xff]
    %v725 = vld [vmem:[#allocation2 + $0x2a8] sm:$0xf]
    %v726 = vld [vmem:[#allocation2 + $0x2ac] sm:$0xff]
    %v727 = vld [vmem:[#allocation2 + $0x2b4] sm:$0xf]
    %v728 = vld [vmem:[#allocation2 + $0x2b8] sm:$0xff]
    %v729 = vld [vmem:[#allocation2 + $0x2c0] sm:$0xf]
    %v730 = vld [vmem:[#allocation2 + $0x2c4] sm:$0xff]
    %v731 = vld [vmem:[#allocation2 + $0x2cc] sm:$0xf]
    %v732 = vld [vmem:[#allocation2 + $0x2d0] sm:$0xff]
    %v733 = vld [vmem:[#allocation2 + $0x2d8] sm:$0xf]
    %v734 = vld [vmem:[#allocation2 + $0x2dc] sm:$0xff]
    %v735 = vld [vmem:[#allocation2 + $0x2e4] sm:$0xf]
    %v736 = vld [vmem:[#allocation2 + $0x2e8] sm:$0xff]
    %v737 = vld [vmem:[#allocation2 + $0x2f0] sm:$0xf]
    %v738 = vld [vmem:[#allocation2 + $0x2f4] sm:$0xff]
    %v739 = vld [vmem:[#allocation2 + $0x2fc] sm:$0xf]
    %v740 = vld [vmem:[#allocation2 + $0x300] sm:$0xff]
    %v741 = vld [vmem:[#allocation2 + $0x308] sm:$0xf]
    %v742 = vld [vmem:[#allocation2 + $0x30c] sm:$0xff]
    %v743 = vld [vmem:[#allocation2 + $0x314] sm:$0xf]
    %v744 = vld [vmem:[#allocation2 + $0x318] sm:$0xff]
    %v745 = vld [vmem:[#allocation2 + $0x320] sm:$0xf]
    %v746 = vld [vmem:[#allocation2 + $0x324] sm:$0xff]
    %v747 = vld [vmem:[#allocation2 + $0x32c] sm:$0xf]
    %v748 = vld [vmem:[#allocation2 + $0x330] sm:$0xff]
    %v749 = vld [vmem:[#allocation2 + $0x338] sm:$0xf]
    %v750 = vld [vmem:[#allocation2 + $0x33c] sm:$0xff]
    %v751 = vld [vmem:[#allocation2 + $0x344] sm:$0xf]
    %v752 = vld [vmem:[#allocation2 + $0x348] sm:$0xff]
    %v753 = vld [vmem:[#allocation2 + $0x350] sm:$0xf]
    %v754 = vld [vmem:[#allocation2 + $0x354] sm:$0xff]
    %v755 = vld [vmem:[#allocation2 + $0x35c] sm:$0xf]
    %v756 = vld [vmem:[#allocation2 + $0x360] sm:$0xff]
    %v757 = vld [vmem:[#allocation2 + $0x368] sm:$0xf]
    %v758 = vld [vmem:[#allocation2 + $0x36c] sm:$0xff]
    %v759 = vld [vmem:[#allocation2 + $0x374] sm:$0xf]
    %v760 = vld [vmem:[#allocation2 + $0x378] sm:$0xff]
    %v761 = vld [vmem:[#allocation2 + $0x380] sm:$0xf]
    %v762 = vld [vmem:[#allocation2 + $0x384] sm:$0xff]
    %v763 = vld [vmem:[#allocation2 + $0x38c] sm:$0xf]
    %v764 = vld [vmem:[#allocation2 + $0x390] sm:$0xff]
    %v765 = vld [vmem:[#allocation2 + $0x398] sm:$0xf]
    %v766 = vld [vmem:[#allocation2 + $0x39c] sm:$0xff]
    %v767 = vld [vmem:[#allocation2 + $0x3a4] sm:$0xf]
    %v768 = vld [vmem:[#allocation2 + $0x3a8] sm:$0xff]
    %v769 = vld [vmem:[#allocation2 + $0x3b0] sm:$0xf]
    %v770 = vld [vmem:[#allocation2 + $0x3b4] sm:$0xff]
    %v771 = vld [vmem:[#allocation2 + $0x3bc] sm:$0xf]
    %v772 = vld [vmem:[%s2] sm:$0x7]
    %v774 = vlaneseq
    %v775 = vshrl.u32 %v774, 7
    %v776 = vsub.s32 0, %v775
    %v777 = vrot.slane %v772, %v776
    %v778 = vlaneseq
    %v779 = vshrl.u32 %v778, 7
    %v780 = vsub.s32 1, %v779
    %v781 = vrot.slane %v772, %v780
    %v782 = vlaneseq
    %v783 = vshrl.u32 %v782, 7
    %v784 = vsub.s32 2, %v783
    %v785 = vrot.slane %v772, %v784
    %v949 = vunpack.c.l.b16 %v612
    %v950 = vunpack.c.h.b16 %v612
    %v951 = vunpack.c.l.b16 %v613
    %v952 = vunpack.c.l.b16 %v614
    %v953 = vunpack.c.h.b16 %v614
    %v954 = vunpack.c.l.b16 %v615
    %v955 = vunpack.c.l.b16 %v616
    %v956 = vunpack.c.h.b16 %v616
    %v957 = vunpack.c.l.b16 %v617
    %v958 = vunpack.c.l.b16 %v618
    %v959 = vunpack.c.h.b16 %v618
    %v960 = vunpack.c.l.b16 %v619
    %v961 = vunpack.c.l.b16 %v620
    %v962 = vunpack.c.h.b16 %v620
    %v963 = vunpack.c.l.b16 %v621
    %v964 = vunpack.c.l.b16 %v622
    %v965 = vunpack.c.h.b16 %v622
    %v966 = vunpack.c.l.b16 %v623
    %v967 = vunpack.c.l.b16 %v624
    %v968 = vunpack.c.h.b16 %v624
    %v969 = vunpack.c.l.b16 %v625
    %v970 = vunpack.c.l.b16 %v626
    %v971 = vunpack.c.h.b16 %v626
    %v972 = vunpack.c.l.b16 %v627
    %v973 = vunpack.c.l.b16 %v628
    %v974 = vunpack.c.h.b16 %v628
    %v975 = vunpack.c.l.b16 %v629
    %v976 = vunpack.c.l.b16 %v630
    %v977 = vunpack.c.h.b16 %v630
    %v978 = vunpack.c.l.b16 %v631
    %v979 = vunpack.c.l.b16 %v632
    %v980 = vunpack.c.h.b16 %v632
    %v981 = vunpack.c.l.b16 %v633
    %v982 = vunpack.c.l.b16 %v634
    %v983 = vunpack.c.h.b16 %v634
    %v984 = vunpack.c.l.b16 %v635
    %v985 = vunpack.c.l.b16 %v636
    %v986 = vunpack.c.h.b16 %v636
    %v987 = vunpack.c.l.b16 %v637
    %v988 = vunpack.c.l.b16 %v638
    %v989 = vunpack.c.h.b16 %v638
    %v990 = vunpack.c.l.b16 %v639
    %v991 = vunpack.c.l.b16 %v640
    %v992 = vunpack.c.h.b16 %v640
    %v993 = vunpack.c.l.b16 %v641
    %v994 = vunpack.c.l.b16 %v642
    %v995 = vunpack.c.h.b16 %v642
    %v996 = vunpack.c.l.b16 %v643
    %v997 = vunpack.c.l.b16 %v644
    %v998 = vunpack.c.h.b16 %v644
    %v999 = vunpack.c.l.b16 %v645
    %v1000 = vunpack.c.l.b16 %v646
    %v1001 = vunpack.c.h.b16 %v646
    %v1002 = vunpack.c.l.b16 %v647
    %v1003 = vunpack.c.l.b16 %v648
    %v1004 = vunpack.c.h.b16 %v648
    %v1005 = vunpack.c.l.b16 %v649
    %v1006 = vunpack.c.l.b16 %v650
    %v1007 = vunpack.c.h.b16 %v650
    %v1008 = vunpack.c.l.b16 %v651
    %v1009 = vunpack.c.l.b16 %v652
    %v1010 = vunpack.c.h.b16 %v652
    %v1011 = vunpack.c.l.b16 %v653
    %v1012 = vunpack.c.l.b16 %v654
    %v1013 = vunpack.c.h.b16 %v654
    %v1014 = vunpack.c.l.b16 %v655
    %v1015 = vunpack.c.l.b16 %v656
    %v1016 = vunpack.c.h.b16 %v656
    %v1017 = vunpack.c.l.b16 %v657
    %v1018 = vunpack.c.l.b16 %v658
    %v1019 = vunpack.c.h.b16 %v658
    %v1020 = vunpack.c.l.b16 %v659
    %v1021 = vunpack.c.l.b16 %v660
    %v1022 = vunpack.c.h.b16 %v660
    %v1023 = vunpack.c.l.b16 %v661
    %v1024 = vunpack.c.l.b16 %v662
    %v1025 = vunpack.c.h.b16 %v662
    %v1026 = vunpack.c.l.b16 %v663
    %v1027 = vunpack.c.l.b16 %v664
    %v1028 = vunpack.c.h.b16 %v664
    %v1029 = vunpack.c.l.b16 %v665
    %v1030 = vunpack.c.l.b16 %v666
    %v1031 = vunpack.c.h.b16 %v666
    %v1032 = vunpack.c.l.b16 %v667
    %v1033 = vunpack.c.l.b16 %v668
    %v1034 = vunpack.c.h.b16 %v668
    %v1035 = vunpack.c.l.b16 %v669
    %v1036 = vunpack.c.l.b16 %v670
    %v1037 = vunpack.c.h.b16 %v670
    %v1038 = vunpack.c.l.b16 %v671
    %v1039 = vunpack.c.l.b16 %v672
    %v1040 = vunpack.c.h.b16 %v672
    %v1041 = vunpack.c.l.b16 %v673
    %v1042 = vunpack.c.l.b16 %v674
    %v1043 = vunpack.c.h.b16 %v674
    %v1044 = vunpack.c.l.b16 %v675
    %v1045 = vunpack.c.l.b16 %v676
    %v1046 = vunpack.c.h.b16 %v676
    %v1047 = vunpack.c.l.b16 %v677
    %v1048 = vunpack.c.l.b16 %v678
    %v1049 = vunpack.c.h.b16 %v678
    %v1050 = vunpack.c.l.b16 %v679
    %v1051 = vunpack.c.l.b16 %v680
    %v1052 = vunpack.c.h.b16 %v680
    %v1053 = vunpack.c.l.b16 %v681
    %v1054 = vunpack.c.l.b16 %v682
    %v1055 = vunpack.c.h.b16 %v682
    %v1056 = vunpack.c.l.b16 %v683
    %v1057 = vunpack.c.l.b16 %v684
    %v1058 = vunpack.c.h.b16 %v684
    %v1059 = vunpack.c.l.b16 %v685
    %v1060 = vunpack.c.l.b16 %v686
    %v1061 = vunpack.c.h.b16 %v686
    %v1062 = vunpack.c.l.b16 %v687
    %v1063 = vunpack.c.l.b16 %v688
    %v1064 = vunpack.c.h.b16 %v688
    %v1065 = vunpack.c.l.b16 %v689
    %v1066 = vunpack.c.l.b16 %v690
    %v1067 = vunpack.c.h.b16 %v690
    %v1068 = vunpack.c.l.b16 %v691
    %v1069 = vunpack.c.l.b16 %v692
    %v1070 = vunpack.c.h.b16 %v692
    %v1071 = vunpack.c.l.b16 %v693
    %v1072 = vunpack.c.l.b16 %v694
    %v1073 = vunpack.c.h.b16 %v694
    %v1074 = vunpack.c.l.b16 %v695
    %v1075 = vunpack.c.l.b16 %v696
    %v1076 = vunpack.c.h.b16 %v696
    %v1077 = vunpack.c.l.b16 %v697
    %v1078 = vunpack.c.l.b16 %v698
    %v1079 = vunpack.c.h.b16 %v698
    %v1080 = vunpack.c.l.b16 %v699
    %v1081 = vunpack.c.l.b16 %v700
    %v1082 = vunpack.c.h.b16 %v700
    %v1083 = vunpack.c.l.b16 %v701
    %v1084 = vunpack.c.l.b16 %v702
    %v1085 = vunpack.c.h.b16 %v702
    %v1086 = vunpack.c.l.b16 %v703
    %v1087 = vunpack.c.l.b16 %v704
    %v1088 = vunpack.c.h.b16 %v704
    %v1089 = vunpack.c.l.b16 %v705
    %v1090 = vunpack.c.l.b16 %v706
    %v1091 = vunpack.c.h.b16 %v706
    %v1092 = vunpack.c.l.b16 %v707
    %v1093 = vunpack.c.l.b16 %v708
    %v1094 = vunpack.c.h.b16 %v708
    %v1095 = vunpack.c.l.b16 %v709
    %v1096 = vunpack.c.l.b16 %v710
    %v1097 = vunpack.c.h.b16 %v710
    %v1098 = vunpack.c.l.b16 %v711
    %v1099 = vunpack.c.l.b16 %v712
    %v1100 = vunpack.c.h.b16 %v712
    %v1101 = vunpack.c.l.b16 %v713
    %v1102 = vunpack.c.l.b16 %v714
    %v1103 = vunpack.c.h.b16 %v714
    %v1104 = vunpack.c.l.b16 %v715
    %v1105 = vunpack.c.l.b16 %v716
    %v1106 = vunpack.c.h.b16 %v716
    %v1107 = vunpack.c.l.b16 %v717
    %v1108 = vunpack.c.l.b16 %v718
    %v1109 = vunpack.c.h.b16 %v718
    %v1110 = vunpack.c.l.b16 %v719
    %v1111 = vunpack.c.l.b16 %v720
    %v1112 = vunpack.c.h.b16 %v720
    %v1113 = vunpack.c.l.b16 %v721
    %v1114 = vunpack.c.l.b16 %v722
    %v1115 = vunpack.c.h.b16 %v722
    %v1116 = vunpack.c.l.b16 %v723
    %v1117 = vunpack.c.l.b16 %v724
    %v1118 = vunpack.c.h.b16 %v724
    %v1119 = vunpack.c.l.b16 %v725
    %v1120 = vunpack.c.l.b16 %v726
    %v1121 = vunpack.c.h.b16 %v726
    %v1122 = vunpack.c.l.b16 %v727
    %v1123 = vunpack.c.l.b16 %v728
    %v1124 = vunpack.c.h.b16 %v728
    %v1125 = vunpack.c.l.b16 %v729
    %v1126 = vunpack.c.l.b16 %v730
    %v1127 = vunpack.c.h.b16 %v730
    %v1128 = vunpack.c.l.b16 %v731
    %v1129 = vunpack.c.l.b16 %v732
    %v1130 = vunpack.c.h.b16 %v732
    %v1131 = vunpack.c.l.b16 %v733
    %v1132 = vunpack.c.l.b16 %v734
    %v1133 = vunpack.c.h.b16 %v734
    %v1134 = vunpack.c.l.b16 %v735
    %v1135 = vunpack.c.l.b16 %v736
    %v1136 = vunpack.c.h.b16 %v736
    %v1137 = vunpack.c.l.b16 %v737
    %v1138 = vunpack.c.l.b16 %v738
    %v1139 = vunpack.c.h.b16 %v738
    %v1140 = vunpack.c.l.b16 %v739
    %v1141 = vunpack.c.l.b16 %v740
    %v1142 = vunpack.c.h.b16 %v740
    %v1143 = vunpack.c.l.b16 %v741
    %v1144 = vunpack.c.l.b16 %v742
    %v1145 = vunpack.c.h.b16 %v742
    %v1146 = vunpack.c.l.b16 %v743
    %v1147 = vunpack.c.l.b16 %v744
    %v1148 = vunpack.c.h.b16 %v744
    %v1149 = vunpack.c.l.b16 %v745
    %v1150 = vunpack.c.l.b16 %v746
    %v1151 = vunpack.c.h.b16 %v746
    %v1152 = vunpack.c.l.b16 %v747
    %v1153 = vunpack.c.l.b16 %v748
    %v1154 = vunpack.c.h.b16 %v748
    %v1155 = vunpack.c.l.b16 %v749
    %v1156 = vunpack.c.l.b16 %v750
    %v1157 = vunpack.c.h.b16 %v750
    %v1158 = vunpack.c.l.b16 %v751
    %v1159 = vunpack.c.l.b16 %v752
    %v1160 = vunpack.c.h.b16 %v752
    %v1161 = vunpack.c.l.b16 %v753
    %v1162 = vunpack.c.l.b16 %v754
    %v1163 = vunpack.c.h.b16 %v754
    %v1164 = vunpack.c.l.b16 %v755
    %v1165 = vunpack.c.l.b16 %v756
    %v1166 = vunpack.c.h.b16 %v756
    %v1167 = vunpack.c.l.b16 %v757
    %v1168 = vunpack.c.l.b16 %v758
    %v1169 = vunpack.c.h.b16 %v758
    %v1170 = vunpack.c.l.b16 %v759
    %v1171 = vunpack.c.l.b16 %v760
    %v1172 = vunpack.c.h.b16 %v760
    %v1173 = vunpack.c.l.b16 %v761
    %v1174 = vunpack.c.l.b16 %v762
    %v1175 = vunpack.c.h.b16 %v762
    %v1176 = vunpack.c.l.b16 %v763
    %v1177 = vunpack.c.l.b16 %v764
    %v1178 = vunpack.c.h.b16 %v764
    %v1179 = vunpack.c.l.b16 %v765
    %v1180 = vunpack.c.l.b16 %v766
    %v1181 = vunpack.c.h.b16 %v766
    %v1182 = vunpack.c.l.b16 %v767
    %v1183 = vunpack.c.l.b16 %v768
    %v1184 = vunpack.c.h.b16 %v768
    %v1185 = vunpack.c.l.b16 %v769
    %v1186 = vunpack.c.l.b16 %v770
    %v1187 = vunpack.c.h.b16 %v770
    %v1188 = vunpack.c.l.b16 %v771
    %v1189 = vpack.c.b16 %v952, %v949
    %v1190 = vpack.c.b16 %v953, %v950
    %v1191 = vpack.c.b16 %v954, %v951
    %v1192 = vpack.c.b16 %v958, %v955
    %v1193 = vpack.c.b16 %v959, %v956
    %v1194 = vpack.c.b16 %v960, %v957
    %v1195 = vpack.c.b16 %v964, %v961
    %v1196 = vpack.c.b16 %v965, %v962
    %v1197 = vpack.c.b16 %v966, %v963
    %v1198 = vpack.c.b16 %v970, %v967
    %v1199 = vpack.c.b16 %v971, %v968
    %v1200 = vpack.c.b16 %v972, %v969
    %v1201 = vpack.c.b16 %v976, %v973
    %v1202 = vpack.c.b16 %v977, %v974
    %v1203 = vpack.c.b16 %v978, %v975
    %v1204 = vpack.c.b16 %v982, %v979
    %v1205 = vpack.c.b16 %v983, %v980
    %v1206 = vpack.c.b16 %v984, %v981
    %v1207 = vpack.c.b16 %v988, %v985
    %v1208 = vpack.c.b16 %v989, %v986
    %v1209 = vpack.c.b16 %v990, %v987
    %v1210 = vpack.c.b16 %v994, %v991
    %v1211 = vpack.c.b16 %v995, %v992
    %v1212 = vpack.c.b16 %v996, %v993
    %v1213 = vpack.c.b16 %v1000, %v997
    %v1214 = vpack.c.b16 %v1001, %v998
    %v1215 = vpack.c.b16 %v1002, %v999
    %v1216 = vpack.c.b16 %v1006, %v1003
    %v1217 = vpack.c.b16 %v1007, %v1004
    %v1218 = vpack.c.b16 %v1008, %v1005
    %v1219 = vpack.c.b16 %v1012, %v1009
    %v1220 = vpack.c.b16 %v1013, %v1010
    %v1221 = vpack.c.b16 %v1014, %v1011
    %v1222 = vpack.c.b16 %v1018, %v1015
    %v1223 = vpack.c.b16 %v1019, %v1016
    %v1224 = vpack.c.b16 %v1020, %v1017
    %v1225 = vpack.c.b16 %v1024, %v1021
    %v1226 = vpack.c.b16 %v1025, %v1022
    %v1227 = vpack.c.b16 %v1026, %v1023
    %v1228 = vpack.c.b16 %v1030, %v1027
    %v1229 = vpack.c.b16 %v1031, %v1028
    %v1230 = vpack.c.b16 %v1032, %v1029
    %v1231 = vpack.c.b16 %v1036, %v1033
    %v1232 = vpack.c.b16 %v1037, %v1034
    %v1233 = vpack.c.b16 %v1038, %v1035
    %v1234 = vpack.c.b16 %v1042, %v1039
    %v1235 = vpack.c.b16 %v1043, %v1040
    %v1236 = vpack.c.b16 %v1044, %v1041
    %v1237 = vpack.c.b16 %v1048, %v1045
    %v1238 = vpack.c.b16 %v1049, %v1046
    %v1239 = vpack.c.b16 %v1050, %v1047
    %v1240 = vpack.c.b16 %v1054, %v1051
    %v1241 = vpack.c.b16 %v1055, %v1052
    %v1242 = vpack.c.b16 %v1056, %v1053
    %v1243 = vpack.c.b16 %v1060, %v1057
    %v1244 = vpack.c.b16 %v1061, %v1058
    %v1245 = vpack.c.b16 %v1062, %v1059
    %v1246 = vpack.c.b16 %v1066, %v1063
    %v1247 = vpack.c.b16 %v1067, %v1064
    %v1248 = vpack.c.b16 %v1068, %v1065
    %v1249 = vpack.c.b16 %v1072, %v1069
    %v1250 = vpack.c.b16 %v1073, %v1070
    %v1251 = vpack.c.b16 %v1074, %v1071
    %v1252 = vpack.c.b16 %v1078, %v1075
    %v1253 = vpack.c.b16 %v1079, %v1076
    %v1254 = vpack.c.b16 %v1080, %v1077
    %v1255 = vpack.c.b16 %v1084, %v1081
    %v1256 = vpack.c.b16 %v1085, %v1082
    %v1257 = vpack.c.b16 %v1086, %v1083
    %v1258 = vpack.c.b16 %v1090, %v1087
    %v1259 = vpack.c.b16 %v1091, %v1088
    %v1260 = vpack.c.b16 %v1092, %v1089
    %v1261 = vpack.c.b16 %v1096, %v1093
    %v1262 = vpack.c.b16 %v1097, %v1094
    %v1263 = vpack.c.b16 %v1098, %v1095
    %v1264 = vpack.c.b16 %v1102, %v1099
    %v1265 = vpack.c.b16 %v1103, %v1100
    %v1266 = vpack.c.b16 %v1104, %v1101
    %v1267 = vpack.c.b16 %v1108, %v1105
    %v1268 = vpack.c.b16 %v1109, %v1106
    %v1269 = vpack.c.b16 %v1110, %v1107
    %v1270 = vpack.c.b16 %v1114, %v1111
    %v1271 = vpack.c.b16 %v1115, %v1112
    %v1272 = vpack.c.b16 %v1116, %v1113
    %v1273 = vpack.c.b16 %v1120, %v1117
    %v1274 = vpack.c.b16 %v1121, %v1118
    %v1275 = vpack.c.b16 %v1122, %v1119
    %v1276 = vpack.c.b16 %v1126, %v1123
    %v1277 = vpack.c.b16 %v1127, %v1124
    %v1278 = vpack.c.b16 %v1128, %v1125
    %v1279 = vpack.c.b16 %v1132, %v1129
    %v1280 = vpack.c.b16 %v1133, %v1130
    %v1281 = vpack.c.b16 %v1134, %v1131
    %v1282 = vpack.c.b16 %v1138, %v1135
    %v1283 = vpack.c.b16 %v1139, %v1136
    %v1284 = vpack.c.b16 %v1140, %v1137
    %v1285 = vpack.c.b16 %v1144, %v1141
    %v1286 = vpack.c.b16 %v1145, %v1142
    %v1287 = vpack.c.b16 %v1146, %v1143
    %v1288 = vpack.c.b16 %v1150, %v1147
    %v1289 = vpack.c.b16 %v1151, %v1148
    %v1290 = vpack.c.b16 %v1152, %v1149
    %v1291 = vpack.c.b16 %v1156, %v1153
    %v1292 = vpack.c.b16 %v1157, %v1154
    %v1293 = vpack.c.b16 %v1158, %v1155
    %v1294 = vpack.c.b16 %v1162, %v1159
    %v1295 = vpack.c.b16 %v1163, %v1160
    %v1296 = vpack.c.b16 %v1164, %v1161
    %v1297 = vpack.c.b16 %v1168, %v1165
    %v1298 = vpack.c.b16 %v1169, %v1166
    %v1299 = vpack.c.b16 %v1170, %v1167
    %v1300 = vpack.c.b16 %v1174, %v1171
    %v1301 = vpack.c.b16 %v1175, %v1172
    %v1302 = vpack.c.b16 %v1176, %v1173
    %v1303 = vpack.c.b16 %v1180, %v1177
    %v1304 = vpack.c.b16 %v1181, %v1178
    %v1305 = vpack.c.b16 %v1182, %v1179
    %v1306 = vpack.c.b16 %v1186, %v1183
    %v1307 = vpack.c.b16 %v1187, %v1184
    %v1308 = vpack.c.b16 %v1188, %v1185
    %1429 = vmatprep.subr.bf16.mxu0 %v1190
    %1430 = vmatpush1.bf16.msra.mxu0 %v1189
    %1431 = vmatprep.subr.bf16.mxu0 %v1193
    %1432 = vmatpush1.bf16.msra.mxu0 %v1192
    %1433 = vmatprep.subr.bf16.mxu0 %v1196
    %1434 = vmatpush1.bf16.msra.mxu0 %v1195
    %1435 = vmatprep.subr.bf16.mxu0 %v1199
    %1436 = vmatpush1.bf16.msra.mxu0 %v1198
    %1437 = vmatprep.subr.bf16.mxu0 %v1202
    %1438 = vmatpush1.bf16.msra.mxu0 %v1201
    %1439 = vmatprep.subr.bf16.mxu0 %v1205
    %1440 = vmatpush1.bf16.msra.mxu0 %v1204
    %1441 = vmatprep.subr.bf16.mxu0 %v1208
    %1442 = vmatpush1.bf16.msra.mxu0 %v1207
    %1443 = vmatprep.subr.bf16.mxu0 %v1211
    %1444 = vmatpush1.bf16.msra.mxu0 %v1210
    %1445 = vmatprep.subr.bf16.mxu0 %v1214
    %1446 = vmatpush1.bf16.msra.mxu0 %v1213
    %1447 = vmatprep.subr.bf16.mxu0 %v1217
    %1448 = vmatpush1.bf16.msra.mxu0 %v1216
    %1449 = vmatprep.subr.bf16.mxu0 %v1220
    %1450 = vmatpush1.bf16.msra.mxu0 %v1219
    %1451 = vmatprep.subr.bf16.mxu0 %v1223
    %1452 = vmatpush1.bf16.msra.mxu0 %v1222
    %1453 = vmatprep.subr.bf16.mxu0 %v1226
    %1454 = vmatpush1.bf16.msra.mxu0 %v1225
    %1455 = vmatprep.subr.bf16.mxu0 %v1229
    %1456 = vmatpush1.bf16.msra.mxu0 %v1228
    %1457 = vmatprep.subr.bf16.mxu0 %v1232
    %1458 = vmatpush1.bf16.msra.mxu0 %v1231
    %1459 = vmatprep.subr.bf16.mxu0 %v1235
    %1460 = vmatpush1.bf16.msra.mxu0 %v1234
    %1461 = vmatprep.mubr.bf16.mxu0 %v292
    %1462 = vmatmul.mubr.bf16.gmra.mrb[0].mxu0 %v188
    %v1463 = vpop.f32.mrb[0].mxu0
    %v1464 = vadd.f32 %v777, %v1463
    %v1465 = vpop.f32.mrb[0].mxu0
    %v1466 = vadd.f32 %v781, %v1465
    %v1467 = vpop.f32.mrb[0].mxu0
    %v1468 = vadd.f32 %v777, %v1467
    %v1469 = vpop.f32.mrb[0].mxu0
    %v1470 = vadd.f32 %v781, %v1469
    %1471 = vmatprep.mubr.bf16.mxu0 %v293
    %1472 = vmatmul.mubr.bf16.gmra.mrb[0].mxu0 %v189
    %v1473 = vpop.f32.mrb[0].mxu0
    %v1474 = vadd.f32 %v777, %v1473
    %v1475 = vpop.f32.mrb[0].mxu0
    %v1476 = vadd.f32 %v781, %v1475
    %v1477 = vpop.f32.mrb[0].mxu0
    %v1478 = vadd.f32 %v777, %v1477
    %v1479 = vpop.f32.mrb[0].mxu0
    %v1480 = vadd.f32 %v781, %v1479
    %1481 = vmatprep.mubr.bf16.mxu0 %v294
    %1482 = vmatmul.mubr.bf16.gmra.mrb[0].mxu0 %v190
    %v1483 = vpop.f32.mrb[0].mxu0
    %v1484 = vadd.f32 %v777, %v1483
    %v1485 = vpop.f32.mrb[0].mxu0
    %v1486 = vadd.f32 %v781, %v1485
    %v1487 = vpop.f32.mrb[0].mxu0
    %v1488 = vadd.f32 %v777, %v1487
    %v1489 = vpop.f32.mrb[0].mxu0
    %v1490 = vadd.f32 %v781, %v1489
    %1491 = vmatprep.mubr.bf16.mxu0 %v295
    %1492 = vmatmul.mubr.bf16.gmra.mrb[0].mxu0 %v191
    %v1493 = vpop.f32.mrb[0].mxu0
    %v1494 = vadd.f32 %v777, %v1493
    %v1495 = vpop.f32.mrb[0].mxu0
    %v1496 = vadd.f32 %v781, %v1495
    %v1497 = vpop.f32.mrb[0].mxu0
    %v1498 = vadd.f32 %v777, %v1497
    %v1499 = vpop.f32.mrb[0].mxu0
    %v1500 = vadd.f32 %v781, %v1499
    %1501 = vmatprep.mubr.bf16.mxu0 %v296
    %1502 = vmatmul.mubr.bf16.gmra.mrb[0].mxu0 %v192
    %v1503 = vpop.f32.mrb[0].mxu0
    %v1504 = vadd.f32 %v777, %v1503
    %v1505 = vpop.f32.mrb[0].mxu0
    %v1506 = vadd.f32 %v781, %v1505
    %v1507 = vpop.f32.mrb[0].mxu0
    %v1508 = vadd.f32 %v777, %v1507
    %v1509 = vpop.f32.mrb[0].mxu0
    %v1510 = vadd.f32 %v781, %v1509
    %1511 = vmatprep.mubr.bf16.mxu0 %v297
    %1512 = vmatmul.mubr.bf16.gmra.mrb[0].mxu0 %v193
    %v1513 = vpop.f32.mrb[0].mxu0
    %v1514 = vadd.f32 %v777, %v1513
    %v1515 = vpop.f32.mrb[0].mxu0
    %v1516 = vadd.f32 %v781, %v1515
    %v1517 = vpop.f32.mrb[0].mxu0
    %v1518 = vadd.f32 %v777, %v1517
    %v1519 = vpop.f32.mrb[0].mxu0
    %v1520 = vadd.f32 %v781, %v1519
    %1521 = vmatprep.mubr.bf16.mxu0 %v298
    %1522 = vmatmul.mubr.bf16.gmra.mrb[0].mxu0 %v194
    %v1523 = vpop.f32.mrb[0].mxu0
    %v1524 = vadd.f32 %v777, %v1523
    %v1525 = vpop.f32.mrb[0].mxu0
    %v1526 = vadd.f32 %v781, %v1525
    %v1527 = vpop.f32.mrb[0].mxu0
    %v1528 = vadd.f32 %v777, %v1527
    %v1529 = vpop.f32.mrb[0].mxu0
    %v1530 = vadd.f32 %v781, %v1529
    %1531 = vmatprep.mubr.bf16.mxu0 %v299
    %1532 = vmatmul.mubr.bf16.gmra.mrb[0].mxu0 %v195
    %v1533 = vpop.f32.mrb[0].mxu0
    %v1534 = vadd.f32 %v777, %v1533
    %v1535 = vpop.f32.mrb[0].mxu0
    %v1536 = vadd.f32 %v781, %v1535
    %v1537 = vpop.f32.mrb[0].mxu0
    %v1538 = vadd.f32 %v777, %v1537
    %v1539 = vpop.f32.mrb[0].mxu0
    %v1540 = vadd.f32 %v781, %v1539
    %1541 = vdwg.mxu0
    %1542 = vmatprep.subr.bf16.mxu0 %v1238
    %1543 = vmatpush1.bf16.msra.mxu0 %v1237
    %1544 = vmatprep.subr.bf16.mxu0 %v1241
    %1545 = vmatpush1.bf16.msra.mxu0 %v1240
    %1546 = vmatprep.subr.bf16.mxu0 %v1244
    %1547 = vmatpush1.bf16.msra.mxu0 %v1243
    %1548 = vmatprep.subr.bf16.mxu0 %v1247
    %1549 = vmatpush1.bf16.msra.mxu0 %v1246
    %1550 = vmatprep.subr.bf16.mxu0 %v1250
    %1551 = vmatpush1.bf16.msra.mxu0 %v1249
    %1552 = vmatprep.subr.bf16.mxu0 %v1253
    %1553 = vmatpush1.bf16.msra.mxu0 %v1252
    %1554 = vmatprep.subr.bf16.mxu0 %v1256
    %1555 = vmatpush1.bf16.msra.mxu0 %v1255
    %1556 = vmatprep.subr.bf16.mxu0 %v1259
    %1557 = vmatpush1.bf16.msra.mxu0 %v1258
    %1558 = vmatprep.subr.bf16.mxu0 %v1262
    %1559 = vmatpush1.bf16.msra.mxu0 %v1261
    %1560 = vmatprep.subr.bf16.mxu0 %v1265
    %1561 = vmatpush1.bf16.msra.mxu0 %v1264
    %1562 = vmatprep.subr.bf16.mxu0 %v1268
    %1563 = vmatpush1.bf16.msra.mxu0 %v1267
    %1564 = vmatprep.subr.bf16.mxu0 %v1271
    %1565 = vmatpush1.bf16.msra.mxu0 %v1270
    %1566 = vmatprep.subr.bf16.mxu0 %v1274
    %1567 = vmatpush1.bf16.msra.mxu0 %v1273
    %1568 = vmatprep.subr.bf16.mxu0 %v1277
    %1569 = vmatpush1.bf16.msra.mxu0 %v1276
    %1570 = vmatprep.subr.bf16.mxu0 %v1280
    %1571 = vmatpush1.bf16.msra.mxu0 %v1279
    %1572 = vmatprep.subr.bf16.mxu0 %v1283
    %1573 = vmatpush1.bf16.msra.mxu0 %v1282
    %1574 = vmatprep.mubr.bf16.mxu0 %v500
    %1575 = vmatmul.mubr.bf16.gmra.mrb[0].mxu0 %v396
    %v1576 = vpop.f32.mrb[0].mxu0
    %v1577 = vadd.f32 %v1464, %v1576
    %v1578 = vpop.f32.mrb[0].mxu0
    %v1579 = vadd.f32 %v1466, %v1578
    %v1580 = vpop.f32.mrb[0].mxu0
    %v1581 = vadd.f32 %v1468, %v1580
    %v1582 = vpop.f32.mrb[0].mxu0
    %v1583 = vadd.f32 %v1470, %v1582
    %1584 = vmatprep.mubr.bf16.mxu0 %v501
    %1585 = vmatmul.mubr.bf16.gmra.mrb[0].mxu0 %v397
    %v1586 = vpop.f32.mrb[0].mxu0
    %v1587 = vadd.f32 %v1474, %v1586
    %v1588 = vpop.f32.mrb[0].mxu0
    %v1589 = vadd.f32 %v1476, %v1588
    %v1590 = vpop.f32.mrb[0].mxu0
    %v1591 = vadd.f32 %v1478, %v1590
    %v1592 = vpop.f32.mrb[0].mxu0
    %v1593 = vadd.f32 %v1480, %v1592
    %1594 = vmatprep.mubr.bf16.mxu0 %v502
    %1595 = vmatmul.mubr.bf16.gmra.mrb[0].mxu0 %v398
    %v1596 = vpop.f32.mrb[0].mxu0
    %v1597 = vadd.f32 %v1484, %v1596
    %v1598 = vpop.f32.mrb[0].mxu0
    %v1599 = vadd.f32 %v1486, %v1598
    %v1600 = vpop.f32.mrb[0].mxu0
    %v1601 = vadd.f32 %v1488, %v1600
    %v1602 = vpop.f32.mrb[0].mxu0
    %v1603 = vadd.f32 %v1490, %v1602
    %1604 = vmatprep.mubr.bf16.mxu0 %v503
    %1605 = vmatmul.mubr.bf16.gmra.mrb[0].mxu0 %v399
    %v1606 = vpop.f32.mrb[0].mxu0
    %v1607 = vadd.f32 %v1494, %v1606
    %v1608 = vpop.f32.mrb[0].mxu0
    %v1609 = vadd.f32 %v1496, %v1608
    %v1610 = vpop.f32.mrb[0].mxu0
    %v1611 = vadd.f32 %v1498, %v1610
    %v1612 = vpop.f32.mrb[0].mxu0
    %v1613 = vadd.f32 %v1500, %v1612
    %1614 = vmatprep.mubr.bf16.mxu0 %v504
    %1615 = vmatmul.mubr.bf16.gmra.mrb[0].mxu0 %v400
    %v1616 = vpop.f32.mrb[0].mxu0
    %v1617 = vadd.f32 %v1504, %v1616
    %v1618 = vpop.f32.mrb[0].mxu0
    %v1619 = vadd.f32 %v1506, %v1618
    %v1620 = vpop.f32.mrb[0].mxu0
    %v1621 = vadd.f32 %v1508, %v1620
    %v1622 = vpop.f32.mrb[0].mxu0
    %v1623 = vadd.f32 %v1510, %v1622
    %1624 = vmatprep.mubr.bf16.mxu0 %v505
    %1625 = vmatmul.mubr.bf16.gmra.mrb[0].mxu0 %v401
    %v1626 = vpop.f32.mrb[0].mxu0
    %v1627 = vadd.f32 %v1514, %v1626
    %v1628 = vpop.f32.mrb[0].mxu0
    %v1629 = vadd.f32 %v1516, %v1628
    %v1630 = vpop.f32.mrb[0].mxu0
    %v1631 = vadd.f32 %v1518, %v1630
    %v1632 = vpop.f32.mrb[0].mxu0
    %v1633 = vadd.f32 %v1520, %v1632
    %1634 = vmatprep.mubr.bf16.mxu0 %v506
    %1635 = vmatmul.mubr.bf16.gmra.mrb[0].mxu0 %v402
    %v1636 = vpop.f32.mrb[0].mxu0
    %v1637 = vadd.f32 %v1524, %v1636
    %v1638 = vpop.f32.mrb[0].mxu0
    %v1639 = vadd.f32 %v1526, %v1638
    %v1640 = vpop.f32.mrb[0].mxu0
    %v1641 = vadd.f32 %v1528, %v1640
    %v1642 = vpop.f32.mrb[0].mxu0
    %v1643 = vadd.f32 %v1530, %v1642
    %1644 = vmatprep.mubr.bf16.mxu0 %v507
    %1645 = vmatmul.mubr.bf16.gmra.mrb[0].mxu0 %v403
    %v1646 = vpop.f32.mrb[0].mxu0
    %v1647 = vadd.f32 %v1534, %v1646
    %v1648 = vpop.f32.mrb[0].mxu0
    %v1649 = vadd.f32 %v1536, %v1648
    %v1650 = vpop.f32.mrb[0].mxu0
    %v1651 = vadd.f32 %v1538, %v1650
    %v1652 = vpop.f32.mrb[0].mxu0
    %v1653 = vadd.f32 %v1540, %v1652
    %1654 = vdwg.mxu0
    %1655 = vmatprep.subr.bf16.mxu0 %v1286
    %1656 = vmatpush1.bf16.msra.mxu0 %v1285
    %1657 = vmatprep.subr.bf16.mxu0 %v1289
    %1658 = vmatpush1.bf16.msra.mxu0 %v1288
    %1659 = vmatprep.subr.bf16.mxu0 %v1292
    %1660 = vmatpush1.bf16.msra.mxu0 %v1291
    %1661 = vmatprep.subr.bf16.mxu0 %v1295
    %1662 = vmatpush1.bf16.msra.mxu0 %v1294
    %1663 = vmatprep.subr.bf16.mxu0 %v1298
    %1664 = vmatpush1.bf16.msra.mxu0 %v1297
    %1665 = vmatprep.subr.bf16.mxu0 %v1301
    %1666 = vmatpush1.bf16.msra.mxu0 %v1300
    %1667 = vmatprep.subr.bf16.mxu0 %v1304
    %1668 = vmatpush1.bf16.msra.mxu0 %v1303
    %1669 = vmatprep.subr.bf16.mxu0 %v1307
    %1670 = vmatpush1.bf16.msra.mxu0 %v1306
    %1671 = vmatprep.subr.bf16.mxu0 0
    %1672 = vmatpush1.bf16.msra.mxu0 0
    %1673 = vmatprep.subr.bf16.mxu0 0
    %1674 = vmatpush1.bf16.msra.mxu0 0
    %1675 = vmatprep.subr.bf16.mxu0 0
    %1676 = vmatpush1.bf16.msra.mxu0 0
    %1677 = vmatprep.subr.bf16.mxu0 0
    %1678 = vmatpush1.bf16.msra.mxu0 0
    %1679 = vmatprep.subr.bf16.mxu0 0
    %1680 = vmatpush1.bf16.msra.mxu0 0
    %1681 = vmatprep.subr.bf16.mxu0 0
    %1682 = vmatpush1.bf16.msra.mxu0 0
    %1683 = vmatprep.subr.bf16.mxu0 0
    %1684 = vmatpush1.bf16.msra.mxu0 0
    %1685 = vmatprep.subr.bf16.mxu0 0
    %1686 = vmatpush1.bf16.msra.mxu0 0
    %1687 = vmatprep.mubr.bf16.mxu0 0
    %1688 = vmatmul.mubr.bf16.gmra.mrb[0].mxu0 %v604
    %v1689 = vpop.f32.mrb[0].mxu0
    %v1690 = vadd.f32 %v1577, %v1689
    %v1691 = vpop.f32.mrb[0].mxu0
    %v1692 = vadd.f32 %v1579, %v1691
    %v1693 = vpop.f32.mrb[0].mxu0
    %v1694 = vadd.f32 %v1581, %v1693
    %v1695 = vpop.f32.mrb[0].mxu0
    %v1696 = vadd.f32 %v1583, %v1695
    %1697 = vmatprep.mubr.bf16.mxu0 0
    %1698 = vmatmul.mubr.bf16.gmra.mrb[0].mxu0 %v605
    %v1699 = vpop.f32.mrb[0].mxu0
    %v1700 = vadd.f32 %v1587, %v1699
    %v1701 = vpop.f32.mrb[0].mxu0
    %v1702 = vadd.f32 %v1589, %v1701
    %v1703 = vpop.f32.mrb[0].mxu0
    %v1704 = vadd.f32 %v1591, %v1703
    %v1705 = vpop.f32.mrb[0].mxu0
    %v1706 = vadd.f32 %v1593, %v1705
    %1707 = vmatprep.mubr.bf16.mxu0 0
    %1708 = vmatmul.mubr.bf16.gmra.mrb[0].mxu0 %v606
    %v1709 = vpop.f32.mrb[0].mxu0
    %v1710 = vadd.f32 %v1597, %v1709
    %v1711 = vpop.f32.mrb[0].mxu0
    %v1712 = vadd.f32 %v1599, %v1711
    %v1713 = vpop.f32.mrb[0].mxu0
    %v1714 = vadd.f32 %v1601, %v1713
    %v1715 = vpop.f32.mrb[0].mxu0
    %v1716 = vadd.f32 %v1603, %v1715
    %1717 = vmatprep.mubr.bf16.mxu0 0
    %1718 = vmatmul.mubr.bf16.gmra.mrb[0].mxu0 %v607
    %v1719 = vpop.f32.mrb[0].mxu0
    %v1720 = vadd.f32 %v1607, %v1719
    %v1721 = vpop.f32.mrb[0].mxu0
    %v1722 = vadd.f32 %v1609, %v1721
    %v1723 = vpop.f32.mrb[0].mxu0
    %v1724 = vadd.f32 %v1611, %v1723
    %v1725 = vpop.f32.mrb[0].mxu0
    %v1726 = vadd.f32 %v1613, %v1725
    %1727 = vmatprep.mubr.bf16.mxu0 0
    %1728 = vmatmul.mubr.bf16.gmra.mrb[0].mxu0 %v608
    %v1729 = vpop.f32.mrb[0].mxu0
    %v1730 = vadd.f32 %v1617, %v1729
    %v1731 = vpop.f32.mrb[0].mxu0
    %v1732 = vadd.f32 %v1619, %v1731
    %v1733 = vpop.f32.mrb[0].mxu0
    %v1734 = vadd.f32 %v1621, %v1733
    %v1735 = vpop.f32.mrb[0].mxu0
    %v1736 = vadd.f32 %v1623, %v1735
    %1737 = vmatprep.mubr.bf16.mxu0 0
    %1738 = vmatmul.mubr.bf16.gmra.mrb[0].mxu0 %v609
    %v1739 = vpop.f32.mrb[0].mxu0
    %v1740 = vadd.f32 %v1627, %v1739
    %v1741 = vpop.f32.mrb[0].mxu0
    %v1742 = vadd.f32 %v1629, %v1741
    %v1743 = vpop.f32.mrb[0].mxu0
    %v1744 = vadd.f32 %v1631, %v1743
    %v1745 = vpop.f32.mrb[0].mxu0
    %v1746 = vadd.f32 %v1633, %v1745
    %1747 = vmatprep.mubr.bf16.mxu0 0
    %1748 = vmatmul.mubr.bf16.gmra.mrb[0].mxu0 %v610
    %v1749 = vpop.f32.mrb[0].mxu0
    %v1750 = vadd.f32 %v1637, %v1749
    %v1751 = vpop.f32.mrb[0].mxu0
    %v1752 = vadd.f32 %v1639, %v1751
    %v1753 = vpop.f32.mrb[0].mxu0
    %v1754 = vadd.f32 %v1641, %v1753
    %v1755 = vpop.f32.mrb[0].mxu0
    %v1756 = vadd.f32 %v1643, %v1755
    %1757 = vmatprep.mubr.bf16.mxu0 0
    %1758 = vmatmul.mubr.bf16.gmra.mrb[0].mxu0 %v611
    %v1759 = vpop.f32.mrb[0].mxu0
    %v1760 = vadd.f32 %v1647, %v1759
    %v1761 = vpop.f32.mrb[0].mxu0
    %v1762 = vadd.f32 %v1649, %v1761
    %v1763 = vpop.f32.mrb[0].mxu0
    %v1764 = vadd.f32 %v1651, %v1763
    %v1765 = vpop.f32.mrb[0].mxu0
    %v1766 = vadd.f32 %v1653, %v1765
    %1767 = vdwg.mxu0
    %1768 = vmatprep.subr.bf16.mxu0 0
    %1769 = vmatpush1.bf16.msra.mxu0 %v1191
    %1770 = vmatprep.subr.bf16.mxu0 0
    %1771 = vmatpush1.bf16.msra.mxu0 %v1194
    %1772 = vmatprep.subr.bf16.mxu0 0
    %1773 = vmatpush1.bf16.msra.mxu0 %v1197
    %1774 = vmatprep.subr.bf16.mxu0 0
    %1775 = vmatpush1.bf16.msra.mxu0 %v1200
    %1776 = vmatprep.subr.bf16.mxu0 0
    %1777 = vmatpush1.bf16.msra.mxu0 %v1203
    %1778 = vmatprep.subr.bf16.mxu0 0
    %1779 = vmatpush1.bf16.msra.mxu0 %v1206
    %1780 = vmatprep.subr.bf16.mxu0 0
    %1781 = vmatpush1.bf16.msra.mxu0 %v1209
    %1782 = vmatprep.subr.bf16.mxu0 0
    %1783 = vmatpush1.bf16.msra.mxu0 %v1212
    %1784 = vmatprep.subr.bf16.mxu0 0
    %1785 = vmatpush1.bf16.msra.mxu0 %v1215
    %1786 = vmatprep.subr.bf16.mxu0 0
    %1787 = vmatpush1.bf16.msra.mxu0 %v1218
    %1788 = vmatprep.subr.bf16.mxu0 0
    %1789 = vmatpush1.bf16.msra.mxu0 %v1221
    %1790 = vmatprep.subr.bf16.mxu0 0
    %1791 = vmatpush1.bf16.msra.mxu0 %v1224
    %1792 = vmatprep.subr.bf16.mxu0 0
    %1793 = vmatpush1.bf16.msra.mxu0 %v1227
    %1794 = vmatprep.subr.bf16.mxu0 0
    %1795 = vmatpush1.bf16.msra.mxu0 %v1230
    %1796 = vmatprep.subr.bf16.mxu0 0
    %1797 = vmatpush1.bf16.msra.mxu0 %v1233
    %1798 = vmatprep.subr.bf16.mxu0 0
    %1799 = vmatpush1.bf16.msra.mxu0 %v1236
    %1800 = vmatprep.mubr.bf16.mxu0 %v292
    %1801 = vmatmul.mubr.bf16.gmra.mrb[0].mxu0 %v188
    %v1802 = vpop.f32.mrb[0].mxu0
    %v1803 = vadd.f32 %v785, %v1802
    %v1804 = vpop.f32.mrb[0].mxu0
    %v1805 = vpop.f32.mrb[0].mxu0
    %v1806 = vadd.f32 %v785, %v1805
    %v1807 = vpop.f32.mrb[0].mxu0
    %1808 = vmatprep.mubr.bf16.mxu0 %v293
    %1809 = vmatmul.mubr.bf16.gmra.mrb[0].mxu0 %v189
    %v1810 = vpop.f32.mrb[0].mxu0
    %v1811 = vadd.f32 %v785, %v1810
    %v1812 = vpop.f32.mrb[0].mxu0
    %v1813 = vpop.f32.mrb[0].mxu0
    %v1814 = vadd.f32 %v785, %v1813
    %v1815 = vpop.f32.mrb[0].mxu0
    %1816 = vmatprep.mubr.bf16.mxu0 %v294
    %1817 = vmatmul.mubr.bf16.gmra.mrb[0].mxu0 %v190
    %v1818 = vpop.f32.mrb[0].mxu0
    %v1819 = vadd.f32 %v785, %v1818
    %v1820 = vpop.f32.mrb[0].mxu0
    %v1821 = vpop.f32.mrb[0].mxu0
    %v1822 = vadd.f32 %v785, %v1821
    %v1823 = vpop.f32.mrb[0].mxu0
    %1824 = vmatprep.mubr.bf16.mxu0 %v295
    %1825 = vmatmul.mubr.bf16.gmra.mrb[0].mxu0 %v191
    %v1826 = vpop.f32.mrb[0].mxu0
    %v1827 = vadd.f32 %v785, %v1826
    %v1828 = vpop.f32.mrb[0].mxu0
    %v1829 = vpop.f32.mrb[0].mxu0
    %v1830 = vadd.f32 %v785, %v1829
    %v1831 = vpop.f32.mrb[0].mxu0
    %1832 = vmatprep.mubr.bf16.mxu0 %v296
    %1833 = vmatmul.mubr.bf16.gmra.mrb[0].mxu0 %v192
    %v1834 = vpop.f32.mrb[0].mxu0
    %v1835 = vadd.f32 %v785, %v1834
    %v1836 = vpop.f32.mrb[0].mxu0
    %v1837 = vpop.f32.mrb[0].mxu0
    %v1838 = vadd.f32 %v785, %v1837
    %v1839 = vpop.f32.mrb[0].mxu0
    %1840 = vmatprep.mubr.bf16.mxu0 %v297
    %1841 = vmatmul.mubr.bf16.gmra.mrb[0].mxu0 %v193
    %v1842 = vpop.f32.mrb[0].mxu0
    %v1843 = vadd.f32 %v785, %v1842
    %v1844 = vpop.f32.mrb[0].mxu0
    %v1845 = vpop.f32.mrb[0].mxu0
    %v1846 = vadd.f32 %v785, %v1845
    %v1847 = vpop.f32.mrb[0].mxu0
    %1848 = vmatprep.mubr.bf16.mxu0 %v298
    %1849 = vmatmul.mubr.bf16.gmra.mrb[0].mxu0 %v194
    %v1850 = vpop.f32.mrb[0].mxu0
    %v1851 = vadd.f32 %v785, %v1850
    %v1852 = vpop.f32.mrb[0].mxu0
    %v1853 = vpop.f32.mrb[0].mxu0
    %v1854 = vadd.f32 %v785, %v1853
    %v1855 = vpop.f32.mrb[0].mxu0
    %1856 = vmatprep.mubr.bf16.mxu0 %v299
    %1857 = vmatmul.mubr.bf16.gmra.mrb[0].mxu0 %v195
    %v1858 = vpop.f32.mrb[0].mxu0
    %v1859 = vadd.f32 %v785, %v1858
    %v1860 = vpop.f32.mrb[0].mxu0
    %v1861 = vpop.f32.mrb[0].mxu0
    %v1862 = vadd.f32 %v785, %v1861
    %v1863 = vpop.f32.mrb[0].mxu0
    %1864 = vdwg.mxu0
    %1865 = vmatprep.subr.bf16.mxu0 0
    %1866 = vmatpush1.bf16.msra.mxu0 %v1239
    %1867 = vmatprep.subr.bf16.mxu0 0
    %1868 = vmatpush1.bf16.msra.mxu0 %v1242
    %1869 = vmatprep.subr.bf16.mxu0 0
    %1870 = vmatpush1.bf16.msra.mxu0 %v1245
    %1871 = vmatprep.subr.bf16.mxu0 0
    %1872 = vmatpush1.bf16.msra.mxu0 %v1248
    %1873 = vmatprep.subr.bf16.mxu0 0
    %1874 = vmatpush1.bf16.msra.mxu0 %v1251
    %1875 = vmatprep.subr.bf16.mxu0 0
    %1876 = vmatpush1.bf16.msra.mxu0 %v1254
    %1877 = vmatprep.subr.bf16.mxu0 0
    %1878 = vmatpush1.bf16.msra.mxu0 %v1257
    %1879 = vmatprep.subr.bf16.mxu0 0
    %1880 = vmatpush1.bf16.msra.mxu0 %v1260
    %1881 = vmatprep.subr.bf16.mxu0 0
    %1882 = vmatpush1.bf16.msra.mxu0 %v1263
    %1883 = vmatprep.subr.bf16.mxu0 0
    %1884 = vmatpush1.bf16.msra.mxu0 %v1266
    %1885 = vmatprep.subr.bf16.mxu0 0
    %1886 = vmatpush1.bf16.msra.mxu0 %v1269
    %1887 = vmatprep.subr.bf16.mxu0 0
    %1888 = vmatpush1.bf16.msra.mxu0 %v1272
    %1889 = vmatprep.subr.bf16.mxu0 0
    %1890 = vmatpush1.bf16.msra.mxu0 %v1275
    %1891 = vmatprep.subr.bf16.mxu0 0
    %1892 = vmatpush1.bf16.msra.mxu0 %v1278
    %1893 = vmatprep.subr.bf16.mxu0 0
    %1894 = vmatpush1.bf16.msra.mxu0 %v1281
    %1895 = vmatprep.subr.bf16.mxu0 0
    %1896 = vmatpush1.bf16.msra.mxu0 %v1284
    %1897 = vmatprep.mubr.bf16.mxu0 %v500
    %1898 = vmatmul.mubr.bf16.gmra.mrb[0].mxu0 %v396
    %v1899 = vpop.f32.mrb[0].mxu0
    %v1900 = vadd.f32 %v1803, %v1899
    %v1901 = vpop.f32.mrb[0].mxu0
    %v1902 = vpop.f32.mrb[0].mxu0
    %v1903 = vadd.f32 %v1806, %v1902
    %v1904 = vpop.f32.mrb[0].mxu0
    %1905 = vmatprep.mubr.bf16.mxu0 %v501
    %1906 = vmatmul.mubr.bf16.gmra.mrb[0].mxu0 %v397
    %v1907 = vpop.f32.mrb[0].mxu0
    %v1908 = vadd.f32 %v1811, %v1907
    %v1909 = vpop.f32.mrb[0].mxu0
    %v1910 = vpop.f32.mrb[0].mxu0
    %v1911 = vadd.f32 %v1814, %v1910
    %v1912 = vpop.f32.mrb[0].mxu0
    %1913 = vmatprep.mubr.bf16.mxu0 %v502
    %1914 = vmatmul.mubr.bf16.gmra.mrb[0].mxu0 %v398
    %v1915 = vpop.f32.mrb[0].mxu0
    %v1916 = vadd.f32 %v1819, %v1915
    %v1917 = vpop.f32.mrb[0].mxu0
    %v1918 = vpop.f32.mrb[0].mxu0
    %v1919 = vadd.f32 %v1822, %v1918
    %v1920 = vpop.f32.mrb[0].mxu0
    %1921 = vmatprep.mubr.bf16.mxu0 %v503
    %1922 = vmatmul.mubr.bf16.gmra.mrb[0].mxu0 %v399
    %v1923 = vpop.f32.mrb[0].mxu0
    %v1924 = vadd.f32 %v1827, %v1923
    %v1925 = vpop.f32.mrb[0].mxu0
    %v1926 = vpop.f32.mrb[0].mxu0
    %v1927 = vadd.f32 %v1830, %v1926
    %v1928 = vpop.f32.mrb[0].mxu0
    %1929 = vmatprep.mubr.bf16.mxu0 %v504
    %1930 = vmatmul.mubr.bf16.gmra.mrb[0].mxu0 %v400
    %v1931 = vpop.f32.mrb[0].mxu0
    %v1932 = vadd.f32 %v1835, %v1931
    %v1933 = vpop.f32.mrb[0].mxu0
    %v1934 = vpop.f32.mrb[0].mxu0
    %v1935 = vadd.f32 %v1838, %v1934
    %v1936 = vpop.f32.mrb[0].mxu0
    %1937 = vmatprep.mubr.bf16.mxu0 %v505
    %1938 = vmatmul.mubr.bf16.gmra.mrb[0].mxu0 %v401
    %v1939 = vpop.f32.mrb[0].mxu0
    %v1940 = vadd.f32 %v1843, %v1939
    %v1941 = vpop.f32.mrb[0].mxu0
    %v1942 = vpop.f32.mrb[0].mxu0
    %v1943 = vadd.f32 %v1846, %v1942
    %v1944 = vpop.f32.mrb[0].mxu0
    %1945 = vmatprep.mubr.bf16.mxu0 %v506
    %1946 = vmatmul.mubr.bf16.gmra.mrb[0].mxu0 %v402
    %v1947 = vpop.f32.mrb[0].mxu0
    %v1948 = vadd.f32 %v1851, %v1947
    %v1949 = vpop.f32.mrb[0].mxu0
    %v1950 = vpop.f32.mrb[0].mxu0
    %v1951 = vadd.f32 %v1854, %v1950
    %v1952 = vpop.f32.mrb[0].mxu0
    %1953 = vmatprep.mubr.bf16.mxu0 %v507
    %1954 = vmatmul.mubr.bf16.gmra.mrb[0].mxu0 %v403
    %v1955 = vpop.f32.mrb[0].mxu0
    %v1956 = vadd.f32 %v1859, %v1955
    %v1957 = vpop.f32.mrb[0].mxu0
    %v1958 = vpop.f32.mrb[0].mxu0
    %v1959 = vadd.f32 %v1862, %v1958
    %v1960 = vpop.f32.mrb[0].mxu0
    %1961 = vdwg.mxu0
    %1962 = vmatprep.subr.bf16.mxu0 0
    %1963 = vmatpush1.bf16.msra.mxu0 %v1287
    %1964 = vmatprep.subr.bf16.mxu0 0
    %1965 = vmatpush1.bf16.msra.mxu0 %v1290
    %1966 = vmatprep.subr.bf16.mxu0 0
    %1967 = vmatpush1.bf16.msra.mxu0 %v1293
    %1968 = vmatprep.subr.bf16.mxu0 0
    %1969 = vmatpush1.bf16.msra.mxu0 %v1296
    %1970 = vmatprep.subr.bf16.mxu0 0
    %1971 = vmatpush1.bf16.msra.mxu0 %v1299
    %1972 = vmatprep.subr.bf16.mxu0 0
    %1973 = vmatpush1.bf16.msra.mxu0 %v1302
    %1974 = vmatprep.subr.bf16.mxu0 0
    %1975 = vmatpush1.bf16.msra.mxu0 %v1305
    %1976 = vmatprep.subr.bf16.mxu0 0
    %1977 = vmatpush1.bf16.msra.mxu0 %v1308
    %1978 = vmatprep.subr.bf16.mxu0 0
    %1979 = vmatpush1.bf16.msra.mxu0 0
    %1980 = vmatprep.subr.bf16.mxu0 0
    %1981 = vmatpush1.bf16.msra.mxu0 0
    %1982 = vmatprep.subr.bf16.mxu0 0
    %1983 = vmatpush1.bf16.msra.mxu0 0
    %1984 = vmatprep.subr.bf16.mxu0 0
    %1985 = vmatpush1.bf16.msra.mxu0 0
    %1986 = vmatprep.subr.bf16.mxu0 0
    %1987 = vmatpush1.bf16.msra.mxu0 0
    %1988 = vmatprep.subr.bf16.mxu0 0
    %1989 = vmatpush1.bf16.msra.mxu0 0
    %1990 = vmatprep.subr.bf16.mxu0 0
    %1991 = vmatpush1.bf16.msra.mxu0 0
    %1992 = vmatprep.subr.bf16.mxu0 0
    %1993 = vmatpush1.bf16.msra.mxu0 0
    %1994 = vmatprep.mubr.bf16.mxu0 0
    %1995 = vmatmul.mubr.bf16.gmra.mrb[0].mxu0 %v604
    %v1996 = vpop.f32.mrb[0].mxu0
    %v1997 = vadd.f32 %v1900, %v1996
    %v1998 = vpop.f32.mrb[0].mxu0
    %v1999 = vpop.f32.mrb[0].mxu0
    %v2000 = vadd.f32 %v1903, %v1999
    %v2001 = vpop.f32.mrb[0].mxu0
    %2002 = vmatprep.mubr.bf16.mxu0 0
    %2003 = vmatmul.mubr.bf16.gmra.mrb[0].mxu0 %v605
    %v2004 = vpop.f32.mrb[0].mxu0
    %v2005 = vadd.f32 %v1908, %v2004
    %v2006 = vpop.f32.mrb[0].mxu0
    %v2007 = vpop.f32.mrb[0].mxu0
    %v2008 = vadd.f32 %v1911, %v2007
    %v2009 = vpop.f32.mrb[0].mxu0
    %2010 = vmatprep.mubr.bf16.mxu0 0
    %2011 = vmatmul.mubr.bf16.gmra.mrb[0].mxu0 %v606
    %v2012 = vpop.f32.mrb[0].mxu0
    %v2013 = vadd.f32 %v1916, %v2012
    %v2014 = vpop.f32.mrb[0].mxu0
    %v2015 = vpop.f32.mrb[0].mxu0
    %v2016 = vadd.f32 %v1919, %v2015
    %v2017 = vpop.f32.mrb[0].mxu0
    %2018 = vmatprep.mubr.bf16.mxu0 0
    %2019 = vmatmul.mubr.bf16.gmra.mrb[0].mxu0 %v607
    %v2020 = vpop.f32.mrb[0].mxu0
    %v2021 = vadd.f32 %v1924, %v2020
    %v2022 = vpop.f32.mrb[0].mxu0
    %v2023 = vpop.f32.mrb[0].mxu0
    %v2024 = vadd.f32 %v1927, %v2023
    %v2025 = vpop.f32.mrb[0].mxu0
    %2026 = vmatprep.mubr.bf16.mxu0 0
    %2027 = vmatmul.mubr.bf16.gmra.mrb[0].mxu0 %v608
    %v2028 = vpop.f32.mrb[0].mxu0
    %v2029 = vadd.f32 %v1932, %v2028
    %v2030 = vpop.f32.mrb[0].mxu0
    %v2031 = vpop.f32.mrb[0].mxu0
    %v2032 = vadd.f32 %v1935, %v2031
    %v2033 = vpop.f32.mrb[0].mxu0
    %2034 = vmatprep.mubr.bf16.mxu0 0
    %2035 = vmatmul.mubr.bf16.gmra.mrb[0].mxu0 %v609
    %v2036 = vpop.f32.mrb[0].mxu0
    %v2037 = vadd.f32 %v1940, %v2036
    %v2038 = vpop.f32.mrb[0].mxu0
    %v2039 = vpop.f32.mrb[0].mxu0
    %v2040 = vadd.f32 %v1943, %v2039
    %v2041 = vpop.f32.mrb[0].mxu0
    %2042 = vmatprep.mubr.bf16.mxu0 0
    %2043 = vmatmul.mubr.bf16.gmra.mrb[0].mxu0 %v610
    %v2044 = vpop.f32.mrb[0].mxu0
    %v2045 = vadd.f32 %v1948, %v2044
    %v2046 = vpop.f32.mrb[0].mxu0
    %v2047 = vpop.f32.mrb[0].mxu0
    %v2048 = vadd.f32 %v1951, %v2047
    %v2049 = vpop.f32.mrb[0].mxu0
    %2050 = vmatprep.mubr.bf16.mxu0 0
    %2051 = vmatmul.mubr.bf16.gmra.mrb[0].mxu0 %v611
    %v2052 = vpop.f32.mrb[0].mxu0
    %v2053 = vadd.f32 %v1956, %v2052
    %v2054 = vpop.f32.mrb[0].mxu0
    %v2055 = vpop.f32.mrb[0].mxu0
    %v2056 = vadd.f32 %v1959, %v2055
    %v2057 = vpop.f32.mrb[0].mxu0
    %2058 = vdwg.mxu0
    %v2059 = vmax.f32 %v1690, 0.0
    %v2060 = vmax.f32 %v1692, 0.0
    %v2061 = vmax.f32 %v1997, 0.0
    %v2062 = vmax.f32 %v1694, 0.0
    %v2063 = vmax.f32 %v1696, 0.0
    %v2064 = vmax.f32 %v2000, 0.0
    %v2065 = vmax.f32 %v1700, 0.0
    %v2066 = vmax.f32 %v1702, 0.0
    %v2067 = vmax.f32 %v2005, 0.0
    %v2068 = vmax.f32 %v1704, 0.0
    %v2069 = vmax.f32 %v1706, 0.0
    %v2070 = vmax.f32 %v2008, 0.0
    %v2071 = vmax.f32 %v1710, 0.0
    %v2072 = vmax.f32 %v1712, 0.0
    %v2073 = vmax.f32 %v2013, 0.0
    %v2074 = vmax.f32 %v1714, 0.0
    %v2075 = vmax.f32 %v1716, 0.0
    %v2076 = vmax.f32 %v2016, 0.0
    %v2077 = vmax.f32 %v1720, 0.0
    %v2078 = vmax.f32 %v1722, 0.0
    %v2079 = vmax.f32 %v2021, 0.0
    %v2080 = vmax.f32 %v1724, 0.0
    %v2081 = vmax.f32 %v1726, 0.0
    %v2082 = vmax.f32 %v2024, 0.0
    %v2083 = vmax.f32 %v1730, 0.0
    %v2084 = vmax.f32 %v1732, 0.0
    %v2085 = vmax.f32 %v2029, 0.0
    %v2086 = vmax.f32 %v1734, 0.0
    %v2087 = vmax.f32 %v1736, 0.0
    %v2088 = vmax.f32 %v2032, 0.0
    %v2089 = vmax.f32 %v1740, 0.0
    %v2090 = vmax.f32 %v1742, 0.0
    %v2091 = vmax.f32 %v2037, 0.0
    %v2092 = vmax.f32 %v1744, 0.0
    %v2093 = vmax.f32 %v1746, 0.0
    %v2094 = vmax.f32 %v2040, 0.0
    %v2095 = vmax.f32 %v1750, 0.0
    %v2096 = vmax.f32 %v1752, 0.0
    %v2097 = vmax.f32 %v2045, 0.0
    %v2098 = vmax.f32 %v1754, 0.0
    %v2099 = vmax.f32 %v1756, 0.0
    %v2100 = vmax.f32 %v2048, 0.0
    %v2101 = vmax.f32 %v1760, 0.0
    %v2102 = vmax.f32 %v1762, 0.0
    %v2103 = vmax.f32 %v2053, 0.0
    %v2104 = vmax.f32 %v1764, 0.0
    %v2105 = vmax.f32 %v1766, 0.0
    %v2106 = vmax.f32 %v2056, 0.0
    %v2107 = vlaneseq
    %v2108 = vshrl.u32 %v2107, 7
    %v2109 = vadd.s32 %v2108, 8
    %vm2110 = vcmp.lt.s32.totalorder %v2108, 14
    %vm2111 = vcmp.lt.s32.totalorder %v2109, 14
    %v2112 = vsel %vm2110, %v2059, 0.0
    %v2113 = vsel %vm2111, %v2062, 0.0
    %v2114 = vsel %vm2110, %v2065, 0.0
    %v2115 = vsel %vm2111, %v2068, 0.0
    %v2116 = vsel %vm2110, %v2071, 0.0
    %v2117 = vsel %vm2111, %v2074, 0.0
    %v2118 = vsel %vm2110, %v2077, 0.0
    %v2119 = vsel %vm2111, %v2080, 0.0
    %v2120 = vsel %vm2110, %v2083, 0.0
    %v2121 = vsel %vm2111, %v2086, 0.0
    %v2122 = vsel %vm2110, %v2089, 0.0
    %v2123 = vsel %vm2111, %v2092, 0.0
    %v2124 = vsel %vm2110, %v2095, 0.0
    %v2125 = vsel %vm2111, %v2098, 0.0
    %v2126 = vsel %vm2110, %v2101, 0.0
    %v2127 = vsel %vm2111, %v2104, 0.0
    %v2128 = vmax.f32 %v2112, %v2113
    %v2129 = vrot.slane %v2128, 4
    %v2130 = vmax.f32 %v2128, %v2129
    %v2131 = vrot.slane %v2130, 2
    %v2132 = vmax.f32 %v2130, %v2131
    %v2133 = vrot.slane %v2132, 1
    %v2134 = vmax.f32 %v2132, %v2133
    %v2135 = vmax.f32 %v2114, %v2115
    %v2136 = vrot.slane %v2135, 4
    %v2137 = vmax.f32 %v2135, %v2136
    %v2138 = vrot.slane %v2137, 2
    %v2139 = vmax.f32 %v2137, %v2138
    %v2140 = vrot.slane %v2139, 1
    %v2141 = vmax.f32 %v2139, %v2140
    %v2142 = vmax.f32 %v2116, %v2117
    %v2143 = vrot.slane %v2142, 4
    %v2144 = vmax.f32 %v2142, %v2143
    %v2145 = vrot.slane %v2144, 2
    %v2146 = vmax.f32 %v2144, %v2145
    %v2147 = vrot.slane %v2146, 1
    %v2148 = vmax.f32 %v2146, %v2147
    %v2149 = vmax.f32 %v2118, %v2119
    %v2150 = vrot.slane %v2149, 4
    %v2151 = vmax.f32 %v2149, %v2150
    %v2152 = vrot.slane %v2151, 2
    %v2153 = vmax.f32 %v2151, %v2152
    %v2154 = vrot.slane %v2153, 1
    %v2155 = vmax.f32 %v2153, %v2154
    %v2156 = vmax.f32 %v2120, %v2121
    %v2157 = vrot.slane %v2156, 4
    %v2158 = vmax.f32 %v2156, %v2157
    %v2159 = vrot.slane %v2158, 2
    %v2160 = vmax.f32 %v2158, %v2159
    %v2161 = vrot.slane %v2160, 1
    %v2162 = vmax.f32 %v2160, %v2161
    %v2163 = vmax.f32 %v2122, %v2123
    %v2164 = vrot.slane %v2163, 4
    %v2165 = vmax.f32 %v2163, %v2164
    %v2166 = vrot.slane %v2165, 2
    %v2167 = vmax.f32 %v2165, %v2166
    %v2168 = vrot.slane %v2167, 1
    %v2169 = vmax.f32 %v2167, %v2168
    %v2170 = vmax.f32 %v2124, %v2125
    %v2171 = vrot.slane %v2170, 4
    %v2172 = vmax.f32 %v2170, %v2171
    %v2173 = vrot.slane %v2172, 2
    %v2174 = vmax.f32 %v2172, %v2173
    %v2175 = vrot.slane %v2174, 1
    %v2176 = vmax.f32 %v2174, %v2175
    %v2177 = vmax.f32 %v2126, %v2127
    %v2178 = vrot.slane %v2177, 4
    %v2179 = vmax.f32 %v2177, %v2178
    %v2180 = vrot.slane %v2179, 2
    %v2181 = vmax.f32 %v2179, %v2180
    %v2182 = vrot.slane %v2181, 1
    %v2183 = vmax.f32 %v2181, %v2182
    %vm2184 = vcmp.lt.s32.totalorder %v2108, 13
    %vm2185 = vcmp.lt.s32.totalorder %v2109, 13
    %v2186 = vsel %vm2184, %v2060, 0.0
    %v2187 = vsel %vm2185, %v2063, 0.0
    %v2188 = vsel %vm2184, %v2066, 0.0
    %v2189 = vsel %vm2185, %v2069, 0.0
    %v2190 = vsel %vm2184, %v2072, 0.0
    %v2191 = vsel %vm2185, %v2075, 0.0
    %v2192 = vsel %vm2184, %v2078, 0.0
    %v2193 = vsel %vm2185, %v2081, 0.0
    %v2194 = vsel %vm2184, %v2084, 0.0
    %v2195 = vsel %vm2185, %v2087, 0.0
    %v2196 = vsel %vm2184, %v2090, 0.0
    %v2197 = vsel %vm2185, %v2093, 0.0
    %v2198 = vsel %vm2184, %v2096, 0.0
    %v2199 = vsel %vm2185, %v2099, 0.0
    %v2200 = vsel %vm2184, %v2102, 0.0
    %v2201 = vsel %vm2185, %v2105, 0.0
    %v2202 = vmax.f32 %v2186, %v2187
    %v2203 = vrot.slane %v2202, 4
    %v2204 = vmax.f32 %v2202, %v2203
    %v2205 = vrot.slane %v2204, 2
    %v2206 = vmax.f32 %v2204, %v2205
    %v2207 = vrot.slane %v2206, 1
    %v2208 = vmax.f32 %v2206, %v2207
    %v2209 = vmax.f32 %v2188, %v2189
    %v2210 = vrot.slane %v2209, 4
    %v2211 = vmax.f32 %v2209, %v2210
    %v2212 = vrot.slane %v2211, 2
    %v2213 = vmax.f32 %v2211, %v2212
    %v2214 = vrot.slane %v2213, 1
    %v2215 = vmax.f32 %v2213, %v2214
    %v2216 = vmax.f32 %v2190, %v2191
    %v2217 = vrot.slane %v2216, 4
    %v2218 = vmax.f32 %v2216, %v2217
    %v2219 = vrot.slane %v2218, 2
    %v2220 = vmax.f32 %v2218, %v2219
    %v2221 = vrot.slane %v2220, 1
    %v2222 = vmax.f32 %v2220, %v2221
    %v2223 = vmax.f32 %v2192, %v2193
    %v2224 = vrot.slane %v2223, 4
    %v2225 = vmax.f32 %v2223, %v2224
    %v2226 = vrot.slane %v2225, 2
    %v2227 = vmax.f32 %v2225, %v2226
    %v2228 = vrot.slane %v2227, 1
    %v2229 = vmax.f32 %v2227, %v2228
    %v2230 = vmax.f32 %v2194, %v2195
    %v2231 = vrot.slane %v2230, 4
    %v2232 = vmax.f32 %v2230, %v2231
    %v2233 = vrot.slane %v2232, 2
    %v2234 = vmax.f32 %v2232, %v2233
    %v2235 = vrot.slane %v2234, 1
    %v2236 = vmax.f32 %v2234, %v2235
    %v2237 = vmax.f32 %v2196, %v2197
    %v2238 = vrot.slane %v2237, 4
    %v2239 = vmax.f32 %v2237, %v2238
    %v2240 = vrot.slane %v2239, 2
    %v2241 = vmax.f32 %v2239, %v2240
    %v2242 = vrot.slane %v2241, 1
    %v2243 = vmax.f32 %v2241, %v2242
    %v2244 = vmax.f32 %v2198, %v2199
    %v2245 = vrot.slane %v2244, 4
    %v2246 = vmax.f32 %v2244, %v2245
    %v2247 = vrot.slane %v2246, 2
    %v2248 = vmax.f32 %v2246, %v2247
    %v2249 = vrot.slane %v2248, 1
    %v2250 = vmax.f32 %v2248, %v2249
    %v2251 = vmax.f32 %v2200, %v2201
    %v2252 = vrot.slane %v2251, 4
    %v2253 = vmax.f32 %v2251, %v2252
    %v2254 = vrot.slane %v2253, 2
    %v2255 = vmax.f32 %v2253, %v2254
    %v2256 = vrot.slane %v2255, 1
    %v2257 = vmax.f32 %v2255, %v2256
    %vm2258 = vcmp.lt.s32.totalorder %v2108, 12
    %vm2259 = vcmp.lt.s32.totalorder %v2109, 12
    %v2260 = vsel %vm2258, %v2061, 0.0
    %v2261 = vsel %vm2259, %v2064, 0.0
    %v2262 = vsel %vm2258, %v2067, 0.0
    %v2263 = vsel %vm2259, %v2070, 0.0
    %v2264 = vsel %vm2258, %v2073, 0.0
    %v2265 = vsel %vm2259, %v2076, 0.0
    %v2266 = vsel %vm2258, %v2079, 0.0
    %v2267 = vsel %vm2259, %v2082, 0.0
    %v2268 = vsel %vm2258, %v2085, 0.0
    %v2269 = vsel %vm2259, %v2088, 0.0
    %v2270 = vsel %vm2258, %v2091, 0.0
    %v2271 = vsel %vm2259, %v2094, 0.0
    %v2272 = vsel %vm2258, %v2097, 0.0
    %v2273 = vsel %vm2259, %v2100, 0.0
    %v2274 = vsel %vm2258, %v2103, 0.0
    %v2275 = vsel %vm2259, %v2106, 0.0
    %v2276 = vmax.f32 %v2260, %v2261
    %v2277 = vrot.slane %v2276, 4
    %v2278 = vmax.f32 %v2276, %v2277
    %v2279 = vrot.slane %v2278, 2
    %v2280 = vmax.f32 %v2278, %v2279
    %v2281 = vrot.slane %v2280, 1
    %v2282 = vmax.f32 %v2280, %v2281
    %v2283 = vmax.f32 %v2262, %v2263
    %v2284 = vrot.slane %v2283, 4
    %v2285 = vmax.f32 %v2283, %v2284
    %v2286 = vrot.slane %v2285, 2
    %v2287 = vmax.f32 %v2285, %v2286
    %v2288 = vrot.slane %v2287, 1
    %v2289 = vmax.f32 %v2287, %v2288
    %v2290 = vmax.f32 %v2264, %v2265
    %v2291 = vrot.slane %v2290, 4
    %v2292 = vmax.f32 %v2290, %v2291
    %v2293 = vrot.slane %v2292, 2
    %v2294 = vmax.f32 %v2292, %v2293
    %v2295 = vrot.slane %v2294, 1
    %v2296 = vmax.f32 %v2294, %v2295
    %v2297 = vmax.f32 %v2266, %v2267
    %v2298 = vrot.slane %v2297, 4
    %v2299 = vmax.f32 %v2297, %v2298
    %v2300 = vrot.slane %v2299, 2
    %v2301 = vmax.f32 %v2299, %v2300
    %v2302 = vrot.slane %v2301, 1
    %v2303 = vmax.f32 %v2301, %v2302
    %v2304 = vmax.f32 %v2268, %v2269
    %v2305 = vrot.slane %v2304, 4
    %v2306 = vmax.f32 %v2304, %v2305
    %v2307 = vrot.slane %v2306, 2
    %v2308 = vmax.f32 %v2306, %v2307
    %v2309 = vrot.slane %v2308, 1
    %v2310 = vmax.f32 %v2308, %v2309
    %v2311 = vmax.f32 %v2270, %v2271
    %v2312 = vrot.slane %v2311, 4
    %v2313 = vmax.f32 %v2311, %v2312
    %v2314 = vrot.slane %v2313, 2
    %v2315 = vmax.f32 %v2313, %v2314
    %v2316 = vrot.slane %v2315, 1
    %v2317 = vmax.f32 %v2315, %v2316
    %v2318 = vmax.f32 %v2272, %v2273
    %v2319 = vrot.slane %v2318, 4
    %v2320 = vmax.f32 %v2318, %v2319
    %v2321 = vrot.slane %v2320, 2
    %v2322 = vmax.f32 %v2320, %v2321
    %v2323 = vrot.slane %v2322, 1
    %v2324 = vmax.f32 %v2322, %v2323
    %v2325 = vmax.f32 %v2274, %v2275
    %v2326 = vrot.slane %v2325, 4
    %v2327 = vmax.f32 %v2325, %v2326
    %v2328 = vrot.slane %v2327, 2
    %v2329 = vmax.f32 %v2327, %v2328
    %v2330 = vrot.slane %v2329, 1
    %v2331 = vmax.f32 %v2329, %v2330
    %vm2340 = vcmask 1041409
    %v2341 = vsel %vm2340, %v2141, %v2134
    %vm2342 = vcmask 1042434
    %v2343 = vsel %vm2342, %v2148, %v2341
    %vm2344 = vcmask 1043459
    %v2345 = vsel %vm2344, %v2155, %v2343
    %vm2346 = vcmask 1044484
    %v2347 = vsel %vm2346, %v2162, %v2345
    %vm2348 = vcmask 1045509
    %v2349 = vsel %vm2348, %v2169, %v2347
    %vm2350 = vcmask 1046534
    %v2351 = vsel %vm2350, %v2176, %v2349
    %vm2352 = vcmask 1047559
    %v2353 = vsel %vm2352, %v2183, %v2351
    %v2363 = vsel %vm2340, %v2215, %v2208
    %v2364 = vsel %vm2342, %v2222, %v2363
    %v2365 = vsel %vm2344, %v2229, %v2364
    %v2366 = vsel %vm2346, %v2236, %v2365
    %v2367 = vsel %vm2348, %v2243, %v2366
    %v2368 = vsel %vm2350, %v2250, %v2367
    %v2369 = vsel %vm2352, %v2257, %v2368
    %v2379 = vsel %vm2340, %v2289, %v2282
    %v2380 = vsel %vm2342, %v2296, %v2379
    %v2381 = vsel %vm2344, %v2303, %v2380
    %v2382 = vsel %vm2346, %v2310, %v2381
    %v2383 = vsel %vm2348, %v2317, %v2382
    %v2384 = vsel %vm2350, %v2324, %v2383
    %v2385 = vsel %vm2352, %v2331, %v2384
    %v2387 = vpack.c.bf16 %v2353, %v2353
    %v2388 = vpack.c.bf16 %v2369, %v2369
    %v2389 = vpack.c.bf16 %v2385, %v2385
    %v2390 = vld [vmem:[#allocation4] sm:$0xff]
    %v2391 = vld [vmem:[#allocation4 + $0x8] sm:$0xff]
    %v2392 = vld [vmem:[#allocation4 + $0x10] sm:$0xff]
    %v2393 = vld [vmem:[#allocation4 + $0x18] sm:$0xff]
    %v2394 = vld [vmem:[#allocation4 + $0x20] sm:$0xff]
    %v2395 = vld [vmem:[#allocation4 + $0x28] sm:$0xff]
    %v2396 = vld [vmem:[#allocation4 + $0x30] sm:$0xff]
    %v2397 = vld [vmem:[#allocation4 + $0x38] sm:$0xff]
    %v2398 = vld [vmem:[#allocation4 + $0x40] sm:$0xff]
    %v2399 = vld [vmem:[#allocation4 + $0x48] sm:$0xff]
    %v2400 = vld [vmem:[#allocation4 + $0x50] sm:$0xff]
    %v2401 = vld [vmem:[#allocation4 + $0x58] sm:$0xff]
    %v2402 = vld [vmem:[#allocation4 + $0x60] sm:$0xff]
    %v2403 = vld [vmem:[#allocation4 + $0x68] sm:$0xff]
    %v2404 = vld [vmem:[#allocation4 + $0x70] sm:$0xff]
    %v2405 = vld [vmem:[#allocation4 + $0x78] sm:$0xff]
    %v2406 = vld [vmem:[#allocation4 + $0x80] sm:$0xff]
    %v2407 = vld [vmem:[#allocation4 + $0x88] sm:$0xff]
    %v2408 = vld [vmem:[#allocation4 + $0x90] sm:$0xff]
    %v2409 = vld [vmem:[#allocation4 + $0x98] sm:$0xff]
    %v2410 = vld [vmem:[#allocation4 + $0xa0] sm:$0xff]
    %v2411 = vld [vmem:[#allocation4 + $0xa8] sm:$0xff]
    %v2412 = vld [vmem:[#allocation4 + $0xb0] sm:$0xff]
    %v2413 = vld [vmem:[#allocation4 + $0xb8] sm:$0xff]
    %v2414 = vld [vmem:[#allocation4 + $0xc0] sm:$0xff]
    %v2415 = vld [vmem:[#allocation4 + $0xc8] sm:$0xff]
    %v2416 = vld [vmem:[#allocation4 + $0xd0] sm:$0xff]
    %v2417 = vld [vmem:[#allocation4 + $0xd8] sm:$0xff]
    %v2418 = vld [vmem:[#allocation4 + $0xe0] sm:$0xff]
    %v2419 = vld [vmem:[#allocation4 + $0xe8] sm:$0xff]
    %v2420 = vld [vmem:[#allocation4 + $0xf0] sm:$0xff]
    %v2421 = vld [vmem:[#allocation4 + $0xf8] sm:$0xff]
    %v2422 = vld [vmem:[#allocation4 + $0x100] sm:$0xff]
    %v2423 = vld [vmem:[#allocation4 + $0x108] sm:$0xff]
    %v2424 = vld [vmem:[#allocation4 + $0x110] sm:$0xff]
    %v2425 = vld [vmem:[#allocation4 + $0x118] sm:$0xff]
    %v2426 = vld [vmem:[#allocation4 + $0x120] sm:$0xff]
    %v2427 = vld [vmem:[#allocation4 + $0x128] sm:$0xff]
    %v2428 = vld [vmem:[#allocation4 + $0x130] sm:$0xff]
    %v2429 = vld [vmem:[#allocation4 + $0x138] sm:$0xff]
    %v2430 = vld [vmem:[#allocation4 + $0x140] sm:$0xff]
    %v2431 = vld [vmem:[#allocation4 + $0x148] sm:$0xff]
    %v2432 = vld [vmem:[#allocation4 + $0x150] sm:$0xff]
    %v2433 = vld [vmem:[#allocation4 + $0x158] sm:$0xff]
    %v2434 = vld [vmem:[#allocation4 + $0x160] sm:$0xff]
    %v2435 = vld [vmem:[#allocation4 + $0x168] sm:$0xff]
    %v2436 = vld [vmem:[#allocation4 + $0x170] sm:$0xff]
    %v2437 = vld [vmem:[#allocation4 + $0x178] sm:$0xff]
    %v2438 = vld [vmem:[%s4] sm:$0x3]
    %v2440 = vlaneseq
    %v2441 = vshrl.u32 %v2440, 7
    %v2442 = vsub.s32 0, %v2441
    %v2443 = vrot.slane %v2438, %v2442
    %v2444 = vlaneseq
    %v2445 = vshrl.u32 %v2444, 7
    %v2446 = vsub.s32 1, %v2445
    %v2447 = vrot.slane %v2438, %v2446
    %v2498 = vunpack.c.l.b16 %v2390
    %v2499 = vunpack.c.h.b16 %v2390
    %v2500 = vunpack.c.l.b16 %v2391
    %v2501 = vunpack.c.h.b16 %v2391
    %v2502 = vunpack.c.l.b16 %v2392
    %v2503 = vunpack.c.h.b16 %v2392
    %v2504 = vunpack.c.l.b16 %v2393
    %v2505 = vunpack.c.h.b16 %v2393
    %v2506 = vunpack.c.l.b16 %v2394
    %v2507 = vunpack.c.h.b16 %v2394
    %v2508 = vunpack.c.l.b16 %v2395
    %v2509 = vunpack.c.h.b16 %v2395
    %v2510 = vunpack.c.l.b16 %v2396
    %v2511 = vunpack.c.h.b16 %v2396
    %v2512 = vunpack.c.l.b16 %v2397
    %v2513 = vunpack.c.h.b16 %v2397
    %v2514 = vunpack.c.l.b16 %v2398
    %v2515 = vunpack.c.h.b16 %v2398
    %v2516 = vunpack.c.l.b16 %v2399
    %v2517 = vunpack.c.h.b16 %v2399
    %v2518 = vunpack.c.l.b16 %v2400
    %v2519 = vunpack.c.h.b16 %v2400
    %v2520 = vunpack.c.l.b16 %v2401
    %v2521 = vunpack.c.h.b16 %v2401
    %v2522 = vunpack.c.l.b16 %v2402
    %v2523 = vunpack.c.h.b16 %v2402
    %v2524 = vunpack.c.l.b16 %v2403
    %v2525 = vunpack.c.h.b16 %v2403
    %v2526 = vunpack.c.l.b16 %v2404
    %v2527 = vunpack.c.h.b16 %v2404
    %v2528 = vunpack.c.l.b16 %v2405
    %v2529 = vunpack.c.h.b16 %v2405
    %v2530 = vunpack.c.l.b16 %v2406
    %v2531 = vunpack.c.h.b16 %v2406
    %v2532 = vunpack.c.l.b16 %v2407
    %v2533 = vunpack.c.h.b16 %v2407
    %v2534 = vunpack.c.l.b16 %v2408
    %v2535 = vunpack.c.h.b16 %v2408
    %v2536 = vunpack.c.l.b16 %v2409
    %v2537 = vunpack.c.h.b16 %v2409
    %v2538 = vunpack.c.l.b16 %v2410
    %v2539 = vunpack.c.h.b16 %v2410
    %v2540 = vunpack.c.l.b16 %v2411
    %v2541 = vunpack.c.h.b16 %v2411
    %v2542 = vunpack.c.l.b16 %v2412
    %v2543 = vunpack.c.h.b16 %v2412
    %v2544 = vunpack.c.l.b16 %v2413
    %v2545 = vunpack.c.h.b16 %v2413
    %v2546 = vunpack.c.l.b16 %v2414
    %v2547 = vunpack.c.h.b16 %v2414
    %v2548 = vunpack.c.l.b16 %v2415
    %v2549 = vunpack.c.h.b16 %v2415
    %v2550 = vunpack.c.l.b16 %v2416
    %v2551 = vunpack.c.h.b16 %v2416
    %v2552 = vunpack.c.l.b16 %v2417
    %v2553 = vunpack.c.h.b16 %v2417
    %v2554 = vunpack.c.l.b16 %v2418
    %v2555 = vunpack.c.h.b16 %v2418
    %v2556 = vunpack.c.l.b16 %v2419
    %v2557 = vunpack.c.h.b16 %v2419
    %v2558 = vunpack.c.l.b16 %v2420
    %v2559 = vunpack.c.h.b16 %v2420
    %v2560 = vunpack.c.l.b16 %v2421
    %v2561 = vunpack.c.h.b16 %v2421
    %v2562 = vunpack.c.l.b16 %v2422
    %v2563 = vunpack.c.h.b16 %v2422
    %v2564 = vunpack.c.l.b16 %v2423
    %v2565 = vunpack.c.h.b16 %v2423
    %v2566 = vunpack.c.l.b16 %v2424
    %v2567 = vunpack.c.h.b16 %v2424
    %v2568 = vunpack.c.l.b16 %v2425
    %v2569 = vunpack.c.h.b16 %v2425
    %v2570 = vunpack.c.l.b16 %v2426
    %v2571 = vunpack.c.h.b16 %v2426
    %v2572 = vunpack.c.l.b16 %v2427
    %v2573 = vunpack.c.h.b16 %v2427
    %v2574 = vunpack.c.l.b16 %v2428
    %v2575 = vunpack.c.h.b16 %v2428
    %v2576 = vunpack.c.l.b16 %v2429
    %v2577 = vunpack.c.h.b16 %v2429
    %v2578 = vunpack.c.l.b16 %v2430
    %v2579 = vunpack.c.h.b16 %v2430
    %v2580 = vunpack.c.l.b16 %v2431
    %v2581 = vunpack.c.h.b16 %v2431
    %v2582 = vunpack.c.l.b16 %v2432
    %v2583 = vunpack.c.h.b16 %v2432
    %v2584 = vunpack.c.l.b16 %v2433
    %v2585 = vunpack.c.h.b16 %v2433
    %v2586 = vunpack.c.l.b16 %v2434
    %v2587 = vunpack.c.h.b16 %v2434
    %v2588 = vunpack.c.l.b16 %v2435
    %v2589 = vunpack.c.h.b16 %v2435
    %v2590 = vunpack.c.l.b16 %v2436
    %v2591 = vunpack.c.h.b16 %v2436
    %v2592 = vunpack.c.l.b16 %v2437
    %v2593 = vunpack.c.h.b16 %v2437
    %v2594 = vpack.c.b16 %v2500, %v2498
    %v2595 = vpack.c.b16 %v2501, %v2499
    %v2596 = vpack.c.b16 %v2504, %v2502
    %v2597 = vpack.c.b16 %v2505, %v2503
    %v2598 = vpack.c.b16 %v2508, %v2506
    %v2599 = vpack.c.b16 %v2509, %v2507
    %v2600 = vpack.c.b16 %v2512, %v2510
    %v2601 = vpack.c.b16 %v2513, %v2511
    %v2602 = vpack.c.b16 %v2516, %v2514
    %v2603 = vpack.c.b16 %v2517, %v2515
    %v2604 = vpack.c.b16 %v2520, %v2518
    %v2605 = vpack.c.b16 %v2521, %v2519
    %v2606 = vpack.c.b16 %v2524, %v2522
    %v2607 = vpack.c.b16 %v2525, %v2523
    %v2608 = vpack.c.b16 %v2528, %v2526
    %v2609 = vpack.c.b16 %v2529, %v2527
    %v2610 = vpack.c.b16 %v2532, %v2530
    %v2611 = vpack.c.b16 %v2533, %v2531
    %v2612 = vpack.c.b16 %v2536, %v2534
    %v2613 = vpack.c.b16 %v2537, %v2535
    %v2614 = vpack.c.b16 %v2540, %v2538
    %v2615 = vpack.c.b16 %v2541, %v2539
    %v2616 = vpack.c.b16 %v2544, %v2542
    %v2617 = vpack.c.b16 %v2545, %v2543
    %v2618 = vpack.c.b16 %v2548, %v2546
    %v2619 = vpack.c.b16 %v2549, %v2547
    %v2620 = vpack.c.b16 %v2552, %v2550
    %v2621 = vpack.c.b16 %v2553, %v2551
    %v2622 = vpack.c.b16 %v2556, %v2554
    %v2623 = vpack.c.b16 %v2557, %v2555
    %v2624 = vpack.c.b16 %v2560, %v2558
    %v2625 = vpack.c.b16 %v2561, %v2559
    %v2626 = vpack.c.b16 %v2564, %v2562
    %v2627 = vpack.c.b16 %v2565, %v2563
    %v2628 = vpack.c.b16 %v2568, %v2566
    %v2629 = vpack.c.b16 %v2569, %v2567
    %v2630 = vpack.c.b16 %v2572, %v2570
    %v2631 = vpack.c.b16 %v2573, %v2571
    %v2632 = vpack.c.b16 %v2576, %v2574
    %v2633 = vpack.c.b16 %v2577, %v2575
    %v2634 = vpack.c.b16 %v2580, %v2578
    %v2635 = vpack.c.b16 %v2581, %v2579
    %v2636 = vpack.c.b16 %v2584, %v2582
    %v2637 = vpack.c.b16 %v2585, %v2583
    %v2638 = vpack.c.b16 %v2588, %v2586
    %v2639 = vpack.c.b16 %v2589, %v2587
    %v2640 = vpack.c.b16 %v2592, %v2590
    %v2641 = vpack.c.b16 %v2593, %v2591
    %2690 = vmatprep.subr.bf16.mxu0 %v2595
    %2691 = vmatpush1.bf16.msra.mxu0 %v2594
    %2692 = vmatprep.subr.bf16.mxu0 %v2597
    %2693 = vmatpush1.bf16.msra.mxu0 %v2596
    %2694 = vmatprep.subr.bf16.mxu0 %v2599
    %2695 = vmatpush1.bf16.msra.mxu0 %v2598
    %2696 = vmatprep.subr.bf16.mxu0 %v2601
    %2697 = vmatpush1.bf16.msra.mxu0 %v2600
    %2698 = vmatprep.subr.bf16.mxu0 %v2603
    %2699 = vmatpush1.bf16.msra.mxu0 %v2602
    %2700 = vmatprep.subr.bf16.mxu0 %v2605
    %2701 = vmatpush1.bf16.msra.mxu0 %v2604
    %2702 = vmatprep.subr.bf16.mxu0 %v2607
    %2703 = vmatpush1.bf16.msra.mxu0 %v2606
    %2704 = vmatprep.subr.bf16.mxu0 %v2609
    %2705 = vmatpush1.bf16.msra.mxu0 %v2608
    %2706 = vmatprep.subr.bf16.mxu0 %v2611
    %2707 = vmatpush1.bf16.msra.mxu0 %v2610
    %2708 = vmatprep.subr.bf16.mxu0 %v2613
    %2709 = vmatpush1.bf16.msra.mxu0 %v2612
    %2710 = vmatprep.subr.bf16.mxu0 %v2615
    %2711 = vmatpush1.bf16.msra.mxu0 %v2614
    %2712 = vmatprep.subr.bf16.mxu0 %v2617
    %2713 = vmatpush1.bf16.msra.mxu0 %v2616
    %2714 = vmatprep.subr.bf16.mxu0 %v2619
    %2715 = vmatpush1.bf16.msra.mxu0 %v2618
    %2716 = vmatprep.subr.bf16.mxu0 %v2621
    %2717 = vmatpush1.bf16.msra.mxu0 %v2620
    %2718 = vmatprep.subr.bf16.mxu0 %v2623
    %2719 = vmatpush1.bf16.msra.mxu0 %v2622
    %2720 = vmatprep.subr.bf16.mxu0 %v2625
    %2721 = vmatpush1.bf16.msra.mxu0 %v2624
    %2722 = vmatprep.mubr.bf16.mxu0 %v2388
    %2723 = vmatmul.mubr.bf16.gmra.mrb[0].mxu0 %v2387
    %v2724 = vpop.f32.mrb[0].mxu0
    %v2725 = vadd.f32 %v2443, %v2724
    %v2726 = vpop.f32.mrb[0].mxu0
    %v2727 = vadd.f32 %v2447, %v2726
    %v2728 = vpop.f32.mrb[0].mxu0
    %v2729 = vpop.f32.mrb[0].mxu0
    %2730 = vdwg.mxu0
    %2731 = vmatprep.subr.bf16.mxu0 %v2627
    %2732 = vmatpush1.bf16.msra.mxu0 %v2626
    %2733 = vmatprep.subr.bf16.mxu0 %v2629
    %2734 = vmatpush1.bf16.msra.mxu0 %v2628
    %2735 = vmatprep.subr.bf16.mxu0 %v2631
    %2736 = vmatpush1.bf16.msra.mxu0 %v2630
    %2737 = vmatprep.subr.bf16.mxu0 %v2633
    %2738 = vmatpush1.bf16.msra.mxu0 %v2632
    %2739 = vmatprep.subr.bf16.mxu0 %v2635
    %2740 = vmatpush1.bf16.msra.mxu0 %v2634
    %2741 = vmatprep.subr.bf16.mxu0 %v2637
    %2742 = vmatpush1.bf16.msra.mxu0 %v2636
    %2743 = vmatprep.subr.bf16.mxu0 %v2639
    %2744 = vmatpush1.bf16.msra.mxu0 %v2638
    %2745 = vmatprep.subr.bf16.mxu0 %v2641
    %2746 = vmatpush1.bf16.msra.mxu0 %v2640
    %2747 = vmatprep.subr.bf16.mxu0 0
    %2748 = vmatpush1.bf16.msra.mxu0 0
    %2749 = vmatprep.subr.bf16.mxu0 0
    %2750 = vmatpush1.bf16.msra.mxu0 0
    %2751 = vmatprep.subr.bf16.mxu0 0
    %2752 = vmatpush1.bf16.msra.mxu0 0
    %2753 = vmatprep.subr.bf16.mxu0 0
    %2754 = vmatpush1.bf16.msra.mxu0 0
    %2755 = vmatprep.subr.bf16.mxu0 0
    %2756 = vmatpush1.bf16.msra.mxu0 0
    %2757 = vmatprep.subr.bf16.mxu0 0
    %2758 = vmatpush1.bf16.msra.mxu0 0
    %2759 = vmatprep.subr.bf16.mxu0 0
    %2760 = vmatpush1.bf16.msra.mxu0 0
    %2761 = vmatprep.subr.bf16.mxu0 0
    %2762 = vmatpush1.bf16.msra.mxu0 0
    %2763 = vmatprep.mubr.bf16.mxu0 0
    %2764 = vmatmul.mubr.bf16.gmra.mrb[0].mxu0 %v2389
    %v2765 = vpop.f32.mrb[0].mxu0
    %v2766 = vadd.f32 %v2725, %v2765
    %v2767 = vpop.f32.mrb[0].mxu0
    %v2768 = vadd.f32 %v2727, %v2767
    %v2769 = vpop.f32.mrb[0].mxu0
    %v2770 = vpop.f32.mrb[0].mxu0
    %2771 = vdwg.mxu0
    %v2772 = vmax.f32 %v2766, 0.0
    %v2773 = vmax.f32 %v2768, 0.0
    %v2774 = vpack.c.bf16 %v2772, %v2772
    %v2775 = vpack.c.bf16 %v2773, %v2773
    %v2776 = vld [vmem:[%s5] sm:$0xff]
    %v2777 = vld [vmem:[%s5 + $0x8] sm:$0xff]
    %v2778 = vld [vmem:[%s5 + $0x10] sm:$0xff]
    %v2779 = vld [vmem:[%s5 + $0x18] sm:$0xff]
    %v2780 = vld [vmem:[%s5 + $0x20] sm:$0xff]
    %v2781 = vld [vmem:[%s5 + $0x28] sm:$0xff]
    %v2782 = vld [vmem:[%s5 + $0x30] sm:$0xff]
    %v2783 = vld [vmem:[%s5 + $0x38] sm:$0xff]
    %v2784 = vld [vmem:[%s5 + $0x40] sm:$0xff]
    %v2785 = vld [vmem:[%s5 + $0x48] sm:$0xff]
    %v2786 = vld [vmem:[%s5 + $0x50] sm:$0xff]
    %v2787 = vld [vmem:[%s5 + $0x58] sm:$0xff]
    %v2788 = vld [vmem:[%s5 + $0x60] sm:$0xff]
    %v2789 = vld [vmem:[%s5 + $0x68] sm:$0xff]
    %v2790 = vld [vmem:[%s5 + $0x70] sm:$0xff]
    %v2791 = vld [vmem:[%s5 + $0x78] sm:$0xff]
    %v2792 = vld [vmem:[%s5 + $0x80] sm:$0xff]
    %v2793 = vld [vmem:[%s5 + $0x88] sm:$0xff]
    %v2794 = vld [vmem:[%s5 + $0x90] sm:$0xff]
    %v2795 = vld [vmem:[%s5 + $0x98] sm:$0xff]
    %v2796 = vld [vmem:[%s5 + $0xa0] sm:$0xff]
    %v2797 = vld [vmem:[%s5 + $0xa8] sm:$0xff]
    %v2798 = vld [vmem:[%s5 + $0xb0] sm:$0xff]
    %v2799 = vld [vmem:[%s5 + $0xb8] sm:$0xff]
    %v2800 = vld [vmem:[%s5 + $0xc0] sm:$0xff]
    %v2801 = vld [vmem:[%s5 + $0xc8] sm:$0xff]
    %v2802 = vld [vmem:[%s5 + $0xd0] sm:$0xff]
    %v2803 = vld [vmem:[%s5 + $0xd8] sm:$0xff]
    %v2804 = vld [vmem:[%s5 + $0xe0] sm:$0xff]
    %v2805 = vld [vmem:[%s5 + $0xe8] sm:$0xff]
    %v2806 = vld [vmem:[%s5 + $0xf0] sm:$0xff]
    %v2807 = vld [vmem:[%s5 + $0xf8] sm:$0xff]
    %v2808 = vld [vmem:[%s6] sm:$0x3]
    %v2810 = vlaneseq
    %v2811 = vshrl.u32 %v2810, 7
    %v2812 = vsub.s32 0, %v2811
    %v2813 = vrot.slane %v2808, %v2812
    %v2814 = vlaneseq
    %v2815 = vshrl.u32 %v2814, 7
    %v2816 = vsub.s32 1, %v2815
    %v2817 = vrot.slane %v2808, %v2816
    %v2852 = vunpack.c.l.b16 %v2776
    %v2853 = vunpack.c.h.b16 %v2776
    %v2854 = vunpack.c.l.b16 %v2777
    %v2855 = vunpack.c.h.b16 %v2777
    %v2856 = vunpack.c.l.b16 %v2778
    %v2857 = vunpack.c.h.b16 %v2778
    %v2858 = vunpack.c.l.b16 %v2779
    %v2859 = vunpack.c.h.b16 %v2779
    %v2860 = vunpack.c.l.b16 %v2780
    %v2861 = vunpack.c.h.b16 %v2780
    %v2862 = vunpack.c.l.b16 %v2781
    %v2863 = vunpack.c.h.b16 %v2781
    %v2864 = vunpack.c.l.b16 %v2782
    %v2865 = vunpack.c.h.b16 %v2782
    %v2866 = vunpack.c.l.b16 %v2783
    %v2867 = vunpack.c.h.b16 %v2783
    %v2868 = vunpack.c.l.b16 %v2784
    %v2869 = vunpack.c.h.b16 %v2784
    %v2870 = vunpack.c.l.b16 %v2785
    %v2871 = vunpack.c.h.b16 %v2785
    %v2872 = vunpack.c.l.b16 %v2786
    %v2873 = vunpack.c.h.b16 %v2786
    %v2874 = vunpack.c.l.b16 %v2787
    %v2875 = vunpack.c.h.b16 %v2787
    %v2876 = vunpack.c.l.b16 %v2788
    %v2877 = vunpack.c.h.b16 %v2788
    %v2878 = vunpack.c.l.b16 %v2789
    %v2879 = vunpack.c.h.b16 %v2789
    %v2880 = vunpack.c.l.b16 %v2790
    %v2881 = vunpack.c.h.b16 %v2790
    %v2882 = vunpack.c.l.b16 %v2791
    %v2883 = vunpack.c.h.b16 %v2791
    %v2884 = vunpack.c.l.b16 %v2792
    %v2885 = vunpack.c.h.b16 %v2792
    %v2886 = vunpack.c.l.b16 %v2793
    %v2887 = vunpack.c.h.b16 %v2793
    %v2888 = vunpack.c.l.b16 %v2794
    %v2889 = vunpack.c.h.b16 %v2794
    %v2890 = vunpack.c.l.b16 %v2795
    %v2891 = vunpack.c.h.b16 %v2795
    %v2892 = vunpack.c.l.b16 %v2796
    %v2893 = vunpack.c.h.b16 %v2796
    %v2894 = vunpack.c.l.b16 %v2797
    %v2895 = vunpack.c.h.b16 %v2797
    %v2896 = vunpack.c.l.b16 %v2798
    %v2897 = vunpack.c.h.b16 %v2798
    %v2898 = vunpack.c.l.b16 %v2799
    %v2899 = vunpack.c.h.b16 %v2799
    %v2900 = vunpack.c.l.b16 %v2800
    %v2901 = vunpack.c.h.b16 %v2800
    %v2902 = vunpack.c.l.b16 %v2801
    %v2903 = vunpack.c.h.b16 %v2801
    %v2904 = vunpack.c.l.b16 %v2802
    %v2905 = vunpack.c.h.b16 %v2802
    %v2906 = vunpack.c.l.b16 %v2803
    %v2907 = vunpack.c.h.b16 %v2803
    %v2908 = vunpack.c.l.b16 %v2804
    %v2909 = vunpack.c.h.b16 %v2804
    %v2910 = vunpack.c.l.b16 %v2805
    %v2911 = vunpack.c.h.b16 %v2805
    %v2912 = vunpack.c.l.b16 %v2806
    %v2913 = vunpack.c.h.b16 %v2806
    %v2914 = vunpack.c.l.b16 %v2807
    %v2915 = vunpack.c.h.b16 %v2807
    %v2916 = vpack.c.b16 %v2854, %v2852
    %v2917 = vpack.c.b16 %v2855, %v2853
    %v2918 = vpack.c.b16 %v2858, %v2856
    %v2919 = vpack.c.b16 %v2859, %v2857
    %v2920 = vpack.c.b16 %v2862, %v2860
    %v2921 = vpack.c.b16 %v2863, %v2861
    %v2922 = vpack.c.b16 %v2866, %v2864
    %v2923 = vpack.c.b16 %v2867, %v2865
    %v2924 = vpack.c.b16 %v2870, %v2868
    %v2925 = vpack.c.b16 %v2871, %v2869
    %v2926 = vpack.c.b16 %v2874, %v2872
    %v2927 = vpack.c.b16 %v2875, %v2873
    %v2928 = vpack.c.b16 %v2878, %v2876
    %v2929 = vpack.c.b16 %v2879, %v2877
    %v2930 = vpack.c.b16 %v2882, %v2880
    %v2931 = vpack.c.b16 %v2883, %v2881
    %v2932 = vpack.c.b16 %v2886, %v2884
    %v2933 = vpack.c.b16 %v2887, %v2885
    %v2934 = vpack.c.b16 %v2890, %v2888
    %v2935 = vpack.c.b16 %v2891, %v2889
    %v2936 = vpack.c.b16 %v2894, %v2892
    %v2937 = vpack.c.b16 %v2895, %v2893
    %v2938 = vpack.c.b16 %v2898, %v2896
    %v2939 = vpack.c.b16 %v2899, %v2897
    %v2940 = vpack.c.b16 %v2902, %v2900
    %v2941 = vpack.c.b16 %v2903, %v2901
    %v2942 = vpack.c.b16 %v2906, %v2904
    %v2943 = vpack.c.b16 %v2907, %v2905
    %v2944 = vpack.c.b16 %v2910, %v2908
    %v2945 = vpack.c.b16 %v2911, %v2909
    %v2946 = vpack.c.b16 %v2914, %v2912
    %v2947 = vpack.c.b16 %v2915, %v2913
    %2980 = vmatprep.subr.bf16.mxu0 %v2917
    %2981 = vmatpush1.bf16.msra.mxu0 %v2916
    %2982 = vmatprep.subr.bf16.mxu0 %v2919
    %2983 = vmatpush1.bf16.msra.mxu0 %v2918
    %2984 = vmatprep.subr.bf16.mxu0 %v2921
    %2985 = vmatpush1.bf16.msra.mxu0 %v2920
    %2986 = vmatprep.subr.bf16.mxu0 %v2923
    %2987 = vmatpush1.bf16.msra.mxu0 %v2922
    %2988 = vmatprep.subr.bf16.mxu0 %v2925
    %2989 = vmatpush1.bf16.msra.mxu0 %v2924
    %2990 = vmatprep.subr.bf16.mxu0 %v2927
    %2991 = vmatpush1.bf16.msra.mxu0 %v2926
    %2992 = vmatprep.subr.bf16.mxu0 %v2929
    %2993 = vmatpush1.bf16.msra.mxu0 %v2928
    %2994 = vmatprep.subr.bf16.mxu0 %v2931
    %2995 = vmatpush1.bf16.msra.mxu0 %v2930
    %2996 = vmatprep.subr.bf16.mxu0 %v2933
    %2997 = vmatpush1.bf16.msra.mxu0 %v2932
    %2998 = vmatprep.subr.bf16.mxu0 %v2935
    %2999 = vmatpush1.bf16.msra.mxu0 %v2934
    %3000 = vmatprep.subr.bf16.mxu0 %v2937
    %3001 = vmatpush1.bf16.msra.mxu0 %v2936
    %3002 = vmatprep.subr.bf16.mxu0 %v2939
    %3003 = vmatpush1.bf16.msra.mxu0 %v2938
    %3004 = vmatprep.subr.bf16.mxu0 %v2941
    %3005 = vmatpush1.bf16.msra.mxu0 %v2940
    %3006 = vmatprep.subr.bf16.mxu0 %v2943
    %3007 = vmatpush1.bf16.msra.mxu0 %v2942
    %3008 = vmatprep.subr.bf16.mxu0 %v2945
    %3009 = vmatpush1.bf16.msra.mxu0 %v2944
    %3010 = vmatprep.subr.bf16.mxu0 %v2947
    %3011 = vmatpush1.bf16.msra.mxu0 %v2946
    %3012 = vmatprep.mubr.bf16.mxu0 %v2775
    %3013 = vmatmul.mubr.bf16.gmra.mrb[0].mxu0 %v2774
    %v3014 = vpop.f32.mrb[0].mxu0
    %v3015 = vadd.f32 %v2813, %v3014
    %v3016 = vpop.f32.mrb[0].mxu0
    %v3017 = vadd.f32 %v2817, %v3016
    %v3018 = vpop.f32.mrb[0].mxu0
    %v3019 = vpop.f32.mrb[0].mxu0
    %3020 = vdwg.mxu0
    %v3021 = vmax.f32 %v3015, 0.0
    %v3022 = vmax.f32 %v3017, 0.0
    %v3023 = vpack.c.bf16 %v3021, %v3021
    %v3024 = vpack.c.bf16 %v3022, %v3022
    %v3025 = vld [vmem:[#allocation6] sm:$0xf]
    %v3026 = vld [vmem:[#allocation6 + $0x4] sm:$0xf]
    %v3027 = vld [vmem:[#allocation6 + $0x8] sm:$0xf]
    %v3028 = vld [vmem:[#allocation6 + $0xc] sm:$0xf]
    %v3029 = vld [vmem:[#allocation6 + $0x10] sm:$0xf]
    %v3030 = vld [vmem:[#allocation6 + $0x14] sm:$0xf]
    %v3031 = vld [vmem:[#allocation6 + $0x18] sm:$0xf]
    %v3032 = vld [vmem:[#allocation6 + $0x1c] sm:$0xf]
    %v3033 = vld [vmem:[#allocation6 + $0x20] sm:$0xf]
    %v3034 = vld [vmem:[#allocation6 + $0x24] sm:$0xf]
    %v3035 = vld [vmem:[#allocation6 + $0x28] sm:$0xf]
    %v3036 = vld [vmem:[#allocation6 + $0x2c] sm:$0xf]
    %v3037 = vld [vmem:[#allocation6 + $0x30] sm:$0xf]
    %v3038 = vld [vmem:[#allocation6 + $0x34] sm:$0xf]
    %v3039 = vld [vmem:[#allocation6 + $0x38] sm:$0xf]
    %v3040 = vld [vmem:[#allocation6 + $0x3c] sm:$0xf]
    %v3041 = vld [vmem:[#allocation6 + $0x40] sm:$0xf]
    %v3042 = vld [vmem:[#allocation6 + $0x44] sm:$0xf]
    %v3043 = vld [vmem:[#allocation6 + $0x48] sm:$0xf]
    %v3044 = vld [vmem:[#allocation6 + $0x4c] sm:$0xf]
    %v3045 = vld [vmem:[#allocation6 + $0x50] sm:$0xf]
    %v3046 = vld [vmem:[#allocation6 + $0x54] sm:$0xf]
    %v3047 = vld [vmem:[#allocation6 + $0x58] sm:$0xf]
    %v3048 = vld [vmem:[#allocation6 + $0x5c] sm:$0xf]
    %v3049 = vld [vmem:[#allocation6 + $0x60] sm:$0xf]
    %v3050 = vld [vmem:[#allocation6 + $0x64] sm:$0xf]
    %v3051 = vld [vmem:[#allocation6 + $0x68] sm:$0xf]
    %v3052 = vld [vmem:[#allocation6 + $0x6c] sm:$0xf]
    %v3053 = vld [vmem:[#allocation6 + $0x70] sm:$0xf]
    %v3054 = vld [vmem:[#allocation6 + $0x74] sm:$0xf]
    %v3055 = vld [vmem:[#allocation6 + $0x78] sm:$0xf]
    %v3056 = vld [vmem:[#allocation6 + $0x7c] sm:$0xf]
    %v3057 = vld [vmem:[%s8] sm:$0x1]
    %v3059 = vlaneseq
    %v3060 = vshrl.u32 %v3059, 7
    %v3061 = vsub.s32 0, %v3060
    %v3062 = vrot.slane %v3057, %v3061
    %v3096 = vunpack.c.l.b16 %v3025
    %v3097 = vunpack.c.l.b16 %v3026
    %v3098 = vunpack.c.l.b16 %v3027
    %v3099 = vunpack.c.l.b16 %v3028
    %v3100 = vunpack.c.l.b16 %v3029
    %v3101 = vunpack.c.l.b16 %v3030
    %v3102 = vunpack.c.l.b16 %v3031
    %v3103 = vunpack.c.l.b16 %v3032
    %v3104 = vunpack.c.l.b16 %v3033
    %v3105 = vunpack.c.l.b16 %v3034
    %v3106 = vunpack.c.l.b16 %v3035
    %v3107 = vunpack.c.l.b16 %v3036
    %v3108 = vunpack.c.l.b16 %v3037
    %v3109 = vunpack.c.l.b16 %v3038
    %v3110 = vunpack.c.l.b16 %v3039
    %v3111 = vunpack.c.l.b16 %v3040
    %v3112 = vunpack.c.l.b16 %v3041
    %v3113 = vunpack.c.l.b16 %v3042
    %v3114 = vunpack.c.l.b16 %v3043
    %v3115 = vunpack.c.l.b16 %v3044
    %v3116 = vunpack.c.l.b16 %v3045
    %v3117 = vunpack.c.l.b16 %v3046
    %v3118 = vunpack.c.l.b16 %v3047
    %v3119 = vunpack.c.l.b16 %v3048
    %v3120 = vunpack.c.l.b16 %v3049
    %v3121 = vunpack.c.l.b16 %v3050
    %v3122 = vunpack.c.l.b16 %v3051
    %v3123 = vunpack.c.l.b16 %v3052
    %v3124 = vunpack.c.l.b16 %v3053
    %v3125 = vunpack.c.l.b16 %v3054
    %v3126 = vunpack.c.l.b16 %v3055
    %v3127 = vunpack.c.l.b16 %v3056
    %v3128 = vpack.c.b16 %v3097, %v3096
    %v3129 = vpack.c.b16 %v3099, %v3098
    %v3130 = vpack.c.b16 %v3101, %v3100
    %v3131 = vpack.c.b16 %v3103, %v3102
    %v3132 = vpack.c.b16 %v3105, %v3104
    %v3133 = vpack.c.b16 %v3107, %v3106
    %v3134 = vpack.c.b16 %v3109, %v3108
    %v3135 = vpack.c.b16 %v3111, %v3110
    %v3136 = vpack.c.b16 %v3113, %v3112
    %v3137 = vpack.c.b16 %v3115, %v3114
    %v3138 = vpack.c.b16 %v3117, %v3116
    %v3139 = vpack.c.b16 %v3119, %v3118
    %v3140 = vpack.c.b16 %v3121, %v3120
    %v3141 = vpack.c.b16 %v3123, %v3122
    %v3142 = vpack.c.b16 %v3125, %v3124
    %v3143 = vpack.c.b16 %v3127, %v3126
    %3160 = vmatprep.subr.bf16.mxu0 0
    %3161 = vmatpush1.bf16.msra.mxu0 %v3128
    %3162 = vmatprep.subr.bf16.mxu0 0
    %3163 = vmatpush1.bf16.msra.mxu0 %v3129
    %3164 = vmatprep.subr.bf16.mxu0 0
    %3165 = vmatpush1.bf16.msra.mxu0 %v3130
    %3166 = vmatprep.subr.bf16.mxu0 0
    %3167 = vmatpush1.bf16.msra.mxu0 %v3131
    %3168 = vmatprep.subr.bf16.mxu0 0
    %3169 = vmatpush1.bf16.msra.mxu0 %v3132
    %3170 = vmatprep.subr.bf16.mxu0 0
    %3171 = vmatpush1.bf16.msra.mxu0 %v3133
    %3172 = vmatprep.subr.bf16.mxu0 0
    %3173 = vmatpush1.bf16.msra.mxu0 %v3134
    %3174 = vmatprep.subr.bf16.mxu0 0
    %3175 = vmatpush1.bf16.msra.mxu0 %v3135
    %3176 = vmatprep.subr.bf16.mxu0 0
    %3177 = vmatpush1.bf16.msra.mxu0 %v3136
    %3178 = vmatprep.subr.bf16.mxu0 0
    %3179 = vmatpush1.bf16.msra.mxu0 %v3137
    %3180 = vmatprep.subr.bf16.mxu0 0
    %3181 = vmatpush1.bf16.msra.mxu0 %v3138
    %3182 = vmatprep.subr.bf16.mxu0 0
    %3183 = vmatpush1.bf16.msra.mxu0 %v3139
    %3184 = vmatprep.subr.bf16.mxu0 0
    %3185 = vmatpush1.bf16.msra.mxu0 %v3140
    %3186 = vmatprep.subr.bf16.mxu0 0
    %3187 = vmatpush1.bf16.msra.mxu0 %v3141
    %3188 = vmatprep.subr.bf16.mxu0 0
    %3189 = vmatpush1.bf16.msra.mxu0 %v3142
    %3190 = vmatprep.subr.bf16.mxu0 0
    %3191 = vmatpush1.bf16.msra.mxu0 %v3143
    %3192 = vmatprep.mubr.bf16.mxu0 %v3024
    %3193 = vmatmul.mubr.bf16.gmra.mrb[0].mxu0 %v3023
    %v3194 = vpop.f32.mrb[0].mxu0
    %v3195 = vadd.f32 %v3062, %v3194
    %v3196 = vpop.f32.mrb[0].mxu0
    %v3197 = vpop.f32.mrb[0].mxu0
    %v3198 = vpop.f32.mrb[0].mxu0
    %3199 = vdwg.mxu0
    %3200 = vst [vmem:[%s9] sm:$0xff] %v3195
    // Predicated region
    $region50: #{cnn_model_forward.1} parent=1 // pred_check
      _
    $region51: #{cnn_model_forward.1} parent=1 // pred_check_branch
      %3202 = sbr.rel (0) target = $region53
    $region52: #{cnn_model_forward.1} parent=1 // pred_region
      _
    $region53: #{cnn_model_forward.1} parent=1 // pred_fallthru
      _
    // Predicated region
    $region54: #{cnn_model_forward.1} parent=1 // pred_check
      _
    $region55: #{cnn_model_forward.1} parent=1 // pred_check_branch
      %3204 = sbr.rel (0) target = $region57
    $region56: #{cnn_model_forward.1} parent=1 // pred_region
      _
    $region57: #{cnn_model_forward.1} parent=1 // pred_fallthru
      _
    %3205 = vsyncpa [#allocation3], 1
    %3206 = vsyncpa [#allocation5], 1

</llo_original>
